<compile_context>
chip_gen: v7x
topology: tpu7x:2x2x1
jax: 0.10.0
libtpu: 0.0.40
codegen_flags: <defaults>
</compile_context>

<pallas_src>
import functools

import numpy as np

import jax
import jax.numpy as jnp
from jax.experimental import pallas as pl
from jax.experimental.pallas import tpu as pltpu

EPS = 1e-5


# ------------------------------ fused kernel --------------------------------

def _fused_net_kernel(masks_ref, x_ref, pp_ref, o_ref,
                      xin_ref, acts_ref, tmp_ref, pz_ref, vz_ref,
                      *, layout, n_res, nfeat, n, h, w, n_actions, pad,
                      mpad_a, out_w):
    f = nfeat
    hw = h * w
    m = n * hw
    inv_m = 1.0 / m
    # tap t = (kh*3 + kw); source row offset in the flattened (b, i, j) slab
    shifts = [((t // 3) - 1) * w + ((t % 3) - 1) for t in range(9)]

    def rd(name, r0=0, nr=None):
        off, rows, cols = layout[name]
        if nr is None:
            nr = rows
        return pp_ref[pl.ds(off + r0, nr), pl.ds(0, cols)]

    def bn(y, gname, bname, relu):
        # training-mode BatchNorm, fused one-pass stats (sum + sum of squares)
        s1 = jnp.sum(y, axis=0, keepdims=True)
        s2 = jnp.sum(y * y, axis=0, keepdims=True)
        mean = s1 * inv_m
        var = jnp.maximum(s2 * inv_m - mean * mean, 0.0)
        z = (y - mean) * jax.lax.rsqrt(var + EPS) * rd(gname) + rd(bname)
        return jnp.maximum(z, 0.0) if relu else z

    def conv3x3(read_tap, wname):
        # K-packed im2col: one (M, 9*Cin) @ (9*Cin, F) MXU pass per conv.
        # Boundary (H/W edge + batch boundary) taps are zeroed by the masks.
        cols = [masks_ref[t] * read_tap(pad + shifts[t]) for t in range(9)]
        return jnp.dot(jnp.concatenate(cols, axis=1), rd(wname),
                       preferred_element_type=jnp.float32)

    # zero the padded scratch slabs once (padding rows must be 0, not garbage)
    xin_ref[...] = jnp.zeros_like(xin_ref)
    acts_ref[...] = jnp.zeros_like(acts_ref)
    tmp_ref[...] = jnp.zeros_like(tmp_ref)

    # place the NHWC-flattened input at rows [pad, pad + M)
    xin_ref[pl.ds(pad, m), :] = x_ref[...]

    # stem: Conv3x3 (no bias) + BN + ReLU  ->  acts slot 0
    y = conv3x3(lambda p0: xin_ref[pl.ds(p0, m), :], "stem_w")
    acts_ref[pl.ds(pad, m), :] = bn(y, "stem_g", "stem_b", relu=True)

    # dense "residual" blocks:  x <- relu(cat(x, BN2(conv2(relu(BN1(conv1(x)))))))
    # x >= 0 always, so relu(cat(x, y)) == cat(x, relu(y)): each block only
    # appends F new channels (a new slot in the acts slab).
    for i in range(n_res):
        n_in = i + 1

        def read_in(p0, k=n_in):
            return jnp.concatenate(
                [acts_ref[pl.ds(j * mpad_a + p0, m), :] for j in range(k)],
                axis=1)

        y1 = bn(conv3x3(read_in, "w1_%d" % i),
                "g1_%d" % i, "b1_%d" % i, relu=True)
        tmp_ref[pl.ds(pad, m), :] = y1
        y2 = bn(conv3x3(lambda p0: tmp_ref[pl.ds(p0, m), :], "w2_%d" % i),
                "g2_%d" % i, "b2_%d" % i, relu=False)
        acts_ref[pl.ds((i + 1) * mpad_a + pad, m), :] = jnp.maximum(y2, 0.0)

    # final lane-packed activation slab (M, C_total)
    xfin = jnp.concatenate(
        [acts_ref[pl.ds(j * mpad_a + pad, m), :] for j in range(n_res + 1)],
        axis=1)

    # policy head: Conv1x1 + BN + ReLU
    pz_ref[...] = bn(
        jnp.dot(xfin, rd("p_conv_w"), preferred_element_type=jnp.float32)
        + rd("p_conv_b"), "p_g", "p_b", relu=True)                     # (M, 2)
    # value head: Conv1x1 + BN + ReLU
    vz_ref[...] = bn(
        jnp.dot(xfin, rd("v_conv_w"), preferred_element_type=jnp.float32)
        + rd("v_conv_b"), "v_g", "v_b", relu=True)                     # (M, 1)

    # Flatten(NCHW) + Linear, folded as per-batch multiply+reduce with the
    # original (hw, .) weights (no batch replication, no selection matmul).
    wp0 = rd("p_fc_w", 0, hw)          # (hw, A)  channel-0 rows
    wp1 = rd("p_fc_w", hw, hw)         # (hw, A)  channel-1 rows
    wv1 = rd("v_fc1_w")                # (hw, F)
    p_fc_b = rd("p_fc_b")              # (1, A)
    v_fc1_b = rd("v_fc1_b")            # (1, F)

    pol_rows, v1_rows = [], []
    for b in range(n):
        pzb = pz_ref[pl.ds(b * hw, hw), :]        # (hw, 2)
        vzb = vz_ref[pl.ds(b * hw, hw), :]        # (hw, 1)
        pol_rows.append(
            jnp.sum(pzb[:, 0:1] * wp0 + pzb[:, 1:2] * wp1,
                    axis=0, keepdims=True) + p_fc_b)                   # (1, A)
        v1_rows.append(
            jnp.sum(vzb * wv1, axis=0, keepdims=True) + v_fc1_b)       # (1, F)

    policy = jnp.concatenate(pol_rows, axis=0)                          # (N, A)
    v1 = jnp.maximum(jnp.concatenate(v1_rows, axis=0), 0.0)             # (N, F)
    v2 = jnp.tanh(jnp.dot(v1, rd("v_fc2_w"),
                          preferred_element_type=jnp.float32)
                  + rd("v_fc2_b"))                                      # (N, 1)

    # lane-dense output: one full (N, out_w) store, sliced in the wrapper.
    pieces = [policy, v2]
    pad_cols = out_w - n_actions - 1
    if pad_cols > 0:
        pieces.append(jnp.zeros((n, pad_cols), jnp.float32))
    o_ref[...] = jnp.concatenate(pieces, axis=1)


# --------------------------- trace-time constants ----------------------------

def _tap_masks(n, h, w):
    """(9, M, 1) 0/1 masks: zero taps that fall off the H/W edge of an image."""
    m = n * h * w
    masks = np.zeros((9, m, 1), np.float32)
    for t in range(9):
        dh, dw = t // 3 - 1, t % 3 - 1
        for b in range(n):
            for i in range(h):
                for j in range(w):
                    if 0 <= i + dh < h and 0 <= j + dw < w:
                        masks[t, b * h * w + i * w + j, 0] = 1.0
    return jnp.asarray(masks)


def _pack_params(params, n_res):
    """Pack every weight/bias/BN param into one (rows, width) f32 slab.

    Each entry starts at an 8-row-aligned offset so all in-kernel parameter
    reads are sublane-aligned.  Returns (slab, {name: (row_off, rows, cols)}).
    """
    feat = params["stem_g"].shape[1]
    acts = params["p_fc_b"].shape[1]
    width = max(feat, acts, 2)

    entries = [("stem_w", params["stem_w"]),
               ("stem_g", params["stem_g"]), ("stem_b", params["stem_b"])]
    for i in range(n_res):
        rp = params["res"][i]
        entries += [("w1_%d" % i, rp["w1"]), ("g1_%d" % i, rp["g1"]),
                    ("b1_%d" % i, rp["b1"]), ("w2_%d" % i, rp["w2"]),
                    ("g2_%d" % i, rp["g2"]), ("b2_%d" % i, rp["b2"])]
    entries += [("p_conv_w", params["p_conv_w"]), ("p_conv_b", params["p_conv_b"]),
                ("p_g", params["p_g"]), ("p_b", params["p_b"]),
                ("p_fc_w", params["p_fc_w"]), ("p_fc_b", params["p_fc_b"]),
                ("v_conv_w", params["v_conv_w"]), ("v_conv_b", params["v_conv_b"]),
                ("v_g", params["v_g"]), ("v_b", params["v_b"]),
                ("v_fc1_w", params["v_fc1_w"]), ("v_fc1_b", params["v_fc1_b"]),
                ("v_fc2_w", params["v_fc2_w"]), ("v_fc2_b", params["v_fc2_b"])]

    layout = {}
    blocks = []
    off = 0
    for name, arr in entries:
        r, c = arr.shape
        layout[name] = (off, r, c)
        r8 = (r + 7) // 8 * 8
        blk = jnp.zeros((r8, width), jnp.float32).at[:r, :c].set(
            arr.astype(jnp.float32))
        blocks.append(blk)
        off += r8
    return jnp.concatenate(blocks, axis=0), layout


# ------------------------------- forward ------------------------------------

def net_forward(params, x_nchw, n_residual_blocks):
    p = params
    n, cin, h, w = x_nchw.shape
    hw = h * w
    m = n * hw
    f = p["stem_g"].shape[1]
    a = p["p_fc_b"].shape[1]
    c_total = f * (n_residual_blocks + 1)

    pad = ((w + 1) + 7) // 8 * 8          # >= w+1 and 8-aligned -> aligned stores
    mpad = m + 2 * pad
    mpad_a = (mpad + 7) // 8 * 8          # per-layer region size in the acts slab
    out_w = ((a + 1) + 127) // 128 * 128  # lane-dense output width

    # NCHW -> NHWC -> (M, Cin) slab (input prep only; all layers stay in VMEM).
    x = jnp.transpose(x_nchw, (0, 2, 3, 1)).astype(jnp.float32).reshape(m, cin)

    masks = _tap_masks(n, h, w)
    pslab, layout = _pack_params(p, n_residual_blocks)

    kern = functools.partial(
        _fused_net_kernel, layout=layout, n_res=n_residual_blocks, nfeat=f,
        n=n, h=h, w=w, n_actions=a, pad=pad, mpad_a=mpad_a, out_w=out_w)

    # rough cost estimate (advisory only)
    conv_flops = 2 * m * 9 * cin * f
    for i in range(n_residual_blocks):
        conv_flops += 2 * m * 9 * f * (i + 1) * f + 2 * m * 9 * f * f
    head_flops = 2 * m * c_total * 3 + 2 * n * (2 * hw * a + hw * f + f)
    flops = conv_flops + head_flops
    transcendentals = n + 2 * (2 + 2 * n_residual_blocks + 2)
    bytes_accessed = 4 * (int(masks.size) + int(x.size) + int(pslab.size)
                          + n * out_w)

    out = pl.pallas_call(
        kern,
        out_shape=jax.ShapeDtypeStruct((n, out_w), jnp.float32),
        in_specs=[pl.BlockSpec(memory_space=pltpu.MemorySpace.VMEM)] * 3,
        out_specs=pl.BlockSpec(memory_space=pltpu.MemorySpace.VMEM),
        scratch_shapes=[
            pltpu.VMEM((mpad_a, cin), jnp.float32),                         # xin
            pltpu.VMEM(((n_residual_blocks + 1) * mpad_a, f), jnp.float32),  # acts
            pltpu.VMEM((mpad_a, f), jnp.float32),                           # tmp
            pltpu.VMEM((m, 2), jnp.float32),                                # pz
            pltpu.VMEM((m, 1), jnp.float32),                                # vz
        ],
        compiler_params=pltpu.CompilerParams(
            vmem_limit_bytes=32 * 1024 * 1024),
        cost_estimate=pl.CostEstimate(flops=flops,
                                      transcendentals=transcendentals,
                                      bytes_accessed=bytes_accessed),
    )(masks, x, pslab)
    return out[:, : a + 1]


# ------------------------------- parameters ---------------------------------

def init_params(key, n_features, n_residual_blocks, n_actions, h, w):
    f = n_features
    c_final = f * (n_residual_blocks + 1)

    def nxt():
        nonlocal key
        key, sub = jax.random.split(key)
        return sub

    def conv_w(cin, cout, k):
        return 0.1 * jax.random.normal(nxt(), (k * k * cin, cout), jnp.float32)

    def bn(c):
        g = 1.0 + 0.01 * jax.random.normal(nxt(), (1, c), jnp.float32)
        b = 0.01 * jax.random.normal(nxt(), (1, c), jnp.float32)
        return g, b

    def lin(din, dout):
        wm = 0.1 * jax.random.normal(nxt(), (din, dout), jnp.float32)
        bm = 0.01 * jax.random.normal(nxt(), (1, dout), jnp.float32)
        return wm, bm

    p = {}
    p["stem_w"] = conv_w(3, f, 3)
    p["stem_g"], p["stem_b"] = bn(f)

    p["res"] = []
    for i in range(n_residual_blocks):
        cin = f * (i + 1)
        g1, b1 = bn(f)
        g2, b2 = bn(f)
        p["res"].append(dict(w1=conv_w(cin, f, 3), g1=g1, b1=b1,
                             w2=conv_w(f, f, 3), g2=g2, b2=b2))

    # policy head: Conv1x1(C->2, bias) + BN + ReLU + Flatten + Linear(2*h*w -> A)
    p["p_conv_w"], p["p_conv_b"] = lin(c_final, 2)
    p["p_g"], p["p_b"] = bn(2)
    p["p_fc_w"], p["p_fc_b"] = lin(2 * h * w, n_actions)

    # value head: Conv1x1(C->1, bias) + BN + ReLU + Linear(h*w -> F)
    #             + ReLU + Linear(F -> 1) + Tanh
    p["v_conv_w"], p["v_conv_b"] = lin(c_final, 1)
    p["v_g"], p["v_b"] = bn(1)
    p["v_fc1_w"], p["v_fc1_b"] = lin(h * w, f)
    p["v_fc2_w"], p["v_fc2_b"] = lin(f, 1)
    return p


# --------------------------- pure-JAX reference ------------------------------

def _ref_bn(y, g, b):
    mean = jnp.mean(y, axis=(0, 1, 2), keepdims=True)
    var = jnp.mean(jnp.square(y - mean), axis=(0, 1, 2), keepdims=True)
    return (y - mean) * jax.lax.rsqrt(var + EPS) * g.reshape(1, 1, 1, -1) + b.reshape(1, 1, 1, -1)


def _ref_conv3x3_bn(x, w_mat, g, b, relu):
    cin, cout = x.shape[-1], w_mat.shape[1]
    w = w_mat.reshape(3, 3, cin, cout)
    y = jax.lax.conv_general_dilated(x, w, (1, 1), "SAME",
                                     dimension_numbers=("NHWC", "HWIO", "NHWC"))
    y = _ref_bn(y, g, b)
    return jnp.maximum(y, 0.0) if relu else y


def ref_forward(params, x_nchw, n_residual_blocks):
    p = params
    x = jnp.transpose(x_nchw, (0, 2, 3, 1)).astype(jnp.float32)
    x = _ref_conv3x3_bn(x, p["stem_w"], p["stem_g"], p["stem_b"], True)
    for i in range(n_residual_blocks):
        rp = p["res"][i]
        y = _ref_conv3x3_bn(x, rp["w1"], rp["g1"], rp["b1"], True)
        y = _ref_conv3x3_bn(y, rp["w2"], rp["g2"], rp["b2"], False)
        x = jnp.maximum(jnp.concatenate([x, y], axis=-1), 0.0)
    n = x.shape[0]
    pz = jnp.maximum(_ref_bn(jnp.einsum("nhwc,co->nhwo", x, p["p_conv_w"]) + p["p_conv_b"].reshape(1, 1, 1, -1),
                             p["p_g"], p["p_b"]), 0.0)
    policy = jnp.transpose(pz, (0, 3, 1, 2)).reshape(n, -1) @ p["p_fc_w"] + p["p_fc_b"]
    vz = jnp.maximum(_ref_bn(jnp.einsum("nhwc,co->nhwo", x, p["v_conv_w"]) + p["v_conv_b"].reshape(1, 1, 1, -1),
                             p["v_g"], p["v_b"]), 0.0)
    v = jnp.maximum(jnp.transpose(vz, (0, 3, 1, 2)).reshape(n, -1) @ p["v_fc1_w"] + p["v_fc1_b"], 0.0)
    v = jnp.tanh(v @ p["v_fc2_w"] + p["v_fc2_b"])
    return jnp.concatenate([policy, v], axis=1)


# --------------------------------- main --------------------------------------

if __name__ == "__main__":
    n_features = 8
    n_residual_blocks = 2
    n_actions = 9
    h = w = 3
    batch = 2

    key = jax.random.PRNGKey(0)
    key, pkey, xkey = jax.random.split(key, 3)
    params = init_params(pkey, n_features, n_residual_blocks, n_actions, h, w)
    x = jax.random.normal(xkey, (batch, 3, h, w), jnp.float32)  # NCHW, like PyTorch

    fwd = jax.jit(functools.partial(net_forward, n_residual_blocks=n_residual_blocks))
    out = fwd(params, x)
    out = jax.block_until_ready(out)

    assert out.shape == (batch, n_actions + 1), out.shape

    ref = jax.block_until_ready(ref_forward(params, x, n_residual_blocks))
    assert jnp.allclose(out, ref, rtol=2e-2, atol=5e-3), (
        "max abs err %g" % float(jnp.max(jnp.abs(out - ref))))

    print("KERNEL_OK")
</pallas_src>

<mosaic_0001>
module attributes {stable_mosaic.version = 11 : i64} {
  func.func @_fused_net_kernel(%arg0: memref<9x18x1xf32, #tpu.memory_space<vmem>>, %arg1: memref<18x3xf32, #tpu.memory_space<vmem>>, %arg2: memref<640x9xf32, #tpu.memory_space<vmem>>, %arg3: memref<2x128xf32, #tpu.memory_space<vmem>>, %arg4: memref<40x3xf32, #tpu.memory_space<vmem>>, %arg5: memref<120x8xf32, #tpu.memory_space<vmem>>, %arg6: memref<40x8xf32, #tpu.memory_space<vmem>>, %arg7: memref<18x2xf32, #tpu.memory_space<vmem>>, %arg8: memref<18x1xf32, #tpu.memory_space<vmem>>) attributes {dimension_semantics = [], scalar_prefetch = 0 : i64, scratch_operands = 5 : i64, tpu.core_type = #tpu.core_type<tc>} {
    %cst = arith.constant 0.000000e+00 : f32
    %0 = vector.broadcast %cst : f32 to vector<40x3xf32>
    %c0 = arith.constant 0 : index
    %c0_0 = arith.constant 0 : index
    %1 = vector.load %arg4[%c0, %c0_0] : memref<40x3xf32, #tpu.memory_space<vmem>>, vector<40x3xf32>
    tpu.vector_store %arg4[%c0, %c0_0], %0 {strides = array<i32>} : memref<40x3xf32, #tpu.memory_space<vmem>>, vector<40x3xf32>,
    %cst_1 = arith.constant 0.000000e+00 : f32
    %2 = vector.broadcast %cst_1 : f32 to vector<120x8xf32>
    %c0_2 = arith.constant 0 : index
    %c0_3 = arith.constant 0 : index
    %3 = vector.load %arg5[%c0_2, %c0_3] : memref<120x8xf32, #tpu.memory_space<vmem>>, vector<120x8xf32>
    tpu.vector_store %arg5[%c0_2, %c0_3], %2 {strides = array<i32>} : memref<120x8xf32, #tpu.memory_space<vmem>>, vector<120x8xf32>,
    %cst_4 = arith.constant 0.000000e+00 : f32
    %4 = vector.broadcast %cst_4 : f32 to vector<40x8xf32>
    %c0_5 = arith.constant 0 : index
    %c0_6 = arith.constant 0 : index
    %5 = vector.load %arg6[%c0_5, %c0_6] : memref<40x8xf32, #tpu.memory_space<vmem>>, vector<40x8xf32>
    tpu.vector_store %arg6[%c0_5, %c0_6], %4 {strides = array<i32>} : memref<40x8xf32, #tpu.memory_space<vmem>>, vector<40x8xf32>,
    %c0_7 = arith.constant 0 : index
    %c0_8 = arith.constant 0 : index
    %6 = vector.load %arg1[%c0_7, %c0_8] : memref<18x3xf32, #tpu.memory_space<vmem>>, vector<18x3xf32>
    %c8 = arith.constant 8 : index
    %c0_9 = arith.constant 0 : index
    %7 = vector.load %arg4[%c8, %c0_9] : memref<40x3xf32, #tpu.memory_space<vmem>>, vector<18x3xf32>
    tpu.vector_store %arg4[%c8, %c0_9], %6 {strides = array<i32>} : memref<40x3xf32, #tpu.memory_space<vmem>>, vector<18x3xf32>,
    %c0_10 = arith.constant 0 : index
    %c0_11 = arith.constant 0 : index
    %c0_12 = arith.constant 0 : index
    %8 = vector.load %arg0[%c0_10, %c0_11, %c0_12] : memref<9x18x1xf32, #tpu.memory_space<vmem>>, vector<1x18x1xf32>
    %9 = vector.shape_cast %8 : vector<1x18x1xf32> to vector<18x1xf32>
    %c4 = arith.constant 4 : index
    %c0_13 = arith.constant 0 : index
    %10 = vector.load %arg4[%c4, %c0_13] : memref<40x3xf32, #tpu.memory_space<vmem>>, vector<18x3xf32>
    %11 = vector.broadcast %9 : vector<18x1xf32> to vector<18x3xf32>
    %12 = arith.mulf %11, %10 : vector<18x3xf32>
    %c1 = arith.constant 1 : index
    %c0_14 = arith.constant 0 : index
    %c0_15 = arith.constant 0 : index
    %13 = vector.load %arg0[%c1, %c0_14, %c0_15] : memref<9x18x1xf32, #tpu.memory_space<vmem>>, vector<1x18x1xf32>
    %14 = vector.shape_cast %13 : vector<1x18x1xf32> to vector<18x1xf32>
    %c5 = arith.constant 5 : index
    %c0_16 = arith.constant 0 : index
    %15 = vector.load %arg4[%c5, %c0_16] : memref<40x3xf32, #tpu.memory_space<vmem>>, vector<18x3xf32>
    %16 = vector.broadcast %14 : vector<18x1xf32> to vector<18x3xf32>
    %17 = arith.mulf %16, %15 : vector<18x3xf32>
    %c2 = arith.constant 2 : index
    %c0_17 = arith.constant 0 : index
    %c0_18 = arith.constant 0 : index
    %18 = vector.load %arg0[%c2, %c0_17, %c0_18] : memref<9x18x1xf32, #tpu.memory_space<vmem>>, vector<1x18x1xf32>
    %19 = vector.shape_cast %18 : vector<1x18x1xf32> to vector<18x1xf32>
    %c6 = arith.constant 6 : index
    %c0_19 = arith.constant 0 : index
    %20 = vector.load %arg4[%c6, %c0_19] : memref<40x3xf32, #tpu.memory_space<vmem>>, vector<18x3xf32>
    %21 = vector.broadcast %19 : vector<18x1xf32> to vector<18x3xf32>
    %22 = arith.mulf %21, %20 : vector<18x3xf32>
    %c3 = arith.constant 3 : index
    %c0_20 = arith.constant 0 : index
    %c0_21 = arith.constant 0 : index
    %23 = vector.load %arg0[%c3, %c0_20, %c0_21] : memref<9x18x1xf32, #tpu.memory_space<vmem>>, vector<1x18x1xf32>
    %24 = vector.shape_cast %23 : vector<1x18x1xf32> to vector<18x1xf32>
    %c7 = arith.constant 7 : index
    %c0_22 = arith.constant 0 : index
    %25 = vector.load %arg4[%c7, %c0_22] : memref<40x3xf32, #tpu.memory_space<vmem>>, vector<18x3xf32>
    %26 = vector.broadcast %24 : vector<18x1xf32> to vector<18x3xf32>
    %27 = arith.mulf %26, %25 : vector<18x3xf32>
    %c4_23 = arith.constant 4 : index
    %c0_24 = arith.constant 0 : index
    %c0_25 = arith.constant 0 : index
    %28 = vector.load %arg0[%c4_23, %c0_24, %c0_25] : memref<9x18x1xf32, #tpu.memory_space<vmem>>, vector<1x18x1xf32>
    %29 = vector.shape_cast %28 : vector<1x18x1xf32> to vector<18x1xf32>
    %c8_26 = arith.constant 8 : index
    %c0_27 = arith.constant 0 : index
    %30 = vector.load %arg4[%c8_26, %c0_27] : memref<40x3xf32, #tpu.memory_space<vmem>>, vector<18x3xf32>
    %31 = vector.broadcast %29 : vector<18x1xf32> to vector<18x3xf32>
    %32 = arith.mulf %31, %30 : vector<18x3xf32>
    %c5_28 = arith.constant 5 : index
    %c0_29 = arith.constant 0 : index
    %c0_30 = arith.constant 0 : index
    %33 = vector.load %arg0[%c5_28, %c0_29, %c0_30] : memref<9x18x1xf32, #tpu.memory_space<vmem>>, vector<1x18x1xf32>
    %34 = vector.shape_cast %33 : vector<1x18x1xf32> to vector<18x1xf32>
    %c9 = arith.constant 9 : index
    %c0_31 = arith.constant 0 : index
    %35 = vector.load %arg4[%c9, %c0_31] : memref<40x3xf32, #tpu.memory_space<vmem>>, vector<18x3xf32>
    %36 = vector.broadcast %34 : vector<18x1xf32> to vector<18x3xf32>
    %37 = arith.mulf %36, %35 : vector<18x3xf32>
    %c6_32 = arith.constant 6 : index
    %c0_33 = arith.constant 0 : index
    %c0_34 = arith.constant 0 : index
    %38 = vector.load %arg0[%c6_32, %c0_33, %c0_34] : memref<9x18x1xf32, #tpu.memory_space<vmem>>, vector<1x18x1xf32>
    %39 = vector.shape_cast %38 : vector<1x18x1xf32> to vector<18x1xf32>
    %c10 = arith.constant 10 : index
    %c0_35 = arith.constant 0 : index
    %40 = vector.load %arg4[%c10, %c0_35] : memref<40x3xf32, #tpu.memory_space<vmem>>, vector<18x3xf32>
    %41 = vector.broadcast %39 : vector<18x1xf32> to vector<18x3xf32>
    %42 = arith.mulf %41, %40 : vector<18x3xf32>
    %c7_36 = arith.constant 7 : index
    %c0_37 = arith.constant 0 : index
    %c0_38 = arith.constant 0 : index
    %43 = vector.load %arg0[%c7_36, %c0_37, %c0_38] : memref<9x18x1xf32, #tpu.memory_space<vmem>>, vector<1x18x1xf32>
    %44 = vector.shape_cast %43 : vector<1x18x1xf32> to vector<18x1xf32>
    %c11 = arith.constant 11 : index
    %c0_39 = arith.constant 0 : index
    %45 = vector.load %arg4[%c11, %c0_39] : memref<40x3xf32, #tpu.memory_space<vmem>>, vector<18x3xf32>
    %46 = vector.broadcast %44 : vector<18x1xf32> to vector<18x3xf32>
    %47 = arith.mulf %46, %45 : vector<18x3xf32>
    %c8_40 = arith.constant 8 : index
    %c0_41 = arith.constant 0 : index
    %c0_42 = arith.constant 0 : index
    %48 = vector.load %arg0[%c8_40, %c0_41, %c0_42] : memref<9x18x1xf32, #tpu.memory_space<vmem>>, vector<1x18x1xf32>
    %49 = vector.shape_cast %48 : vector<1x18x1xf32> to vector<18x1xf32>
    %c12 = arith.constant 12 : index
    %c0_43 = arith.constant 0 : index
    %50 = vector.load %arg4[%c12, %c0_43] : memref<40x3xf32, #tpu.memory_space<vmem>>, vector<18x3xf32>
    %51 = vector.broadcast %49 : vector<18x1xf32> to vector<18x3xf32>
    %52 = arith.mulf %51, %50 : vector<18x3xf32>
    %53 = tpu.concatenate %12, %17, %22, %27, %32, %37, %42, %47, %52 in 1 : vector<18x3xf32>, vector<18x3xf32>, vector<18x3xf32>, vector<18x3xf32>, vector<18x3xf32>, vector<18x3xf32>, vector<18x3xf32>, vector<18x3xf32>, vector<18x3xf32> -> vector<18x27xf32>
    %c0_44 = arith.constant 0 : index
    %c0_45 = arith.constant 0 : index
    %54 = vector.load %arg2[%c0_44, %c0_45] : memref<640x9xf32, #tpu.memory_space<vmem>>, vector<27x8xf32>
    %cst_46 = arith.constant dense<0.000000e+00> : vector<18x8xf32>
    %55 = tpu.matmul %53, %54, %cst_46 {dimension_numbers = #tpu.dot_dimension_numbers<[1], [0], [0], [1], [0, 0, 1, 1], [], []>} : vector<18x27xf32>, vector<27x8xf32>, vector<18x8xf32> -> vector<18x8xf32>
    %cst_47 = arith.constant dense<0.000000e+00> : vector<8xf32>
    %56 = vector.multi_reduction <add>, %55, %cst_47 [0] : vector<18x8xf32> to vector<8xf32>
    %57 = vector.shape_cast %56 : vector<8xf32> to vector<1x8xf32>
    %58 = arith.mulf %55, %55 : vector<18x8xf32>
    %cst_48 = arith.constant dense<0.000000e+00> : vector<8xf32>
    %59 = vector.multi_reduction <add>, %58, %cst_48 [0] : vector<18x8xf32> to vector<8xf32>
    %60 = vector.shape_cast %59 : vector<8xf32> to vector<1x8xf32>
    %cst_49 = arith.constant 0.055555556 : f32
    %61 = vector.broadcast %cst_49 : f32 to vector<1x8xf32>
    %62 = arith.mulf %57, %61 : vector<1x8xf32>
    %cst_50 = arith.constant 0.055555556 : f32
    %63 = vector.broadcast %cst_50 : f32 to vector<1x8xf32>
    %64 = arith.mulf %60, %63 : vector<1x8xf32>
    %65 = arith.mulf %62, %62 : vector<1x8xf32>
    %66 = arith.subf %64, %65 : vector<1x8xf32>
    %cst_51 = arith.constant 0.000000e+00 : f32
    %67 = vector.broadcast %cst_51 : f32 to vector<1x8xf32>
    %68 = arith.maximumf %66, %67 : vector<1x8xf32>
    %69 = vector.broadcast %62 : vector<1x8xf32> to vector<18x8xf32>
    %70 = arith.subf %55, %69 : vector<18x8xf32>
    %cst_52 = arith.constant 9.99999974E-6 : f32
    %71 = vector.broadcast %cst_52 : f32 to vector<1x8xf32>
    %72 = arith.addf %68, %71 : vector<1x8xf32>
    %73 = math.rsqrt %72 : vector<1x8xf32>
    %74 = vector.broadcast %73 : vector<1x8xf32> to vector<18x8xf32>
    %75 = arith.mulf %70, %74 : vector<18x8xf32>
    %c32 = arith.constant 32 : index
    %c0_53 = arith.constant 0 : index
    %76 = vector.load %arg2[%c32, %c0_53] : memref<640x9xf32, #tpu.memory_space<vmem>>, vector<1x8xf32>
    %77 = vector.broadcast %76 : vector<1x8xf32> to vector<18x8xf32>
    %78 = arith.mulf %75, %77 : vector<18x8xf32>
    %c40 = arith.constant 40 : index
    %c0_54 = arith.constant 0 : index
    %79 = vector.load %arg2[%c40, %c0_54] : memref<640x9xf32, #tpu.memory_space<vmem>>, vector<1x8xf32>
    %80 = vector.broadcast %79 : vector<1x8xf32> to vector<18x8xf32>
    %81 = arith.addf %78, %80 : vector<18x8xf32>
    %cst_55 = arith.constant 0.000000e+00 : f32
    %82 = vector.broadcast %cst_55 : f32 to vector<18x8xf32>
    %83 = arith.maximumf %81, %82 : vector<18x8xf32>
    %c8_56 = arith.constant 8 : index
    %c0_57 = arith.constant 0 : index
    %84 = vector.load %arg5[%c8_56, %c0_57] : memref<120x8xf32, #tpu.memory_space<vmem>>, vector<18x8xf32>
    tpu.vector_store %arg5[%c8_56, %c0_57], %83 {strides = array<i32>} : memref<120x8xf32, #tpu.memory_space<vmem>>, vector<18x8xf32>,
    %c0_58 = arith.constant 0 : index
    %c0_59 = arith.constant 0 : index
    %c0_60 = arith.constant 0 : index
    %85 = vector.load %arg0[%c0_58, %c0_59, %c0_60] : memref<9x18x1xf32, #tpu.memory_space<vmem>>, vector<1x18x1xf32>
    %86 = vector.shape_cast %85 : vector<1x18x1xf32> to vector<18x1xf32>
    %c4_61 = arith.constant 4 : index
    %c0_62 = arith.constant 0 : index
    %87 = vector.load %arg5[%c4_61, %c0_62] : memref<120x8xf32, #tpu.memory_space<vmem>>, vector<18x8xf32>
    %88 = vector.broadcast %86 : vector<18x1xf32> to vector<18x8xf32>
    %89 = arith.mulf %88, %87 : vector<18x8xf32>
    %c1_63 = arith.constant 1 : index
    %c0_64 = arith.constant 0 : index
    %c0_65 = arith.constant 0 : index
    %90 = vector.load %arg0[%c1_63, %c0_64, %c0_65] : memref<9x18x1xf32, #tpu.memory_space<vmem>>, vector<1x18x1xf32>
    %91 = vector.shape_cast %90 : vector<1x18x1xf32> to vector<18x1xf32>
    %c5_66 = arith.constant 5 : index
    %c0_67 = arith.constant 0 : index
    %92 = vector.load %arg5[%c5_66, %c0_67] : memref<120x8xf32, #tpu.memory_space<vmem>>, vector<18x8xf32>
    %93 = vector.broadcast %91 : vector<18x1xf32> to vector<18x8xf32>
    %94 = arith.mulf %93, %92 : vector<18x8xf32>
    %c2_68 = arith.constant 2 : index
    %c0_69 = arith.constant 0 : index
    %c0_70 = arith.constant 0 : index
    %95 = vector.load %arg0[%c2_68, %c0_69, %c0_70] : memref<9x18x1xf32, #tpu.memory_space<vmem>>, vector<1x18x1xf32>
    %96 = vector.shape_cast %95 : vector<1x18x1xf32> to vector<18x1xf32>
    %c6_71 = arith.constant 6 : index
    %c0_72 = arith.constant 0 : index
    %97 = vector.load %arg5[%c6_71, %c0_72] : memref<120x8xf32, #tpu.memory_space<vmem>>, vector<18x8xf32>
    %98 = vector.broadcast %96 : vector<18x1xf32> to vector<18x8xf32>
    %99 = arith.mulf %98, %97 : vector<18x8xf32>
    %c3_73 = arith.constant 3 : index
    %c0_74 = arith.constant 0 : index
    %c0_75 = arith.constant 0 : index
    %100 = vector.load %arg0[%c3_73, %c0_74, %c0_75] : memref<9x18x1xf32, #tpu.memory_space<vmem>>, vector<1x18x1xf32>
    %101 = vector.shape_cast %100 : vector<1x18x1xf32> to vector<18x1xf32>
    %c7_76 = arith.constant 7 : index
    %c0_77 = arith.constant 0 : index
    %102 = vector.load %arg5[%c7_76, %c0_77] : memref<120x8xf32, #tpu.memory_space<vmem>>, vector<18x8xf32>
    %103 = vector.broadcast %101 : vector<18x1xf32> to vector<18x8xf32>
    %104 = arith.mulf %103, %102 : vector<18x8xf32>
    %c4_78 = arith.constant 4 : index
    %c0_79 = arith.constant 0 : index
    %c0_80 = arith.constant 0 : index
    %105 = vector.load %arg0[%c4_78, %c0_79, %c0_80] : memref<9x18x1xf32, #tpu.memory_space<vmem>>, vector<1x18x1xf32>
    %106 = vector.shape_cast %105 : vector<1x18x1xf32> to vector<18x1xf32>
    %c8_81 = arith.constant 8 : index
    %c0_82 = arith.constant 0 : index
    %107 = vector.load %arg5[%c8_81, %c0_82] : memref<120x8xf32, #tpu.memory_space<vmem>>, vector<18x8xf32>
    %108 = vector.broadcast %106 : vector<18x1xf32> to vector<18x8xf32>
    %109 = arith.mulf %108, %107 : vector<18x8xf32>
    %c5_83 = arith.constant 5 : index
    %c0_84 = arith.constant 0 : index
    %c0_85 = arith.constant 0 : index
    %110 = vector.load %arg0[%c5_83, %c0_84, %c0_85] : memref<9x18x1xf32, #tpu.memory_space<vmem>>, vector<1x18x1xf32>
    %111 = vector.shape_cast %110 : vector<1x18x1xf32> to vector<18x1xf32>
    %c9_86 = arith.constant 9 : index
    %c0_87 = arith.constant 0 : index
    %112 = vector.load %arg5[%c9_86, %c0_87] : memref<120x8xf32, #tpu.memory_space<vmem>>, vector<18x8xf32>
    %113 = vector.broadcast %111 : vector<18x1xf32> to vector<18x8xf32>
    %114 = arith.mulf %113, %112 : vector<18x8xf32>
    %c6_88 = arith.constant 6 : index
    %c0_89 = arith.constant 0 : index
    %c0_90 = arith.constant 0 : index
    %115 = vector.load %arg0[%c6_88, %c0_89, %c0_90] : memref<9x18x1xf32, #tpu.memory_space<vmem>>, vector<1x18x1xf32>
    %116 = vector.shape_cast %115 : vector<1x18x1xf32> to vector<18x1xf32>
    %c10_91 = arith.constant 10 : index
    %c0_92 = arith.constant 0 : index
    %117 = vector.load %arg5[%c10_91, %c0_92] : memref<120x8xf32, #tpu.memory_space<vmem>>, vector<18x8xf32>
    %118 = vector.broadcast %116 : vector<18x1xf32> to vector<18x8xf32>
    %119 = arith.mulf %118, %117 : vector<18x8xf32>
    %c7_93 = arith.constant 7 : index
    %c0_94 = arith.constant 0 : index
    %c0_95 = arith.constant 0 : index
    %120 = vector.load %arg0[%c7_93, %c0_94, %c0_95] : memref<9x18x1xf32, #tpu.memory_space<vmem>>, vector<1x18x1xf32>
    %121 = vector.shape_cast %120 : vector<1x18x1xf32> to vector<18x1xf32>
    %c11_96 = arith.constant 11 : index
    %c0_97 = arith.constant 0 : index
    %122 = vector.load %arg5[%c11_96, %c0_97] : memref<120x8xf32, #tpu.memory_space<vmem>>, vector<18x8xf32>
    %123 = vector.broadcast %121 : vector<18x1xf32> to vector<18x8xf32>
    %124 = arith.mulf %123, %122 : vector<18x8xf32>
    %c8_98 = arith.constant 8 : index
    %c0_99 = arith.constant 0 : index
    %c0_100 = arith.constant 0 : index
    %125 = vector.load %arg0[%c8_98, %c0_99, %c0_100] : memref<9x18x1xf32, #tpu.memory_space<vmem>>, vector<1x18x1xf32>
    %126 = vector.shape_cast %125 : vector<1x18x1xf32> to vector<18x1xf32>
    %c12_101 = arith.constant 12 : index
    %c0_102 = arith.constant 0 : index
    %127 = vector.load %arg5[%c12_101, %c0_102] : memref<120x8xf32, #tpu.memory_space<vmem>>, vector<18x8xf32>
    %128 = vector.broadcast %126 : vector<18x1xf32> to vector<18x8xf32>
    %129 = arith.mulf %128, %127 : vector<18x8xf32>
    %130 = tpu.concatenate %89, %94, %99, %104, %109, %114, %119, %124, %129 in 1 : vector<18x8xf32>, vector<18x8xf32>, vector<18x8xf32>, vector<18x8xf32>, vector<18x8xf32>, vector<18x8xf32>, vector<18x8xf32>, vector<18x8xf32>, vector<18x8xf32> -> vector<18x72xf32>
    %c48 = arith.constant 48 : index
    %c0_103 = arith.constant 0 : index
    %131 = vector.load %arg2[%c48, %c0_103] : memref<640x9xf32, #tpu.memory_space<vmem>>, vector<72x8xf32>
    %cst_104 = arith.constant dense<0.000000e+00> : vector<18x8xf32>
    %132 = tpu.matmul %130, %131, %cst_104 {dimension_numbers = #tpu.dot_dimension_numbers<[1], [0], [0], [1], [0, 0, 1, 1], [], []>} : vector<18x72xf32>, vector<72x8xf32>, vector<18x8xf32> -> vector<18x8xf32>
    %cst_105 = arith.constant dense<0.000000e+00> : vector<8xf32>
    %133 = vector.multi_reduction <add>, %132, %cst_105 [0] : vector<18x8xf32> to vector<8xf32>
    %134 = vector.shape_cast %133 : vector<8xf32> to vector<1x8xf32>
    %135 = arith.mulf %132, %132 : vector<18x8xf32>
    %cst_106 = arith.constant dense<0.000000e+00> : vector<8xf32>
    %136 = vector.multi_reduction <add>, %135, %cst_106 [0] : vector<18x8xf32> to vector<8xf32>
    %137 = vector.shape_cast %136 : vector<8xf32> to vector<1x8xf32>
    %cst_107 = arith.constant 0.055555556 : f32
    %138 = vector.broadcast %cst_107 : f32 to vector<1x8xf32>
    %139 = arith.mulf %134, %138 : vector<1x8xf32>
    %cst_108 = arith.constant 0.055555556 : f32
    %140 = vector.broadcast %cst_108 : f32 to vector<1x8xf32>
    %141 = arith.mulf %137, %140 : vector<1x8xf32>
    %142 = arith.mulf %139, %139 : vector<1x8xf32>
    %143 = arith.subf %141, %142 : vector<1x8xf32>
    %cst_109 = arith.constant 0.000000e+00 : f32
    %144 = vector.broadcast %cst_109 : f32 to vector<1x8xf32>
    %145 = arith.maximumf %143, %144 : vector<1x8xf32>
    %146 = vector.broadcast %139 : vector<1x8xf32> to vector<18x8xf32>
    %147 = arith.subf %132, %146 : vector<18x8xf32>
    %cst_110 = arith.constant 9.99999974E-6 : f32
    %148 = vector.broadcast %cst_110 : f32 to vector<1x8xf32>
    %149 = arith.addf %145, %148 : vector<1x8xf32>
    %150 = math.rsqrt %149 : vector<1x8xf32>
    %151 = vector.broadcast %150 : vector<1x8xf32> to vector<18x8xf32>
    %152 = arith.mulf %147, %151 : vector<18x8xf32>
    %c120 = arith.constant 120 : index
    %c0_111 = arith.constant 0 : index
    %153 = vector.load %arg2[%c120, %c0_111] : memref<640x9xf32, #tpu.memory_space<vmem>>, vector<1x8xf32>
    %154 = vector.broadcast %153 : vector<1x8xf32> to vector<18x8xf32>
    %155 = arith.mulf %152, %154 : vector<18x8xf32>
    %c128 = arith.constant 128 : index
    %c0_112 = arith.constant 0 : index
    %156 = vector.load %arg2[%c128, %c0_112] : memref<640x9xf32, #tpu.memory_space<vmem>>, vector<1x8xf32>
    %157 = vector.broadcast %156 : vector<1x8xf32> to vector<18x8xf32>
    %158 = arith.addf %155, %157 : vector<18x8xf32>
    %cst_113 = arith.constant 0.000000e+00 : f32
    %159 = vector.broadcast %cst_113 : f32 to vector<18x8xf32>
    %160 = arith.maximumf %158, %159 : vector<18x8xf32>
    %c8_114 = arith.constant 8 : index
    %c0_115 = arith.constant 0 : index
    %161 = vector.load %arg6[%c8_114, %c0_115] : memref<40x8xf32, #tpu.memory_space<vmem>>, vector<18x8xf32>
    tpu.vector_store %arg6[%c8_114, %c0_115], %160 {strides = array<i32>} : memref<40x8xf32, #tpu.memory_space<vmem>>, vector<18x8xf32>,
    %c0_116 = arith.constant 0 : index
    %c0_117 = arith.constant 0 : index
    %c0_118 = arith.constant 0 : index
    %162 = vector.load %arg0[%c0_116, %c0_117, %c0_118] : memref<9x18x1xf32, #tpu.memory_space<vmem>>, vector<1x18x1xf32>
    %163 = vector.shape_cast %162 : vector<1x18x1xf32> to vector<18x1xf32>
    %c4_119 = arith.constant 4 : index
    %c0_120 = arith.constant 0 : index
    %164 = vector.load %arg6[%c4_119, %c0_120] : memref<40x8xf32, #tpu.memory_space<vmem>>, vector<18x8xf32>
    %165 = vector.broadcast %163 : vector<18x1xf32> to vector<18x8xf32>
    %166 = arith.mulf %165, %164 : vector<18x8xf32>
    %c1_121 = arith.constant 1 : index
    %c0_122 = arith.constant 0 : index
    %c0_123 = arith.constant 0 : index
    %167 = vector.load %arg0[%c1_121, %c0_122, %c0_123] : memref<9x18x1xf32, #tpu.memory_space<vmem>>, vector<1x18x1xf32>
    %168 = vector.shape_cast %167 : vector<1x18x1xf32> to vector<18x1xf32>
    %c5_124 = arith.constant 5 : index
    %c0_125 = arith.constant 0 : index
    %169 = vector.load %arg6[%c5_124, %c0_125] : memref<40x8xf32, #tpu.memory_space<vmem>>, vector<18x8xf32>
    %170 = vector.broadcast %168 : vector<18x1xf32> to vector<18x8xf32>
    %171 = arith.mulf %170, %169 : vector<18x8xf32>
    %c2_126 = arith.constant 2 : index
    %c0_127 = arith.constant 0 : index
    %c0_128 = arith.constant 0 : index
    %172 = vector.load %arg0[%c2_126, %c0_127, %c0_128] : memref<9x18x1xf32, #tpu.memory_space<vmem>>, vector<1x18x1xf32>
    %173 = vector.shape_cast %172 : vector<1x18x1xf32> to vector<18x1xf32>
    %c6_129 = arith.constant 6 : index
    %c0_130 = arith.constant 0 : index
    %174 = vector.load %arg6[%c6_129, %c0_130] : memref<40x8xf32, #tpu.memory_space<vmem>>, vector<18x8xf32>
    %175 = vector.broadcast %173 : vector<18x1xf32> to vector<18x8xf32>
    %176 = arith.mulf %175, %174 : vector<18x8xf32>
    %c3_131 = arith.constant 3 : index
    %c0_132 = arith.constant 0 : index
    %c0_133 = arith.constant 0 : index
    %177 = vector.load %arg0[%c3_131, %c0_132, %c0_133] : memref<9x18x1xf32, #tpu.memory_space<vmem>>, vector<1x18x1xf32>
    %178 = vector.shape_cast %177 : vector<1x18x1xf32> to vector<18x1xf32>
    %c7_134 = arith.constant 7 : index
    %c0_135 = arith.constant 0 : index
    %179 = vector.load %arg6[%c7_134, %c0_135] : memref<40x8xf32, #tpu.memory_space<vmem>>, vector<18x8xf32>
    %180 = vector.broadcast %178 : vector<18x1xf32> to vector<18x8xf32>
    %181 = arith.mulf %180, %179 : vector<18x8xf32>
    %c4_136 = arith.constant 4 : index
    %c0_137 = arith.constant 0 : index
    %c0_138 = arith.constant 0 : index
    %182 = vector.load %arg0[%c4_136, %c0_137, %c0_138] : memref<9x18x1xf32, #tpu.memory_space<vmem>>, vector<1x18x1xf32>
    %183 = vector.shape_cast %182 : vector<1x18x1xf32> to vector<18x1xf32>
    %c8_139 = arith.constant 8 : index
    %c0_140 = arith.constant 0 : index
    %184 = vector.load %arg6[%c8_139, %c0_140] : memref<40x8xf32, #tpu.memory_space<vmem>>, vector<18x8xf32>
    %185 = vector.broadcast %183 : vector<18x1xf32> to vector<18x8xf32>
    %186 = arith.mulf %185, %184 : vector<18x8xf32>
    %c5_141 = arith.constant 5 : index
    %c0_142 = arith.constant 0 : index
    %c0_143 = arith.constant 0 : index
    %187 = vector.load %arg0[%c5_141, %c0_142, %c0_143] : memref<9x18x1xf32, #tpu.memory_space<vmem>>, vector<1x18x1xf32>
    %188 = vector.shape_cast %187 : vector<1x18x1xf32> to vector<18x1xf32>
    %c9_144 = arith.constant 9 : index
    %c0_145 = arith.constant 0 : index
    %189 = vector.load %arg6[%c9_144, %c0_145] : memref<40x8xf32, #tpu.memory_space<vmem>>, vector<18x8xf32>
    %190 = vector.broadcast %188 : vector<18x1xf32> to vector<18x8xf32>
    %191 = arith.mulf %190, %189 : vector<18x8xf32>
    %c6_146 = arith.constant 6 : index
    %c0_147 = arith.constant 0 : index
    %c0_148 = arith.constant 0 : index
    %192 = vector.load %arg0[%c6_146, %c0_147, %c0_148] : memref<9x18x1xf32, #tpu.memory_space<vmem>>, vector<1x18x1xf32>
    %193 = vector.shape_cast %192 : vector<1x18x1xf32> to vector<18x1xf32>
    %c10_149 = arith.constant 10 : index
    %c0_150 = arith.constant 0 : index
    %194 = vector.load %arg6[%c10_149, %c0_150] : memref<40x8xf32, #tpu.memory_space<vmem>>, vector<18x8xf32>
    %195 = vector.broadcast %193 : vector<18x1xf32> to vector<18x8xf32>
    %196 = arith.mulf %195, %194 : vector<18x8xf32>
    %c7_151 = arith.constant 7 : index
    %c0_152 = arith.constant 0 : index
    %c0_153 = arith.constant 0 : index
    %197 = vector.load %arg0[%c7_151, %c0_152, %c0_153] : memref<9x18x1xf32, #tpu.memory_space<vmem>>, vector<1x18x1xf32>
    %198 = vector.shape_cast %197 : vector<1x18x1xf32> to vector<18x1xf32>
    %c11_154 = arith.constant 11 : index
    %c0_155 = arith.constant 0 : index
    %199 = vector.load %arg6[%c11_154, %c0_155] : memref<40x8xf32, #tpu.memory_space<vmem>>, vector<18x8xf32>
    %200 = vector.broadcast %198 : vector<18x1xf32> to vector<18x8xf32>
    %201 = arith.mulf %200, %199 : vector<18x8xf32>
    %c8_156 = arith.constant 8 : index
    %c0_157 = arith.constant 0 : index
    %c0_158 = arith.constant 0 : index
    %202 = vector.load %arg0[%c8_156, %c0_157, %c0_158] : memref<9x18x1xf32, #tpu.memory_space<vmem>>, vector<1x18x1xf32>
    %203 = vector.shape_cast %202 : vector<1x18x1xf32> to vector<18x1xf32>
    %c12_159 = arith.constant 12 : index
    %c0_160 = arith.constant 0 : index
    %204 = vector.load %arg6[%c12_159, %c0_160] : memref<40x8xf32, #tpu.memory_space<vmem>>, vector<18x8xf32>
    %205 = vector.broadcast %203 : vector<18x1xf32> to vector<18x8xf32>
    %206 = arith.mulf %205, %204 : vector<18x8xf32>
    %207 = tpu.concatenate %166, %171, %176, %181, %186, %191, %196, %201, %206 in 1 : vector<18x8xf32>, vector<18x8xf32>, vector<18x8xf32>, vector<18x8xf32>, vector<18x8xf32>, vector<18x8xf32>, vector<18x8xf32>, vector<18x8xf32>, vector<18x8xf32> -> vector<18x72xf32>
    %c136 = arith.constant 136 : index
    %c0_161 = arith.constant 0 : index
    %208 = vector.load %arg2[%c136, %c0_161] : memref<640x9xf32, #tpu.memory_space<vmem>>, vector<72x8xf32>
    %cst_162 = arith.constant dense<0.000000e+00> : vector<18x8xf32>
    %209 = tpu.matmul %207, %208, %cst_162 {dimension_numbers = #tpu.dot_dimension_numbers<[1], [0], [0], [1], [0, 0, 1, 1], [], []>} : vector<18x72xf32>, vector<72x8xf32>, vector<18x8xf32> -> vector<18x8xf32>
    %cst_163 = arith.constant dense<0.000000e+00> : vector<8xf32>
    %210 = vector.multi_reduction <add>, %209, %cst_163 [0] : vector<18x8xf32> to vector<8xf32>
    %211 = vector.shape_cast %210 : vector<8xf32> to vector<1x8xf32>
    %212 = arith.mulf %209, %209 : vector<18x8xf32>
    %cst_164 = arith.constant dense<0.000000e+00> : vector<8xf32>
    %213 = vector.multi_reduction <add>, %212, %cst_164 [0] : vector<18x8xf32> to vector<8xf32>
    %214 = vector.shape_cast %213 : vector<8xf32> to vector<1x8xf32>
    %cst_165 = arith.constant 0.055555556 : f32
    %215 = vector.broadcast %cst_165 : f32 to vector<1x8xf32>
    %216 = arith.mulf %211, %215 : vector<1x8xf32>
    %cst_166 = arith.constant 0.055555556 : f32
    %217 = vector.broadcast %cst_166 : f32 to vector<1x8xf32>
    %218 = arith.mulf %214, %217 : vector<1x8xf32>
    %219 = arith.mulf %216, %216 : vector<1x8xf32>
    %220 = arith.subf %218, %219 : vector<1x8xf32>
    %cst_167 = arith.constant 0.000000e+00 : f32
    %221 = vector.broadcast %cst_167 : f32 to vector<1x8xf32>
    %222 = arith.maximumf %220, %221 : vector<1x8xf32>
    %223 = vector.broadcast %216 : vector<1x8xf32> to vector<18x8xf32>
    %224 = arith.subf %209, %223 : vector<18x8xf32>
    %cst_168 = arith.constant 9.99999974E-6 : f32
    %225 = vector.broadcast %cst_168 : f32 to vector<1x8xf32>
    %226 = arith.addf %222, %225 : vector<1x8xf32>
    %227 = math.rsqrt %226 : vector<1x8xf32>
    %228 = vector.broadcast %227 : vector<1x8xf32> to vector<18x8xf32>
    %229 = arith.mulf %224, %228 : vector<18x8xf32>
    %c208 = arith.constant 208 : index
    %c0_169 = arith.constant 0 : index
    %230 = vector.load %arg2[%c208, %c0_169] : memref<640x9xf32, #tpu.memory_space<vmem>>, vector<1x8xf32>
    %231 = vector.broadcast %230 : vector<1x8xf32> to vector<18x8xf32>
    %232 = arith.mulf %229, %231 : vector<18x8xf32>
    %c216 = arith.constant 216 : index
    %c0_170 = arith.constant 0 : index
    %233 = vector.load %arg2[%c216, %c0_170] : memref<640x9xf32, #tpu.memory_space<vmem>>, vector<1x8xf32>
    %234 = vector.broadcast %233 : vector<1x8xf32> to vector<18x8xf32>
    %235 = arith.addf %232, %234 : vector<18x8xf32>
    %cst_171 = arith.constant 0.000000e+00 : f32
    %236 = vector.broadcast %cst_171 : f32 to vector<18x8xf32>
    %237 = arith.maximumf %235, %236 : vector<18x8xf32>
    %c48_172 = arith.constant 48 : index
    %c0_173 = arith.constant 0 : index
    %238 = vector.load %arg5[%c48_172, %c0_173] : memref<120x8xf32, #tpu.memory_space<vmem>>, vector<18x8xf32>
    tpu.vector_store %arg5[%c48_172, %c0_173], %237 {strides = array<i32>} : memref<120x8xf32, #tpu.memory_space<vmem>>, vector<18x8xf32>,
    %c0_174 = arith.constant 0 : index
    %c0_175 = arith.constant 0 : index
    %c0_176 = arith.constant 0 : index
    %239 = vector.load %arg0[%c0_174, %c0_175, %c0_176] : memref<9x18x1xf32, #tpu.memory_space<vmem>>, vector<1x18x1xf32>
    %240 = vector.shape_cast %239 : vector<1x18x1xf32> to vector<18x1xf32>
    %c4_177 = arith.constant 4 : index
    %c0_178 = arith.constant 0 : index
    %241 = vector.load %arg5[%c4_177, %c0_178] : memref<120x8xf32, #tpu.memory_space<vmem>>, vector<18x8xf32>
    %c44 = arith.constant 44 : index
    %c0_179 = arith.constant 0 : index
    %242 = vector.load %arg5[%c44, %c0_179] : memref<120x8xf32, #tpu.memory_space<vmem>>, vector<18x8xf32>
    %243 = tpu.concatenate %241, %242 in 1 : vector<18x8xf32>, vector<18x8xf32> -> vector<18x16xf32>
    %244 = vector.broadcast %240 : vector<18x1xf32> to vector<18x16xf32>
    %245 = arith.mulf %244, %243 : vector<18x16xf32>
    %c1_180 = arith.constant 1 : index
    %c0_181 = arith.constant 0 : index
    %c0_182 = arith.constant 0 : index
    %246 = vector.load %arg0[%c1_180, %c0_181, %c0_182] : memref<9x18x1xf32, #tpu.memory_space<vmem>>, vector<1x18x1xf32>
    %247 = vector.shape_cast %246 : vector<1x18x1xf32> to vector<18x1xf32>
    %c5_183 = arith.constant 5 : index
    %c0_184 = arith.constant 0 : index
    %248 = vector.load %arg5[%c5_183, %c0_184] : memref<120x8xf32, #tpu.memory_space<vmem>>, vector<18x8xf32>
    %c45 = arith.constant 45 : index
    %c0_185 = arith.constant 0 : index
    %249 = vector.load %arg5[%c45, %c0_185] : memref<120x8xf32, #tpu.memory_space<vmem>>, vector<18x8xf32>
    %250 = tpu.concatenate %248, %249 in 1 : vector<18x8xf32>, vector<18x8xf32> -> vector<18x16xf32>
    %251 = vector.broadcast %247 : vector<18x1xf32> to vector<18x16xf32>
    %252 = arith.mulf %251, %250 : vector<18x16xf32>
    %c2_186 = arith.constant 2 : index
    %c0_187 = arith.constant 0 : index
    %c0_188 = arith.constant 0 : index
    %253 = vector.load %arg0[%c2_186, %c0_187, %c0_188] : memref<9x18x1xf32, #tpu.memory_space<vmem>>, vector<1x18x1xf32>
    %254 = vector.shape_cast %253 : vector<1x18x1xf32> to vector<18x1xf32>
    %c6_189 = arith.constant 6 : index
    %c0_190 = arith.constant 0 : index
    %255 = vector.load %arg5[%c6_189, %c0_190] : memref<120x8xf32, #tpu.memory_space<vmem>>, vector<18x8xf32>
    %c46 = arith.constant 46 : index
    %c0_191 = arith.constant 0 : index
    %256 = vector.load %arg5[%c46, %c0_191] : memref<120x8xf32, #tpu.memory_space<vmem>>, vector<18x8xf32>
    %257 = tpu.concatenate %255, %256 in 1 : vector<18x8xf32>, vector<18x8xf32> -> vector<18x16xf32>
    %258 = vector.broadcast %254 : vector<18x1xf32> to vector<18x16xf32>
    %259 = arith.mulf %258, %257 : vector<18x16xf32>
    %c3_192 = arith.constant 3 : index
    %c0_193 = arith.constant 0 : index
    %c0_194 = arith.constant 0 : index
    %260 = vector.load %arg0[%c3_192, %c0_193, %c0_194] : memref<9x18x1xf32, #tpu.memory_space<vmem>>, vector<1x18x1xf32>
    %261 = vector.shape_cast %260 : vector<1x18x1xf32> to vector<18x1xf32>
    %c7_195 = arith.constant 7 : index
    %c0_196 = arith.constant 0 : index
    %262 = vector.load %arg5[%c7_195, %c0_196] : memref<120x8xf32, #tpu.memory_space<vmem>>, vector<18x8xf32>
    %c47 = arith.constant 47 : index
    %c0_197 = arith.constant 0 : index
    %263 = vector.load %arg5[%c47, %c0_197] : memref<120x8xf32, #tpu.memory_space<vmem>>, vector<18x8xf32>
    %264 = tpu.concatenate %262, %263 in 1 : vector<18x8xf32>, vector<18x8xf32> -> vector<18x16xf32>
    %265 = vector.broadcast %261 : vector<18x1xf32> to vector<18x16xf32>
    %266 = arith.mulf %265, %264 : vector<18x16xf32>
    %c4_198 = arith.constant 4 : index
    %c0_199 = arith.constant 0 : index
    %c0_200 = arith.constant 0 : index
    %267 = vector.load %arg0[%c4_198, %c0_199, %c0_200] : memref<9x18x1xf32, #tpu.memory_space<vmem>>, vector<1x18x1xf32>
    %268 = vector.shape_cast %267 : vector<1x18x1xf32> to vector<18x1xf32>
    %c8_201 = arith.constant 8 : index
    %c0_202 = arith.constant 0 : index
    %269 = vector.load %arg5[%c8_201, %c0_202] : memref<120x8xf32, #tpu.memory_space<vmem>>, vector<18x8xf32>
    %c48_203 = arith.constant 48 : index
    %c0_204 = arith.constant 0 : index
    %270 = vector.load %arg5[%c48_203, %c0_204] : memref<120x8xf32, #tpu.memory_space<vmem>>, vector<18x8xf32>
    %271 = tpu.concatenate %269, %270 in 1 : vector<18x8xf32>, vector<18x8xf32> -> vector<18x16xf32>
    %272 = vector.broadcast %268 : vector<18x1xf32> to vector<18x16xf32>
    %273 = arith.mulf %272, %271 : vector<18x16xf32>
    %c5_205 = arith.constant 5 : index
    %c0_206 = arith.constant 0 : index
    %c0_207 = arith.constant 0 : index
    %274 = vector.load %arg0[%c5_205, %c0_206, %c0_207] : memref<9x18x1xf32, #tpu.memory_space<vmem>>, vector<1x18x1xf32>
    %275 = vector.shape_cast %274 : vector<1x18x1xf32> to vector<18x1xf32>
    %c9_208 = arith.constant 9 : index
    %c0_209 = arith.constant 0 : index
    %276 = vector.load %arg5[%c9_208, %c0_209] : memref<120x8xf32, #tpu.memory_space<vmem>>, vector<18x8xf32>
    %c49 = arith.constant 49 : index
    %c0_210 = arith.constant 0 : index
    %277 = vector.load %arg5[%c49, %c0_210] : memref<120x8xf32, #tpu.memory_space<vmem>>, vector<18x8xf32>
    %278 = tpu.concatenate %276, %277 in 1 : vector<18x8xf32>, vector<18x8xf32> -> vector<18x16xf32>
    %279 = vector.broadcast %275 : vector<18x1xf32> to vector<18x16xf32>
    %280 = arith.mulf %279, %278 : vector<18x16xf32>
    %c6_211 = arith.constant 6 : index
    %c0_212 = arith.constant 0 : index
    %c0_213 = arith.constant 0 : index
    %281 = vector.load %arg0[%c6_211, %c0_212, %c0_213] : memref<9x18x1xf32, #tpu.memory_space<vmem>>, vector<1x18x1xf32>
    %282 = vector.shape_cast %281 : vector<1x18x1xf32> to vector<18x1xf32>
    %c10_214 = arith.constant 10 : index
    %c0_215 = arith.constant 0 : index
    %283 = vector.load %arg5[%c10_214, %c0_215] : memref<120x8xf32, #tpu.memory_space<vmem>>, vector<18x8xf32>
    %c50 = arith.constant 50 : index
    %c0_216 = arith.constant 0 : index
    %284 = vector.load %arg5[%c50, %c0_216] : memref<120x8xf32, #tpu.memory_space<vmem>>, vector<18x8xf32>
    %285 = tpu.concatenate %283, %284 in 1 : vector<18x8xf32>, vector<18x8xf32> -> vector<18x16xf32>
    %286 = vector.broadcast %282 : vector<18x1xf32> to vector<18x16xf32>
    %287 = arith.mulf %286, %285 : vector<18x16xf32>
    %c7_217 = arith.constant 7 : index
    %c0_218 = arith.constant 0 : index
    %c0_219 = arith.constant 0 : index
    %288 = vector.load %arg0[%c7_217, %c0_218, %c0_219] : memref<9x18x1xf32, #tpu.memory_space<vmem>>, vector<1x18x1xf32>
    %289 = vector.shape_cast %288 : vector<1x18x1xf32> to vector<18x1xf32>
    %c11_220 = arith.constant 11 : index
    %c0_221 = arith.constant 0 : index
    %290 = vector.load %arg5[%c11_220, %c0_221] : memref<120x8xf32, #tpu.memory_space<vmem>>, vector<18x8xf32>
    %c51 = arith.constant 51 : index
    %c0_222 = arith.constant 0 : index
    %291 = vector.load %arg5[%c51, %c0_222] : memref<120x8xf32, #tpu.memory_space<vmem>>, vector<18x8xf32>
    %292 = tpu.concatenate %290, %291 in 1 : vector<18x8xf32>, vector<18x8xf32> -> vector<18x16xf32>
    %293 = vector.broadcast %289 : vector<18x1xf32> to vector<18x16xf32>
    %294 = arith.mulf %293, %292 : vector<18x16xf32>
    %c8_223 = arith.constant 8 : index
    %c0_224 = arith.constant 0 : index
    %c0_225 = arith.constant 0 : index
    %295 = vector.load %arg0[%c8_223, %c0_224, %c0_225] : memref<9x18x1xf32, #tpu.memory_space<vmem>>, vector<1x18x1xf32>
    %296 = vector.shape_cast %295 : vector<1x18x1xf32> to vector<18x1xf32>
    %c12_226 = arith.constant 12 : index
    %c0_227 = arith.constant 0 : index
    %297 = vector.load %arg5[%c12_226, %c0_227] : memref<120x8xf32, #tpu.memory_space<vmem>>, vector<18x8xf32>
    %c52 = arith.constant 52 : index
    %c0_228 = arith.constant 0 : index
    %298 = vector.load %arg5[%c52, %c0_228] : memref<120x8xf32, #tpu.memory_space<vmem>>, vector<18x8xf32>
    %299 = tpu.concatenate %297, %298 in 1 : vector<18x8xf32>, vector<18x8xf32> -> vector<18x16xf32>
    %300 = vector.broadcast %296 : vector<18x1xf32> to vector<18x16xf32>
    %301 = arith.mulf %300, %299 : vector<18x16xf32>
    %302 = tpu.concatenate %245, %252, %259, %266, %273, %280, %287, %294, %301 in 1 : vector<18x16xf32>, vector<18x16xf32>, vector<18x16xf32>, vector<18x16xf32>, vector<18x16xf32>, vector<18x16xf32>, vector<18x16xf32>, vector<18x16xf32>, vector<18x16xf32> -> vector<18x144xf32>
    %c224 = arith.constant 224 : index
    %c0_229 = arith.constant 0 : index
    %303 = vector.load %arg2[%c224, %c0_229] : memref<640x9xf32, #tpu.memory_space<vmem>>, vector<144x8xf32>
    %cst_230 = arith.constant dense<0.000000e+00> : vector<18x8xf32>
    %304 = tpu.matmul %302, %303, %cst_230 {dimension_numbers = #tpu.dot_dimension_numbers<[1], [0], [0], [1], [0, 0, 1, 1], [], []>} : vector<18x144xf32>, vector<144x8xf32>, vector<18x8xf32> -> vector<18x8xf32>
    %cst_231 = arith.constant dense<0.000000e+00> : vector<8xf32>
    %305 = vector.multi_reduction <add>, %304, %cst_231 [0] : vector<18x8xf32> to vector<8xf32>
    %306 = vector.shape_cast %305 : vector<8xf32> to vector<1x8xf32>
    %307 = arith.mulf %304, %304 : vector<18x8xf32>
    %cst_232 = arith.constant dense<0.000000e+00> : vector<8xf32>
    %308 = vector.multi_reduction <add>, %307, %cst_232 [0] : vector<18x8xf32> to vector<8xf32>
    %309 = vector.shape_cast %308 : vector<8xf32> to vector<1x8xf32>
    %cst_233 = arith.constant 0.055555556 : f32
    %310 = vector.broadcast %cst_233 : f32 to vector<1x8xf32>
    %311 = arith.mulf %306, %310 : vector<1x8xf32>
    %cst_234 = arith.constant 0.055555556 : f32
    %312 = vector.broadcast %cst_234 : f32 to vector<1x8xf32>
    %313 = arith.mulf %309, %312 : vector<1x8xf32>
    %314 = arith.mulf %311, %311 : vector<1x8xf32>
    %315 = arith.subf %313, %314 : vector<1x8xf32>
    %cst_235 = arith.constant 0.000000e+00 : f32
    %316 = vector.broadcast %cst_235 : f32 to vector<1x8xf32>
    %317 = arith.maximumf %315, %316 : vector<1x8xf32>
    %318 = vector.broadcast %311 : vector<1x8xf32> to vector<18x8xf32>
    %319 = arith.subf %304, %318 : vector<18x8xf32>
    %cst_236 = arith.constant 9.99999974E-6 : f32
    %320 = vector.broadcast %cst_236 : f32 to vector<1x8xf32>
    %321 = arith.addf %317, %320 : vector<1x8xf32>
    %322 = math.rsqrt %321 : vector<1x8xf32>
    %323 = vector.broadcast %322 : vector<1x8xf32> to vector<18x8xf32>
    %324 = arith.mulf %319, %323 : vector<18x8xf32>
    %c368 = arith.constant 368 : index
    %c0_237 = arith.constant 0 : index
    %325 = vector.load %arg2[%c368, %c0_237] : memref<640x9xf32, #tpu.memory_space<vmem>>, vector<1x8xf32>
    %326 = vector.broadcast %325 : vector<1x8xf32> to vector<18x8xf32>
    %327 = arith.mulf %324, %326 : vector<18x8xf32>
    %c376 = arith.constant 376 : index
    %c0_238 = arith.constant 0 : index
    %328 = vector.load %arg2[%c376, %c0_238] : memref<640x9xf32, #tpu.memory_space<vmem>>, vector<1x8xf32>
    %329 = vector.broadcast %328 : vector<1x8xf32> to vector<18x8xf32>
    %330 = arith.addf %327, %329 : vector<18x8xf32>
    %cst_239 = arith.constant 0.000000e+00 : f32
    %331 = vector.broadcast %cst_239 : f32 to vector<18x8xf32>
    %332 = arith.maximumf %330, %331 : vector<18x8xf32>
    %c8_240 = arith.constant 8 : index
    %c0_241 = arith.constant 0 : index
    %333 = vector.load %arg6[%c8_240, %c0_241] : memref<40x8xf32, #tpu.memory_space<vmem>>, vector<18x8xf32>
    tpu.vector_store %arg6[%c8_240, %c0_241], %332 {strides = array<i32>} : memref<40x8xf32, #tpu.memory_space<vmem>>, vector<18x8xf32>,
    %c0_242 = arith.constant 0 : index
    %c0_243 = arith.constant 0 : index
    %c0_244 = arith.constant 0 : index
    %334 = vector.load %arg0[%c0_242, %c0_243, %c0_244] : memref<9x18x1xf32, #tpu.memory_space<vmem>>, vector<1x18x1xf32>
    %335 = vector.shape_cast %334 : vector<1x18x1xf32> to vector<18x1xf32>
    %c4_245 = arith.constant 4 : index
    %c0_246 = arith.constant 0 : index
    %336 = vector.load %arg6[%c4_245, %c0_246] : memref<40x8xf32, #tpu.memory_space<vmem>>, vector<18x8xf32>
    %337 = vector.broadcast %335 : vector<18x1xf32> to vector<18x8xf32>
    %338 = arith.mulf %337, %336 : vector<18x8xf32>
    %c1_247 = arith.constant 1 : index
    %c0_248 = arith.constant 0 : index
    %c0_249 = arith.constant 0 : index
    %339 = vector.load %arg0[%c1_247, %c0_248, %c0_249] : memref<9x18x1xf32, #tpu.memory_space<vmem>>, vector<1x18x1xf32>
    %340 = vector.shape_cast %339 : vector<1x18x1xf32> to vector<18x1xf32>
    %c5_250 = arith.constant 5 : index
    %c0_251 = arith.constant 0 : index
    %341 = vector.load %arg6[%c5_250, %c0_251] : memref<40x8xf32, #tpu.memory_space<vmem>>, vector<18x8xf32>
    %342 = vector.broadcast %340 : vector<18x1xf32> to vector<18x8xf32>
    %343 = arith.mulf %342, %341 : vector<18x8xf32>
    %c2_252 = arith.constant 2 : index
    %c0_253 = arith.constant 0 : index
    %c0_254 = arith.constant 0 : index
    %344 = vector.load %arg0[%c2_252, %c0_253, %c0_254] : memref<9x18x1xf32, #tpu.memory_space<vmem>>, vector<1x18x1xf32>
    %345 = vector.shape_cast %344 : vector<1x18x1xf32> to vector<18x1xf32>
    %c6_255 = arith.constant 6 : index
    %c0_256 = arith.constant 0 : index
    %346 = vector.load %arg6[%c6_255, %c0_256] : memref<40x8xf32, #tpu.memory_space<vmem>>, vector<18x8xf32>
    %347 = vector.broadcast %345 : vector<18x1xf32> to vector<18x8xf32>
    %348 = arith.mulf %347, %346 : vector<18x8xf32>
    %c3_257 = arith.constant 3 : index
    %c0_258 = arith.constant 0 : index
    %c0_259 = arith.constant 0 : index
    %349 = vector.load %arg0[%c3_257, %c0_258, %c0_259] : memref<9x18x1xf32, #tpu.memory_space<vmem>>, vector<1x18x1xf32>
    %350 = vector.shape_cast %349 : vector<1x18x1xf32> to vector<18x1xf32>
    %c7_260 = arith.constant 7 : index
    %c0_261 = arith.constant 0 : index
    %351 = vector.load %arg6[%c7_260, %c0_261] : memref<40x8xf32, #tpu.memory_space<vmem>>, vector<18x8xf32>
    %352 = vector.broadcast %350 : vector<18x1xf32> to vector<18x8xf32>
    %353 = arith.mulf %352, %351 : vector<18x8xf32>
    %c4_262 = arith.constant 4 : index
    %c0_263 = arith.constant 0 : index
    %c0_264 = arith.constant 0 : index
    %354 = vector.load %arg0[%c4_262, %c0_263, %c0_264] : memref<9x18x1xf32, #tpu.memory_space<vmem>>, vector<1x18x1xf32>
    %355 = vector.shape_cast %354 : vector<1x18x1xf32> to vector<18x1xf32>
    %c8_265 = arith.constant 8 : index
    %c0_266 = arith.constant 0 : index
    %356 = vector.load %arg6[%c8_265, %c0_266] : memref<40x8xf32, #tpu.memory_space<vmem>>, vector<18x8xf32>
    %357 = vector.broadcast %355 : vector<18x1xf32> to vector<18x8xf32>
    %358 = arith.mulf %357, %356 : vector<18x8xf32>
    %c5_267 = arith.constant 5 : index
    %c0_268 = arith.constant 0 : index
    %c0_269 = arith.constant 0 : index
    %359 = vector.load %arg0[%c5_267, %c0_268, %c0_269] : memref<9x18x1xf32, #tpu.memory_space<vmem>>, vector<1x18x1xf32>
    %360 = vector.shape_cast %359 : vector<1x18x1xf32> to vector<18x1xf32>
    %c9_270 = arith.constant 9 : index
    %c0_271 = arith.constant 0 : index
    %361 = vector.load %arg6[%c9_270, %c0_271] : memref<40x8xf32, #tpu.memory_space<vmem>>, vector<18x8xf32>
    %362 = vector.broadcast %360 : vector<18x1xf32> to vector<18x8xf32>
    %363 = arith.mulf %362, %361 : vector<18x8xf32>
    %c6_272 = arith.constant 6 : index
    %c0_273 = arith.constant 0 : index
    %c0_274 = arith.constant 0 : index
    %364 = vector.load %arg0[%c6_272, %c0_273, %c0_274] : memref<9x18x1xf32, #tpu.memory_space<vmem>>, vector<1x18x1xf32>
    %365 = vector.shape_cast %364 : vector<1x18x1xf32> to vector<18x1xf32>
    %c10_275 = arith.constant 10 : index
    %c0_276 = arith.constant 0 : index
    %366 = vector.load %arg6[%c10_275, %c0_276] : memref<40x8xf32, #tpu.memory_space<vmem>>, vector<18x8xf32>
    %367 = vector.broadcast %365 : vector<18x1xf32> to vector<18x8xf32>
    %368 = arith.mulf %367, %366 : vector<18x8xf32>
    %c7_277 = arith.constant 7 : index
    %c0_278 = arith.constant 0 : index
    %c0_279 = arith.constant 0 : index
    %369 = vector.load %arg0[%c7_277, %c0_278, %c0_279] : memref<9x18x1xf32, #tpu.memory_space<vmem>>, vector<1x18x1xf32>
    %370 = vector.shape_cast %369 : vector<1x18x1xf32> to vector<18x1xf32>
    %c11_280 = arith.constant 11 : index
    %c0_281 = arith.constant 0 : index
    %371 = vector.load %arg6[%c11_280, %c0_281] : memref<40x8xf32, #tpu.memory_space<vmem>>, vector<18x8xf32>
    %372 = vector.broadcast %370 : vector<18x1xf32> to vector<18x8xf32>
    %373 = arith.mulf %372, %371 : vector<18x8xf32>
    %c8_282 = arith.constant 8 : index
    %c0_283 = arith.constant 0 : index
    %c0_284 = arith.constant 0 : index
    %374 = vector.load %arg0[%c8_282, %c0_283, %c0_284] : memref<9x18x1xf32, #tpu.memory_space<vmem>>, vector<1x18x1xf32>
    %375 = vector.shape_cast %374 : vector<1x18x1xf32> to vector<18x1xf32>
    %c12_285 = arith.constant 12 : index
    %c0_286 = arith.constant 0 : index
    %376 = vector.load %arg6[%c12_285, %c0_286] : memref<40x8xf32, #tpu.memory_space<vmem>>, vector<18x8xf32>
    %377 = vector.broadcast %375 : vector<18x1xf32> to vector<18x8xf32>
    %378 = arith.mulf %377, %376 : vector<18x8xf32>
    %379 = tpu.concatenate %338, %343, %348, %353, %358, %363, %368, %373, %378 in 1 : vector<18x8xf32>, vector<18x8xf32>, vector<18x8xf32>, vector<18x8xf32>, vector<18x8xf32>, vector<18x8xf32>, vector<18x8xf32>, vector<18x8xf32>, vector<18x8xf32> -> vector<18x72xf32>
    %c384 = arith.constant 384 : index
    %c0_287 = arith.constant 0 : index
    %380 = vector.load %arg2[%c384, %c0_287] : memref<640x9xf32, #tpu.memory_space<vmem>>, vector<72x8xf32>
    %cst_288 = arith.constant dense<0.000000e+00> : vector<18x8xf32>
    %381 = tpu.matmul %379, %380, %cst_288 {dimension_numbers = #tpu.dot_dimension_numbers<[1], [0], [0], [1], [0, 0, 1, 1], [], []>} : vector<18x72xf32>, vector<72x8xf32>, vector<18x8xf32> -> vector<18x8xf32>
    %cst_289 = arith.constant dense<0.000000e+00> : vector<8xf32>
    %382 = vector.multi_reduction <add>, %381, %cst_289 [0] : vector<18x8xf32> to vector<8xf32>
    %383 = vector.shape_cast %382 : vector<8xf32> to vector<1x8xf32>
    %384 = arith.mulf %381, %381 : vector<18x8xf32>
    %cst_290 = arith.constant dense<0.000000e+00> : vector<8xf32>
    %385 = vector.multi_reduction <add>, %384, %cst_290 [0] : vector<18x8xf32> to vector<8xf32>
    %386 = vector.shape_cast %385 : vector<8xf32> to vector<1x8xf32>
    %cst_291 = arith.constant 0.055555556 : f32
    %387 = vector.broadcast %cst_291 : f32 to vector<1x8xf32>
    %388 = arith.mulf %383, %387 : vector<1x8xf32>
    %cst_292 = arith.constant 0.055555556 : f32
    %389 = vector.broadcast %cst_292 : f32 to vector<1x8xf32>
    %390 = arith.mulf %386, %389 : vector<1x8xf32>
    %391 = arith.mulf %388, %388 : vector<1x8xf32>
    %392 = arith.subf %390, %391 : vector<1x8xf32>
    %cst_293 = arith.constant 0.000000e+00 : f32
    %393 = vector.broadcast %cst_293 : f32 to vector<1x8xf32>
    %394 = arith.maximumf %392, %393 : vector<1x8xf32>
    %395 = vector.broadcast %388 : vector<1x8xf32> to vector<18x8xf32>
    %396 = arith.subf %381, %395 : vector<18x8xf32>
    %cst_294 = arith.constant 9.99999974E-6 : f32
    %397 = vector.broadcast %cst_294 : f32 to vector<1x8xf32>
    %398 = arith.addf %394, %397 : vector<1x8xf32>
    %399 = math.rsqrt %398 : vector<1x8xf32>
    %400 = vector.broadcast %399 : vector<1x8xf32> to vector<18x8xf32>
    %401 = arith.mulf %396, %400 : vector<18x8xf32>
    %c456 = arith.constant 456 : index
    %c0_295 = arith.constant 0 : index
    %402 = vector.load %arg2[%c456, %c0_295] : memref<640x9xf32, #tpu.memory_space<vmem>>, vector<1x8xf32>
    %403 = vector.broadcast %402 : vector<1x8xf32> to vector<18x8xf32>
    %404 = arith.mulf %401, %403 : vector<18x8xf32>
    %c464 = arith.constant 464 : index
    %c0_296 = arith.constant 0 : index
    %405 = vector.load %arg2[%c464, %c0_296] : memref<640x9xf32, #tpu.memory_space<vmem>>, vector<1x8xf32>
    %406 = vector.broadcast %405 : vector<1x8xf32> to vector<18x8xf32>
    %407 = arith.addf %404, %406 : vector<18x8xf32>
    %cst_297 = arith.constant 0.000000e+00 : f32
    %408 = vector.broadcast %cst_297 : f32 to vector<18x8xf32>
    %409 = arith.maximumf %407, %408 : vector<18x8xf32>
    %c88 = arith.constant 88 : index
    %c0_298 = arith.constant 0 : index
    %410 = vector.load %arg5[%c88, %c0_298] : memref<120x8xf32, #tpu.memory_space<vmem>>, vector<18x8xf32>
    tpu.vector_store %arg5[%c88, %c0_298], %409 {strides = array<i32>} : memref<120x8xf32, #tpu.memory_space<vmem>>, vector<18x8xf32>,
    %c8_299 = arith.constant 8 : index
    %c0_300 = arith.constant 0 : index
    %411 = vector.load %arg5[%c8_299, %c0_300] : memref<120x8xf32, #tpu.memory_space<vmem>>, vector<18x8xf32>
    %c48_301 = arith.constant 48 : index
    %c0_302 = arith.constant 0 : index
    %412 = vector.load %arg5[%c48_301, %c0_302] : memref<120x8xf32, #tpu.memory_space<vmem>>, vector<18x8xf32>
    %c88_303 = arith.constant 88 : index
    %c0_304 = arith.constant 0 : index
    %413 = vector.load %arg5[%c88_303, %c0_304] : memref<120x8xf32, #tpu.memory_space<vmem>>, vector<18x8xf32>
    %414 = tpu.concatenate %411, %412, %413 in 1 : vector<18x8xf32>, vector<18x8xf32>, vector<18x8xf32> -> vector<18x24xf32>
    %c472 = arith.constant 472 : index
    %c0_305 = arith.constant 0 : index
    %415 = vector.load %arg2[%c472, %c0_305] : memref<640x9xf32, #tpu.memory_space<vmem>>, vector<24x2xf32>
    %cst_306 = arith.constant dense<0.000000e+00> : vector<18x2xf32>
    %416 = tpu.matmul %414, %415, %cst_306 {dimension_numbers = #tpu.dot_dimension_numbers<[1], [0], [0], [1], [0, 0, 1, 1], [], []>} : vector<18x24xf32>, vector<24x2xf32>, vector<18x2xf32> -> vector<18x2xf32>
    %c496 = arith.constant 496 : index
    %c0_307 = arith.constant 0 : index
    %417 = vector.load %arg2[%c496, %c0_307] : memref<640x9xf32, #tpu.memory_space<vmem>>, vector<1x2xf32>
    %418 = vector.broadcast %417 : vector<1x2xf32> to vector<18x2xf32>
    %419 = arith.addf %416, %418 : vector<18x2xf32>
    %cst_308 = arith.constant dense<0.000000e+00> : vector<2xf32>
    %420 = vector.multi_reduction <add>, %419, %cst_308 [0] : vector<18x2xf32> to vector<2xf32>
    %421 = vector.shape_cast %420 : vector<2xf32> to vector<1x2xf32>
    %422 = arith.mulf %419, %419 : vector<18x2xf32>
    %cst_309 = arith.constant dense<0.000000e+00> : vector<2xf32>
    %423 = vector.multi_reduction <add>, %422, %cst_309 [0] : vector<18x2xf32> to vector<2xf32>
    %424 = vector.shape_cast %423 : vector<2xf32> to vector<1x2xf32>
    %cst_310 = arith.constant 0.055555556 : f32
    %425 = vector.broadcast %cst_310 : f32 to vector<1x2xf32>
    %426 = arith.mulf %421, %425 : vector<1x2xf32>
    %cst_311 = arith.constant 0.055555556 : f32
    %427 = vector.broadcast %cst_311 : f32 to vector<1x2xf32>
    %428 = arith.mulf %424, %427 : vector<1x2xf32>
    %429 = arith.mulf %426, %426 : vector<1x2xf32>
    %430 = arith.subf %428, %429 : vector<1x2xf32>
    %cst_312 = arith.constant 0.000000e+00 : f32
    %431 = vector.broadcast %cst_312 : f32 to vector<1x2xf32>
    %432 = arith.maximumf %430, %431 : vector<1x2xf32>
    %433 = vector.broadcast %426 : vector<1x2xf32> to vector<18x2xf32>
    %434 = arith.subf %419, %433 : vector<18x2xf32>
    %cst_313 = arith.constant 9.99999974E-6 : f32
    %435 = vector.broadcast %cst_313 : f32 to vector<1x2xf32>
    %436 = arith.addf %432, %435 : vector<1x2xf32>
    %437 = math.rsqrt %436 : vector<1x2xf32>
    %438 = vector.broadcast %437 : vector<1x2xf32> to vector<18x2xf32>
    %439 = arith.mulf %434, %438 : vector<18x2xf32>
    %c504 = arith.constant 504 : index
    %c0_314 = arith.constant 0 : index
    %440 = vector.load %arg2[%c504, %c0_314] : memref<640x9xf32, #tpu.memory_space<vmem>>, vector<1x2xf32>
    %441 = vector.broadcast %440 : vector<1x2xf32> to vector<18x2xf32>
    %442 = arith.mulf %439, %441 : vector<18x2xf32>
    %c512 = arith.constant 512 : index
    %c0_315 = arith.constant 0 : index
    %443 = vector.load %arg2[%c512, %c0_315] : memref<640x9xf32, #tpu.memory_space<vmem>>, vector<1x2xf32>
    %444 = vector.broadcast %443 : vector<1x2xf32> to vector<18x2xf32>
    %445 = arith.addf %442, %444 : vector<18x2xf32>
    %cst_316 = arith.constant 0.000000e+00 : f32
    %446 = vector.broadcast %cst_316 : f32 to vector<18x2xf32>
    %447 = arith.maximumf %445, %446 : vector<18x2xf32>
    %c0_317 = arith.constant 0 : index
    %c0_318 = arith.constant 0 : index
    %448 = vector.load %arg7[%c0_317, %c0_318] : memref<18x2xf32, #tpu.memory_space<vmem>>, vector<18x2xf32>
    tpu.vector_store %arg7[%c0_317, %c0_318], %447 {strides = array<i32>} : memref<18x2xf32, #tpu.memory_space<vmem>>, vector<18x2xf32>,
    %c552 = arith.constant 552 : index
    %c0_319 = arith.constant 0 : index
    %449 = vector.load %arg2[%c552, %c0_319] : memref<640x9xf32, #tpu.memory_space<vmem>>, vector<24x1xf32>
    %cst_320 = arith.constant dense<0.000000e+00> : vector<18x1xf32>
    %450 = tpu.matmul %414, %449, %cst_320 {dimension_numbers = #tpu.dot_dimension_numbers<[1], [0], [0], [1], [0, 0, 1, 1], [], []>} : vector<18x24xf32>, vector<24x1xf32>, vector<18x1xf32> -> vector<18x1xf32>
    %c576 = arith.constant 576 : index
    %c0_321 = arith.constant 0 : index
    %451 = vector.load %arg2[%c576, %c0_321] : memref<640x9xf32, #tpu.memory_space<vmem>>, vector<1x1xf32>
    %452 = vector.broadcast %451 : vector<1x1xf32> to vector<18x1xf32>
    %453 = arith.addf %450, %452 : vector<18x1xf32>
    %cst_322 = arith.constant dense<0.000000e+00> : vector<1xf32>
    %454 = vector.multi_reduction <add>, %453, %cst_322 [0] : vector<18x1xf32> to vector<1xf32>
    %455 = vector.shape_cast %454 : vector<1xf32> to vector<1x1xf32>
    %456 = arith.mulf %453, %453 : vector<18x1xf32>
    %cst_323 = arith.constant dense<0.000000e+00> : vector<1xf32>
    %457 = vector.multi_reduction <add>, %456, %cst_323 [0] : vector<18x1xf32> to vector<1xf32>
    %458 = vector.shape_cast %457 : vector<1xf32> to vector<1x1xf32>
    %cst_324 = arith.constant 0.055555556 : f32
    %459 = vector.broadcast %cst_324 : f32 to vector<1x1xf32>
    %460 = arith.mulf %455, %459 : vector<1x1xf32>
    %cst_325 = arith.constant 0.055555556 : f32
    %461 = vector.broadcast %cst_325 : f32 to vector<1x1xf32>
    %462 = arith.mulf %458, %461 : vector<1x1xf32>
    %463 = arith.mulf %460, %460 : vector<1x1xf32>
    %464 = arith.subf %462, %463 : vector<1x1xf32>
    %cst_326 = arith.constant 0.000000e+00 : f32
    %465 = vector.broadcast %cst_326 : f32 to vector<1x1xf32>
    %466 = arith.maximumf %464, %465 : vector<1x1xf32>
    %467 = vector.broadcast %460 : vector<1x1xf32> to vector<18x1xf32>
    %468 = arith.subf %453, %467 : vector<18x1xf32>
    %cst_327 = arith.constant 9.99999974E-6 : f32
    %469 = vector.broadcast %cst_327 : f32 to vector<1x1xf32>
    %470 = arith.addf %466, %469 : vector<1x1xf32>
    %471 = math.rsqrt %470 : vector<1x1xf32>
    %472 = vector.broadcast %471 : vector<1x1xf32> to vector<18x1xf32>
    %473 = arith.mulf %468, %472 : vector<18x1xf32>
    %c584 = arith.constant 584 : index
    %c0_328 = arith.constant 0 : index
    %474 = vector.load %arg2[%c584, %c0_328] : memref<640x9xf32, #tpu.memory_space<vmem>>, vector<1x1xf32>
    %475 = vector.broadcast %474 : vector<1x1xf32> to vector<18x1xf32>
    %476 = arith.mulf %473, %475 : vector<18x1xf32>
    %c592 = arith.constant 592 : index
    %c0_329 = arith.constant 0 : index
    %477 = vector.load %arg2[%c592, %c0_329] : memref<640x9xf32, #tpu.memory_space<vmem>>, vector<1x1xf32>
    %478 = vector.broadcast %477 : vector<1x1xf32> to vector<18x1xf32>
    %479 = arith.addf %476, %478 : vector<18x1xf32>
    %cst_330 = arith.constant 0.000000e+00 : f32
    %480 = vector.broadcast %cst_330 : f32 to vector<18x1xf32>
    %481 = arith.maximumf %479, %480 : vector<18x1xf32>
    %c0_331 = arith.constant 0 : index
    %c0_332 = arith.constant 0 : index
    %482 = vector.load %arg8[%c0_331, %c0_332] : memref<18x1xf32, #tpu.memory_space<vmem>>, vector<18x1xf32>
    tpu.vector_store %arg8[%c0_331, %c0_332], %481 {strides = array<i32>} : memref<18x1xf32, #tpu.memory_space<vmem>>, vector<18x1xf32>,
    %c520 = arith.constant 520 : index
    %c0_333 = arith.constant 0 : index
    %483 = vector.load %arg2[%c520, %c0_333] : memref<640x9xf32, #tpu.memory_space<vmem>>, vector<9x9xf32>
    %c529 = arith.constant 529 : index
    %c0_334 = arith.constant 0 : index
    %484 = vector.load %arg2[%c529, %c0_334] : memref<640x9xf32, #tpu.memory_space<vmem>>, vector<9x9xf32>
    %c600 = arith.constant 600 : index
    %c0_335 = arith.constant 0 : index
    %485 = vector.load %arg2[%c600, %c0_335] : memref<640x9xf32, #tpu.memory_space<vmem>>, vector<9x8xf32>
    %c544 = arith.constant 544 : index
    %c0_336 = arith.constant 0 : index
    %486 = vector.load %arg2[%c544, %c0_336] : memref<640x9xf32, #tpu.memory_space<vmem>>, vector<1x9xf32>
    %c616 = arith.constant 616 : index
    %c0_337 = arith.constant 0 : index
    %487 = vector.load %arg2[%c616, %c0_337] : memref<640x9xf32, #tpu.memory_space<vmem>>, vector<1x8xf32>
    %c0_338 = arith.constant 0 : index
    %c0_339 = arith.constant 0 : index
    %488 = vector.load %arg7[%c0_338, %c0_339] : memref<18x2xf32, #tpu.memory_space<vmem>>, vector<9x2xf32>
    %c0_340 = arith.constant 0 : index
    %c0_341 = arith.constant 0 : index
    %489 = vector.load %arg8[%c0_340, %c0_341] : memref<18x1xf32, #tpu.memory_space<vmem>>, vector<9x1xf32>
    %490 = vector.extract_strided_slice %488 {offsets = [0, 0], sizes = [9, 1], strides = [1, 1]} : vector<9x2xf32> to vector<9x1xf32>
    %491 = vector.broadcast %490 : vector<9x1xf32> to vector<9x9xf32>
    %492 = arith.mulf %491, %483 : vector<9x9xf32>
    %493 = vector.extract_strided_slice %488 {offsets = [0, 1], sizes = [9, 1], strides = [1, 1]} : vector<9x2xf32> to vector<9x1xf32>
    %494 = vector.broadcast %493 : vector<9x1xf32> to vector<9x9xf32>
    %495 = arith.mulf %494, %484 : vector<9x9xf32>
    %496 = arith.addf %492, %495 : vector<9x9xf32>
    %cst_342 = arith.constant dense<0.000000e+00> : vector<9xf32>
    %497 = vector.multi_reduction <add>, %496, %cst_342 [0] : vector<9x9xf32> to vector<9xf32>
    %498 = vector.shape_cast %497 : vector<9xf32> to vector<1x9xf32>
    %499 = arith.addf %498, %486 : vector<1x9xf32>
    %500 = vector.broadcast %489 : vector<9x1xf32> to vector<9x8xf32>
    %501 = arith.mulf %500, %485 : vector<9x8xf32>
    %cst_343 = arith.constant dense<0.000000e+00> : vector<8xf32>
    %502 = vector.multi_reduction <add>, %501, %cst_343 [0] : vector<9x8xf32> to vector<8xf32>
    %503 = vector.shape_cast %502 : vector<8xf32> to vector<1x8xf32>
    %504 = arith.addf %503, %487 : vector<1x8xf32>
    %c9_344 = arith.constant 9 : index
    %c0_345 = arith.constant 0 : index
    %505 = vector.load %arg7[%c9_344, %c0_345] : memref<18x2xf32, #tpu.memory_space<vmem>>, vector<9x2xf32>
    %c9_346 = arith.constant 9 : index
    %c0_347 = arith.constant 0 : index
    %506 = vector.load %arg8[%c9_346, %c0_347] : memref<18x1xf32, #tpu.memory_space<vmem>>, vector<9x1xf32>
    %507 = vector.extract_strided_slice %505 {offsets = [0, 0], sizes = [9, 1], strides = [1, 1]} : vector<9x2xf32> to vector<9x1xf32>
    %508 = vector.broadcast %507 : vector<9x1xf32> to vector<9x9xf32>
    %509 = arith.mulf %508, %483 : vector<9x9xf32>
    %510 = vector.extract_strided_slice %505 {offsets = [0, 1], sizes = [9, 1], strides = [1, 1]} : vector<9x2xf32> to vector<9x1xf32>
    %511 = vector.broadcast %510 : vector<9x1xf32> to vector<9x9xf32>
    %512 = arith.mulf %511, %484 : vector<9x9xf32>
    %513 = arith.addf %509, %512 : vector<9x9xf32>
    %cst_348 = arith.constant dense<0.000000e+00> : vector<9xf32>
    %514 = vector.multi_reduction <add>, %513, %cst_348 [0] : vector<9x9xf32> to vector<9xf32>
    %515 = vector.shape_cast %514 : vector<9xf32> to vector<1x9xf32>
    %516 = arith.addf %515, %486 : vector<1x9xf32>
    %517 = vector.broadcast %506 : vector<9x1xf32> to vector<9x8xf32>
    %518 = arith.mulf %517, %485 : vector<9x8xf32>
    %cst_349 = arith.constant dense<0.000000e+00> : vector<8xf32>
    %519 = vector.multi_reduction <add>, %518, %cst_349 [0] : vector<9x8xf32> to vector<8xf32>
    %520 = vector.shape_cast %519 : vector<8xf32> to vector<1x8xf32>
    %521 = arith.addf %520, %487 : vector<1x8xf32>
    %522 = tpu.concatenate %499, %516 in 0 : vector<1x9xf32>, vector<1x9xf32> -> vector<2x9xf32>
    %523 = tpu.concatenate %504, %521 in 0 : vector<1x8xf32>, vector<1x8xf32> -> vector<2x8xf32>
    %cst_350 = arith.constant 0.000000e+00 : f32
    %524 = vector.broadcast %cst_350 : f32 to vector<2x8xf32>
    %525 = arith.maximumf %523, %524 : vector<2x8xf32>
    %c624 = arith.constant 624 : index
    %c0_351 = arith.constant 0 : index
    %526 = vector.load %arg2[%c624, %c0_351] : memref<640x9xf32, #tpu.memory_space<vmem>>, vector<8x1xf32>
    %cst_352 = arith.constant dense<0.000000e+00> : vector<2x1xf32>
    %527 = tpu.matmul %525, %526, %cst_352 {dimension_numbers = #tpu.dot_dimension_numbers<[1], [0], [0], [1], [0, 0, 1, 1], [], []>} : vector<2x8xf32>, vector<8x1xf32>, vector<2x1xf32> -> vector<2x1xf32>
    %c632 = arith.constant 632 : index
    %c0_353 = arith.constant 0 : index
    %528 = vector.load %arg2[%c632, %c0_353] : memref<640x9xf32, #tpu.memory_space<vmem>>, vector<1x1xf32>
    %529 = vector.broadcast %528 : vector<1x1xf32> to vector<2x1xf32>
    %530 = arith.addf %527, %529 : vector<2x1xf32>
    %531 = math.tanh %530 : vector<2x1xf32>
    %cst_354 = arith.constant 0.000000e+00 : f32
    %532 = vector.broadcast %cst_354 : f32 to vector<2x118xf32>
    %533 = tpu.concatenate %522, %531, %532 in 1 : vector<2x9xf32>, vector<2x1xf32>, vector<2x118xf32> -> vector<2x128xf32>
    %c0_355 = arith.constant 0 : index
    %c0_356 = arith.constant 0 : index
    %534 = vector.load %arg3[%c0_355, %c0_356] : memref<2x128xf32, #tpu.memory_space<vmem>>, vector<2x128xf32>
    tpu.vector_store %arg3[%c0_355, %c0_356], %533 {strides = array<i32>} : memref<2x128xf32, #tpu.memory_space<vmem>>, vector<2x128xf32>,
    return
  }
}

</mosaic_0001>

<llo_original>
// kernel: net_forward.1
$region0: #{net_forward.1}
  #allocation0 [shape = 'u32[]', space=smem, size = 0x4, offset = 0x4, fixed_abs, tag = 'smem constant byte address 0x4 - core index']
  #allocation1 [shape = 'u32[144,128]{1,0:T(1,128)}', space=vmem, size = 0x12000, scoped, tag = 'internal scratch']
  #allocation2 [shape = 'f32[40,3]{1,0:T(8,128)}', space=vmem, size = 0x5000, scoped, tag = 'scratch operand']
  #allocation3 [shape = 'f32[120,8]{1,0:T(8,128)}', space=vmem, size = 0xf000, scoped, tag = 'scratch operand']
  #allocation4 [shape = 'f32[40,8]{1,0:T(8,128)}', space=vmem, size = 0x5000, scoped, tag = 'scratch operand']
  #allocation5 [shape = 'f32[18,2]{1,0:T(8,128)}', space=vmem, size = 0x3000, scoped, tag = 'scratch operand']
  #allocation6 [shape = 'f32[18,1]{1,0:T(8,128)}', space=vmem, size = 0x3000, scoped, tag = 'scratch operand']
  %s0 = inlined_call_operand.vmem [shape: f32[9,18,1], index: 0, kind: input, shape index: {}]
  %s1 = inlined_call_operand.vmem [shape: f32[18,3], index: 1, kind: input, shape index: {}]
  %s2 = inlined_call_operand.vmem [shape: f32[640,9], index: 2, kind: input, shape index: {}]
  %s3 = inlined_call_operand.hbm [shape: f32[2,128], index: 3, kind: output, shape index: {}]
  %s4 = sld [smem:[#allocation0]]
  $region22: #{net_forward.1} parent=0
    _
  %s6 = ssub.s32 1, %s4
  %s7 = scalar_select 0, %s6, %s4
  $region1: #{net_forward.1} parent=0
    #allocation7 [shape = 'u8[1024]{0}', space=vmem, size = 0x400, scoped, tag = 'output window, operand 0, single buffered']
    #allocation8 [shape = 's32[1]{0}', space=sflag, size = 0x4, scoped, tag = 'scoped memory for net_forward.1']
    %8 = vsyncpa [#allocation8], 0
    // Predicated region
    $region2: #{net_forward.1} parent=1 // pred_check
      _
    $region3: #{net_forward.1} parent=1 // pred_check_branch
      %10 = sbr.rel (0) target = $region5
    $region4: #{net_forward.1} parent=1 // pred_region
      _
    $region5: #{net_forward.1} parent=1 // pred_fallthru
      _
    // Predicated region
    $region6: #{net_forward.1} parent=1 // pred_check
      _
    $region7: #{net_forward.1} parent=1 // pred_check_branch
      %12 = sbr.rel (0) target = $region9
    $region8: #{net_forward.1} parent=1 // pred_region
      _
    $region9: #{net_forward.1} parent=1 // pred_fallthru
      _
    // Predicated region
    $region10: #{net_forward.1} parent=1 // pred_check
      _
    $region11: #{net_forward.1} parent=1 // pred_check_branch
      %14 = sbr.rel (0) target = $region13
    $region12: #{net_forward.1} parent=1 // pred_region
      _
    $region13: #{net_forward.1} parent=1 // pred_fallthru
      _
    %vm15 = vcmask 23552
    %16 = vst.msk [vmem:[#allocation2] sm:$0xff] %vm15, 0.0
    %17 = vst.msk [vmem:[#allocation2 + $0x8] sm:$0xff] %vm15, 0.0
    %18 = vst.msk [vmem:[#allocation2 + $0x10] sm:$0xff] %vm15, 0.0
    %19 = vst.msk [vmem:[#allocation2 + $0x18] sm:$0xff] %vm15, 0.0
    %20 = vst.msk [vmem:[#allocation2 + $0x20] sm:$0xff] %vm15, 0.0
    %vm21 = vcmask 64512
    %22 = vst.msk [vmem:[#allocation3] sm:$0xff] %vm21, 0.0
    %23 = vst.msk [vmem:[#allocation3 + $0x8] sm:$0xff] %vm21, 0.0
    %24 = vst.msk [vmem:[#allocation3 + $0x10] sm:$0xff] %vm21, 0.0
    %25 = vst.msk [vmem:[#allocation3 + $0x18] sm:$0xff] %vm21, 0.0
    %26 = vst.msk [vmem:[#allocation3 + $0x20] sm:$0xff] %vm21, 0.0
    %27 = vst.msk [vmem:[#allocation3 + $0x28] sm:$0xff] %vm21, 0.0
    %28 = vst.msk [vmem:[#allocation3 + $0x30] sm:$0xff] %vm21, 0.0
    %29 = vst.msk [vmem:[#allocation3 + $0x38] sm:$0xff] %vm21, 0.0
    %30 = vst.msk [vmem:[#allocation3 + $0x40] sm:$0xff] %vm21, 0.0
    %31 = vst.msk [vmem:[#allocation3 + $0x48] sm:$0xff] %vm21, 0.0
    %32 = vst.msk [vmem:[#allocation3 + $0x50] sm:$0xff] %vm21, 0.0
    %33 = vst.msk [vmem:[#allocation3 + $0x58] sm:$0xff] %vm21, 0.0
    %34 = vst.msk [vmem:[#allocation3 + $0x60] sm:$0xff] %vm21, 0.0
    %35 = vst.msk [vmem:[#allocation3 + $0x68] sm:$0xff] %vm21, 0.0
    %36 = vst.msk [vmem:[#allocation3 + $0x70] sm:$0xff] %vm21, 0.0
    %37 = vst.msk [vmem:[#allocation4] sm:$0xff] %vm21, 0.0
    %38 = vst.msk [vmem:[#allocation4 + $0x8] sm:$0xff] %vm21, 0.0
    %39 = vst.msk [vmem:[#allocation4 + $0x10] sm:$0xff] %vm21, 0.0
    %40 = vst.msk [vmem:[#allocation4 + $0x18] sm:$0xff] %vm21, 0.0
    %41 = vst.msk [vmem:[#allocation4 + $0x20] sm:$0xff] %vm21, 0.0
    %v42 = vld [vmem:[%s1] sm:$0xff]
    %v43 = vld [vmem:[%s1 + $0x8] sm:$0xff]
    %v44 = vld [vmem:[%s1 + $0x10] sm:$0x3]
    %45 = vst.msk [vmem:[#allocation2 + $0x8] sm:$0xff] %vm15, %v42
    %46 = vst.msk [vmem:[#allocation2 + $0x10] sm:$0xff] %vm15, %v43
    %vm47 = vcmask 17408
    %48 = vst.msk [vmem:[#allocation2 + $0x18] sm:$0x3] %vm47, %v44
    %v49 = vld [vmem:[%s0] sm:$0xff]
    %v50 = vld [vmem:[%s0 + $0x8] sm:$0xff]
    %v51 = vld [vmem:[%s0 + $0x10] sm:$0x3]
    %v52 = vld [vmem:[#allocation2 + $0x4] sm:$0xff]
    %v53 = vld [vmem:[#allocation2 + $0xc] sm:$0xff]
    %v54 = vld [vmem:[#allocation2 + $0x14] sm:$0x3]
    %56 = vset.pattern.permute.xlu0 0
    %57 = vperm.xlu0 %56, %v49
    %v58 = vpop.permute.xlu0 %57
    %61 = vset.pattern.permute.xlu0 0
    %62 = vperm.xlu0 %61, %v50
    %v63 = vpop.permute.xlu0 %62
    %66 = vset.pattern.permute.xlu0 0
    %67 = vperm.xlu0 %66, %v51
    %v68 = vpop.permute.xlu0 %67
    %v70 = vmul.f32 %v58, %v52
    %v71 = vmul.f32 %v63, %v53
    %v72 = vmul.f32 %v68, %v54
    %s73 = scalar_lea.vmem %s0, 24
    %v74 = vld [vmem:[%s73] sm:$0xff]
    %v75 = vld [vmem:[%s73 + $0x8] sm:$0xff]
    %v76 = vld [vmem:[%s73 + $0x10] sm:$0x3]
    %v77 = vld [vmem:[#allocation2 + $0x5] sm:$0xff]
    %v78 = vld [vmem:[#allocation2 + $0xd] sm:$0xff]
    %v79 = vld [vmem:[#allocation2 + $0x15] sm:$0x3]
    %81 = vset.pattern.permute.xlu0 0
    %82 = vperm.xlu0 %81, %v74
    %v83 = vpop.permute.xlu0 %82
    %86 = vset.pattern.permute.xlu0 0
    %87 = vperm.xlu0 %86, %v75
    %v88 = vpop.permute.xlu0 %87
    %91 = vset.pattern.permute.xlu0 0
    %92 = vperm.xlu0 %91, %v76
    %v93 = vpop.permute.xlu0 %92
    %v95 = vmul.f32 %v83, %v77
    %v96 = vmul.f32 %v88, %v78
    %v97 = vmul.f32 %v93, %v79
    %s98 = scalar_lea.vmem %s0, 48
    %v99 = vld [vmem:[%s98] sm:$0xff]
    %v100 = vld [vmem:[%s98 + $0x8] sm:$0xff]
    %v101 = vld [vmem:[%s98 + $0x10] sm:$0x3]
    %v102 = vld [vmem:[#allocation2 + $0x6] sm:$0xff]
    %v103 = vld [vmem:[#allocation2 + $0xe] sm:$0xff]
    %v104 = vld [vmem:[#allocation2 + $0x16] sm:$0x3]
    %106 = vset.pattern.permute.xlu0 0
    %107 = vperm.xlu0 %106, %v99
    %v108 = vpop.permute.xlu0 %107
    %111 = vset.pattern.permute.xlu0 0
    %112 = vperm.xlu0 %111, %v100
    %v113 = vpop.permute.xlu0 %112
    %116 = vset.pattern.permute.xlu0 0
    %117 = vperm.xlu0 %116, %v101
    %v118 = vpop.permute.xlu0 %117
    %v120 = vmul.f32 %v108, %v102
    %v121 = vmul.f32 %v113, %v103
    %v122 = vmul.f32 %v118, %v104
    %s123 = scalar_lea.vmem %s0, 72
    %v124 = vld [vmem:[%s123] sm:$0xff]
    %v125 = vld [vmem:[%s123 + $0x8] sm:$0xff]
    %v126 = vld [vmem:[%s123 + $0x10] sm:$0x3]
    %v127 = vld [vmem:[#allocation2 + $0x7] sm:$0xff]
    %v128 = vld [vmem:[#allocation2 + $0xf] sm:$0xff]
    %v129 = vld [vmem:[#allocation2 + $0x17] sm:$0x3]
    %131 = vset.pattern.permute.xlu0 0
    %132 = vperm.xlu0 %131, %v124
    %v133 = vpop.permute.xlu0 %132
    %136 = vset.pattern.permute.xlu0 0
    %137 = vperm.xlu0 %136, %v125
    %v138 = vpop.permute.xlu0 %137
    %141 = vset.pattern.permute.xlu0 0
    %142 = vperm.xlu0 %141, %v126
    %v143 = vpop.permute.xlu0 %142
    %v145 = vmul.f32 %v133, %v127
    %v146 = vmul.f32 %v138, %v128
    %v147 = vmul.f32 %v143, %v129
    %s148 = scalar_lea.vmem %s0, 96
    %v149 = vld [vmem:[%s148] sm:$0xff]
    %v150 = vld [vmem:[%s148 + $0x8] sm:$0xff]
    %v151 = vld [vmem:[%s148 + $0x10] sm:$0x3]
    %v152 = vld [vmem:[#allocation2 + $0x8] sm:$0xff]
    %v153 = vld [vmem:[#allocation2 + $0x10] sm:$0xff]
    %v154 = vld [vmem:[#allocation2 + $0x18] sm:$0x3]
    %156 = vset.pattern.permute.xlu0 0
    %157 = vperm.xlu0 %156, %v149
    %v158 = vpop.permute.xlu0 %157
    %161 = vset.pattern.permute.xlu0 0
    %162 = vperm.xlu0 %161, %v150
    %v163 = vpop.permute.xlu0 %162
    %166 = vset.pattern.permute.xlu0 0
    %167 = vperm.xlu0 %166, %v151
    %v168 = vpop.permute.xlu0 %167
    %v170 = vmul.f32 %v158, %v152
    %v171 = vmul.f32 %v163, %v153
    %v172 = vmul.f32 %v168, %v154
    %s173 = scalar_lea.vmem %s0, 120
    %v174 = vld [vmem:[%s173] sm:$0xff]
    %v175 = vld [vmem:[%s173 + $0x8] sm:$0xff]
    %v176 = vld [vmem:[%s173 + $0x10] sm:$0x3]
    %v177 = vld [vmem:[#allocation2 + $0x9] sm:$0xff]
    %v178 = vld [vmem:[#allocation2 + $0x11] sm:$0xff]
    %v179 = vld [vmem:[#allocation2 + $0x19] sm:$0x3]
    %181 = vset.pattern.permute.xlu0 0
    %182 = vperm.xlu0 %181, %v174
    %v183 = vpop.permute.xlu0 %182
    %186 = vset.pattern.permute.xlu0 0
    %187 = vperm.xlu0 %186, %v175
    %v188 = vpop.permute.xlu0 %187
    %191 = vset.pattern.permute.xlu0 0
    %192 = vperm.xlu0 %191, %v176
    %v193 = vpop.permute.xlu0 %192
    %v195 = vmul.f32 %v183, %v177
    %v196 = vmul.f32 %v188, %v178
    %v197 = vmul.f32 %v193, %v179
    %s198 = scalar_lea.vmem %s0, 144
    %v199 = vld [vmem:[%s198] sm:$0xff]
    %v200 = vld [vmem:[%s198 + $0x8] sm:$0xff]
    %v201 = vld [vmem:[%s198 + $0x10] sm:$0x3]
    %v202 = vld [vmem:[#allocation2 + $0xa] sm:$0xff]
    %v203 = vld [vmem:[#allocation2 + $0x12] sm:$0xff]
    %v204 = vld [vmem:[#allocation2 + $0x1a] sm:$0x3]
    %206 = vset.pattern.permute.xlu0 0
    %207 = vperm.xlu0 %206, %v199
    %v208 = vpop.permute.xlu0 %207
    %211 = vset.pattern.permute.xlu0 0
    %212 = vperm.xlu0 %211, %v200
    %v213 = vpop.permute.xlu0 %212
    %216 = vset.pattern.permute.xlu0 0
    %217 = vperm.xlu0 %216, %v201
    %v218 = vpop.permute.xlu0 %217
    %v220 = vmul.f32 %v208, %v202
    %v221 = vmul.f32 %v213, %v203
    %v222 = vmul.f32 %v218, %v204
    %s223 = scalar_lea.vmem %s0, 168
    %v224 = vld [vmem:[%s223] sm:$0xff]
    %v225 = vld [vmem:[%s223 + $0x8] sm:$0xff]
    %v226 = vld [vmem:[%s223 + $0x10] sm:$0x3]
    %v227 = vld [vmem:[#allocation2 + $0xb] sm:$0xff]
    %v228 = vld [vmem:[#allocation2 + $0x13] sm:$0xff]
    %v229 = vld [vmem:[#allocation2 + $0x1b] sm:$0x3]
    %231 = vset.pattern.permute.xlu0 0
    %232 = vperm.xlu0 %231, %v224
    %v233 = vpop.permute.xlu0 %232
    %236 = vset.pattern.permute.xlu0 0
    %237 = vperm.xlu0 %236, %v225
    %v238 = vpop.permute.xlu0 %237
    %241 = vset.pattern.permute.xlu0 0
    %242 = vperm.xlu0 %241, %v226
    %v243 = vpop.permute.xlu0 %242
    %v245 = vmul.f32 %v233, %v227
    %v246 = vmul.f32 %v238, %v228
    %v247 = vmul.f32 %v243, %v229
    %s248 = scalar_lea.vmem %s0, 192
    %v249 = vld [vmem:[%s248] sm:$0xff]
    %v250 = vld [vmem:[%s248 + $0x8] sm:$0xff]
    %v251 = vld [vmem:[%s248 + $0x10] sm:$0x3]
    %v252 = vld [vmem:[#allocation2 + $0xc] sm:$0xff]
    %v253 = vld [vmem:[#allocation2 + $0x14] sm:$0xff]
    %v254 = vld [vmem:[#allocation2 + $0x1c] sm:$0x3]
    %256 = vset.pattern.permute.xlu0 0
    %257 = vperm.xlu0 %256, %v249
    %v258 = vpop.permute.xlu0 %257
    %261 = vset.pattern.permute.xlu0 0
    %262 = vperm.xlu0 %261, %v250
    %v263 = vpop.permute.xlu0 %262
    %266 = vset.pattern.permute.xlu0 0
    %267 = vperm.xlu0 %266, %v251
    %v268 = vpop.permute.xlu0 %267
    %v270 = vmul.f32 %v258, %v252
    %v271 = vmul.f32 %v263, %v253
    %v272 = vmul.f32 %v268, %v254
    %276 = vrot.lane.b32.xlu0 %v95, 3
    %v277 = vpop.permute.xlu0 %276
    %278 = vrot.lane.b32.xlu0 %v96, 3
    %v279 = vpop.permute.xlu0 %278
    %280 = vrot.lane.b32.xlu0 %v97, 3
    %v281 = vpop.permute.xlu0 %280
    %288 = vrot.lane.b32.xlu0 %v120, 6
    %v289 = vpop.permute.xlu0 %288
    %290 = vrot.lane.b32.xlu0 %v121, 6
    %v291 = vpop.permute.xlu0 %290
    %292 = vrot.lane.b32.xlu0 %v122, 6
    %v293 = vpop.permute.xlu0 %292
    %300 = vrot.lane.b32.xlu0 %v145, 9
    %v301 = vpop.permute.xlu0 %300
    %302 = vrot.lane.b32.xlu0 %v146, 9
    %v303 = vpop.permute.xlu0 %302
    %304 = vrot.lane.b32.xlu0 %v147, 9
    %v305 = vpop.permute.xlu0 %304
    %312 = vrot.lane.b32.xlu0 %v170, 12
    %v313 = vpop.permute.xlu0 %312
    %314 = vrot.lane.b32.xlu0 %v171, 12
    %v315 = vpop.permute.xlu0 %314
    %316 = vrot.lane.b32.xlu0 %v172, 12
    %v317 = vpop.permute.xlu0 %316
    %324 = vrot.lane.b32.xlu0 %v195, 15
    %v325 = vpop.permute.xlu0 %324
    %326 = vrot.lane.b32.xlu0 %v196, 15
    %v327 = vpop.permute.xlu0 %326
    %328 = vrot.lane.b32.xlu0 %v197, 15
    %v329 = vpop.permute.xlu0 %328
    %336 = vrot.lane.b32.xlu0 %v220, 18
    %v337 = vpop.permute.xlu0 %336
    %338 = vrot.lane.b32.xlu0 %v221, 18
    %v339 = vpop.permute.xlu0 %338
    %340 = vrot.lane.b32.xlu0 %v222, 18
    %v341 = vpop.permute.xlu0 %340
    %348 = vrot.lane.b32.xlu0 %v245, 21
    %v349 = vpop.permute.xlu0 %348
    %350 = vrot.lane.b32.xlu0 %v246, 21
    %v351 = vpop.permute.xlu0 %350
    %352 = vrot.lane.b32.xlu0 %v247, 21
    %v353 = vpop.permute.xlu0 %352
    %360 = vrot.lane.b32.xlu0 %v270, 24
    %v361 = vpop.permute.xlu0 %360
    %362 = vrot.lane.b32.xlu0 %v271, 24
    %v363 = vpop.permute.xlu0 %362
    %364 = vrot.lane.b32.xlu0 %v272, 24
    %v365 = vpop.permute.xlu0 %364
    %v369 = vsel %vm15, %v70, %v277
    %v370 = vsel %vm15, %v71, %v279
    %v371 = vsel %vm15, %v72, %v281
    %vm372 = vcmask 48128
    %v373 = vsel %vm372, %v369, %v289
    %v374 = vsel %vm372, %v370, %v291
    %v375 = vsel %vm372, %v371, %v293
    %vm376 = vcmask 72704
    %v377 = vsel %vm376, %v373, %v301
    %v378 = vsel %vm376, %v374, %v303
    %v379 = vsel %vm376, %v375, %v305
    %vm380 = vcmask 97280
    %v381 = vsel %vm380, %v377, %v313
    %v382 = vsel %vm380, %v378, %v315
    %v383 = vsel %vm380, %v379, %v317
    %vm384 = vcmask 121856
    %v385 = vsel %vm384, %v381, %v325
    %v386 = vsel %vm384, %v382, %v327
    %v387 = vsel %vm384, %v383, %v329
    %vm388 = vcmask 146432
    %v389 = vsel %vm388, %v385, %v337
    %v390 = vsel %vm388, %v386, %v339
    %v391 = vsel %vm388, %v387, %v341
    %vm392 = vcmask 171008
    %v393 = vsel %vm392, %v389, %v349
    %v394 = vsel %vm392, %v390, %v351
    %v395 = vsel %vm392, %v391, %v353
    %vm396 = vcmask 195584
    %v397 = vsel %vm396, %v393, %v361
    %v398 = vsel %vm396, %v394, %v363
    %v399 = vsel %vm396, %v395, %v365
    %v400 = vld [vmem:[%s2] sm:$0xff]
    %v401 = vld [vmem:[%s2 + $0x8] sm:$0xff]
    %v402 = vld [vmem:[%s2 + $0x10] sm:$0xff]
    %v403 = vld [vmem:[%s2 + $0x18] sm:$0x7]
    %vm404 = vcmask 220160
    %v406 = vsel %vm404, %v397, 0
    %v409 = vsel %vm404, %v398, 0
    %v412 = vsel %vm404, %v399, 0
    %vm414 = vcmask 1042432
    %v416 = vsel %vm414, %v403, 0
    %418 = vmatprep.subr.mxu0 0.0
    %419 = vmatpush1.msra.mxu0 %v400
    %420 = vmatprep.subr.mxu0 0.0
    %421 = vmatpush1.msra.mxu0 %v401
    %422 = vmatprep.subr.mxu0 0.0
    %423 = vmatpush1.msra.mxu0 %v402
    %424 = vmatprep.subr.mxu0 0.0
    %425 = vmatpush1.msra.mxu0 %v416
    %426 = vmatprep.subr.mxu0 0.0
    %427 = vmatpush1.msra.mxu0 0.0
    %428 = vmatprep.subr.mxu0 0.0
    %429 = vmatpush1.msra.mxu0 0.0
    %430 = vmatprep.subr.mxu0 0.0
    %431 = vmatpush1.msra.mxu0 0.0
    %432 = vmatprep.subr.mxu0 0.0
    %433 = vmatpush1.msra.mxu0 0.0
    %434 = vmatprep.subr.mxu0 0.0
    %435 = vmatpush1.msra.mxu0 0.0
    %436 = vmatprep.subr.mxu0 0.0
    %437 = vmatpush1.msra.mxu0 0.0
    %438 = vmatprep.subr.mxu0 0.0
    %439 = vmatpush1.msra.mxu0 0.0
    %440 = vmatprep.subr.mxu0 0.0
    %441 = vmatpush1.msra.mxu0 0.0
    %442 = vmatprep.subr.mxu0 0.0
    %443 = vmatpush1.msra.mxu0 0.0
    %444 = vmatprep.subr.mxu0 0.0
    %445 = vmatpush1.msra.mxu0 0.0
    %446 = vmatprep.subr.mxu0 0.0
    %447 = vmatpush1.msra.mxu0 0.0
    %448 = vmatprep.subr.mxu0 0.0
    %449 = vmatpush1.msra.mxu0 0.0
    %450 = vmatprep.subr.mxu0 0.0
    %451 = vmatpush1.msra.mxu0 0.0
    %452 = vmatprep.subr.mxu0 0.0
    %453 = vmatpush1.msra.mxu0 0.0
    %454 = vmatprep.subr.mxu0 0.0
    %455 = vmatpush1.msra.mxu0 0.0
    %456 = vmatprep.subr.mxu0 0.0
    %457 = vmatpush1.msra.mxu0 0.0
    %458 = vmatprep.subr.mxu0 0.0
    %459 = vmatpush1.msra.mxu0 0.0
    %460 = vmatprep.subr.mxu0 0.0
    %461 = vmatpush1.msra.mxu0 0.0
    %462 = vmatprep.subr.mxu0 0.0
    %463 = vmatpush1.msra.mxu0 0.0
    %464 = vmatprep.subr.mxu0 0.0
    %465 = vmatpush1.msra.mxu0 0.0
    %466 = vmatprep.subr.mxu0 0.0
    %467 = vmatpush1.msra.mxu0 0.0
    %468 = vmatprep.subr.mxu0 0.0
    %469 = vmatpush1.msra.mxu0 0.0
    %470 = vmatprep.subr.mxu0 0.0
    %471 = vmatpush1.msra.mxu0 0.0
    %472 = vmatprep.subr.mxu0 0.0
    %473 = vmatpush1.msra.mxu0 0.0
    %474 = vmatprep.subr.mxu0 0.0
    %475 = vmatpush1.msra.mxu0 0.0
    %476 = vmatprep.subr.mxu0 0.0
    %477 = vmatpush1.msra.mxu0 0.0
    %478 = vmatprep.subr.mxu0 0.0
    %479 = vmatpush1.msra.mxu0 0.0
    %480 = vmatprep.subr.mxu0 0.0
    %481 = vmatpush1.msra.mxu0 0.0
    %482 = vmatprep.mubr.f32.mxu0 0.0
    %483 = vmatmul.mubr.f32.gmra.mrb[0].mxu0 %v406
    %v484 = vpop.f32.mrb[0].mxu0
    %v485 = vadd.f32 0.0, %v484
    %v486 = vpop.f32.mrb[0].mxu0
    %487 = vmatprep.mubr.f32.mxu0 0.0
    %488 = vmatmul.mubr.f32.gmra.mrb[0].mxu0 %v409
    %v489 = vpop.f32.mrb[0].mxu0
    %v490 = vadd.f32 0.0, %v489
    %v491 = vpop.f32.mrb[0].mxu0
    %492 = vmatprep.mubr.f32.mxu0 0.0
    %493 = vmatmul.mubr.f32.gmra.mrb[0].mxu0 %v412
    %v494 = vpop.f32.mrb[0].mxu0
    %v495 = vadd.f32 0.0, %v494
    %v496 = vpop.f32.mrb[0].mxu0
    %497 = vdwg.mxu0
    %v498 = vsel %vm21, %v485, 0.0
    %v499 = vsel %vm21, %v490, 0.0
    %v500 = vadd.f32 %v498, %v499
    %vm501 = vcmask 58368
    %v502 = vsel %vm501, %v495, 0.0
    %v503 = vadd.f32 %v500, %v502
    %v504 = vrot.slane %v503, 4
    %v505 = vadd.f32 %v503, %v504
    %v506 = vrot.slane %v505, 2
    %v507 = vadd.f32 %v505, %v506
    %v508 = vrot.slane %v507, 1
    %v509 = vadd.f32 %v507, %v508
    %v510 = vmul.f32 %v485, %v485
    %v511 = vmul.f32 %v490, %v490
    %v512 = vmul.f32 %v495, %v495
    %v513 = vsel %vm21, %v510, 0.0
    %v514 = vsel %vm21, %v511, 0.0
    %v515 = vadd.f32 %v513, %v514
    %v516 = vsel %vm501, %v512, 0.0
    %v517 = vadd.f32 %v515, %v516
    %v518 = vrot.slane %v517, 4
    %v519 = vadd.f32 %v517, %v518
    %v520 = vrot.slane %v519, 2
    %v521 = vadd.f32 %v519, %v520
    %v522 = vrot.slane %v521, 1
    %v523 = vadd.f32 %v521, %v522
    %v524 = vmul.f32 %v509, 0.055555556
    %v525 = vmul.f32 %v523, 0.055555556
    %v526 = vmul.f32 %v524, %v524
    %v527 = vsub.f32 %v525, %v526
    %v528 = vmax.f32 %v527, 0.0
    %v529 = vsub.f32 %v485, %v524
    %v530 = vsub.f32 %v490, %v524
    %v531 = vsub.f32 %v495, %v524
    %v532 = vadd.f32 %v528, 1e-05
    %v533 = vrsqrt.pop %v532
    %v534 = vmul.f32 %v529, %v533
    %v535 = vmul.f32 %v530, %v533
    %v536 = vmul.f32 %v531, %v533
    %v537 = vld [vmem:[%s2 + $0x20] sm:$0x1]
    %v538 = vlaneseq
    %v539 = vshrl.u32 %v538, 7
    %v540 = vsub.s32 0, %v539
    %v541 = vrot.slane %v537, %v540
    %v542 = vmul.f32 %v534, %v541
    %v543 = vmul.f32 %v535, %v541
    %v544 = vmul.f32 %v536, %v541
    %v545 = vld [vmem:[%s2 + $0x28] sm:$0x1]
    %v546 = vlaneseq
    %v547 = vshrl.u32 %v546, 7
    %v548 = vsub.s32 0, %v547
    %v549 = vrot.slane %v545, %v548
    %v550 = vadd.f32 %v542, %v549
    %v551 = vadd.f32 %v543, %v549
    %v552 = vadd.f32 %v544, %v549
    %v553 = vmax.f32 %v550, 0.0
    %v554 = vmax.f32 %v551, 0.0
    %v555 = vmax.f32 %v552, 0.0
    %556 = vst.msk [vmem:[#allocation3 + $0x8] sm:$0xff] %vm21, %v553
    %557 = vst.msk [vmem:[#allocation3 + $0x10] sm:$0xff] %vm21, %v554
    %558 = vst.msk [vmem:[#allocation3 + $0x18] sm:$0x3] %vm501, %v555
    %v559 = vld [vmem:[%s0] sm:$0xff]
    %v560 = vld [vmem:[%s0 + $0x8] sm:$0xff]
    %v561 = vld [vmem:[%s0 + $0x10] sm:$0x3]
    %v562 = vld [vmem:[#allocation3 + $0x4] sm:$0xff]
    %v563 = vld [vmem:[#allocation3 + $0xc] sm:$0xff]
    %v564 = vld [vmem:[#allocation3 + $0x14] sm:$0x3]
    %566 = vset.pattern.permute.xlu0 0
    %567 = vperm.xlu0 %566, %v559
    %v568 = vpop.permute.xlu0 %567
    %571 = vset.pattern.permute.xlu0 0
    %572 = vperm.xlu0 %571, %v560
    %v573 = vpop.permute.xlu0 %572
    %576 = vset.pattern.permute.xlu0 0
    %577 = vperm.xlu0 %576, %v561
    %v578 = vpop.permute.xlu0 %577
    %v580 = vmul.f32 %v568, %v562
    %v581 = vmul.f32 %v573, %v563
    %v582 = vmul.f32 %v578, %v564
    %v583 = vld [vmem:[%s73] sm:$0xff]
    %v584 = vld [vmem:[%s73 + $0x8] sm:$0xff]
    %v585 = vld [vmem:[%s73 + $0x10] sm:$0x3]
    %v586 = vld [vmem:[#allocation3 + $0x5] sm:$0xff]
    %v587 = vld [vmem:[#allocation3 + $0xd] sm:$0xff]
    %v588 = vld [vmem:[#allocation3 + $0x15] sm:$0x3]
    %590 = vset.pattern.permute.xlu0 0
    %591 = vperm.xlu0 %590, %v583
    %v592 = vpop.permute.xlu0 %591
    %595 = vset.pattern.permute.xlu0 0
    %596 = vperm.xlu0 %595, %v584
    %v597 = vpop.permute.xlu0 %596
    %600 = vset.pattern.permute.xlu0 0
    %601 = vperm.xlu0 %600, %v585
    %v602 = vpop.permute.xlu0 %601
    %v604 = vmul.f32 %v592, %v586
    %v605 = vmul.f32 %v597, %v587
    %v606 = vmul.f32 %v602, %v588
    %v607 = vld [vmem:[%s98] sm:$0xff]
    %v608 = vld [vmem:[%s98 + $0x8] sm:$0xff]
    %v609 = vld [vmem:[%s98 + $0x10] sm:$0x3]
    %v610 = vld [vmem:[#allocation3 + $0x6] sm:$0xff]
    %v611 = vld [vmem:[#allocation3 + $0xe] sm:$0xff]
    %v612 = vld [vmem:[#allocation3 + $0x16] sm:$0x3]
    %614 = vset.pattern.permute.xlu0 0
    %615 = vperm.xlu0 %614, %v607
    %v616 = vpop.permute.xlu0 %615
    %619 = vset.pattern.permute.xlu0 0
    %620 = vperm.xlu0 %619, %v608
    %v621 = vpop.permute.xlu0 %620
    %624 = vset.pattern.permute.xlu0 0
    %625 = vperm.xlu0 %624, %v609
    %v626 = vpop.permute.xlu0 %625
    %v628 = vmul.f32 %v616, %v610
    %v629 = vmul.f32 %v621, %v611
    %v630 = vmul.f32 %v626, %v612
    %v631 = vld [vmem:[%s123] sm:$0xff]
    %v632 = vld [vmem:[%s123 + $0x8] sm:$0xff]
    %v633 = vld [vmem:[%s123 + $0x10] sm:$0x3]
    %v634 = vld [vmem:[#allocation3 + $0x7] sm:$0xff]
    %v635 = vld [vmem:[#allocation3 + $0xf] sm:$0xff]
    %v636 = vld [vmem:[#allocation3 + $0x17] sm:$0x3]
    %638 = vset.pattern.permute.xlu0 0
    %639 = vperm.xlu0 %638, %v631
    %v640 = vpop.permute.xlu0 %639
    %643 = vset.pattern.permute.xlu0 0
    %644 = vperm.xlu0 %643, %v632
    %v645 = vpop.permute.xlu0 %644
    %648 = vset.pattern.permute.xlu0 0
    %649 = vperm.xlu0 %648, %v633
    %v650 = vpop.permute.xlu0 %649
    %v652 = vmul.f32 %v640, %v634
    %v653 = vmul.f32 %v645, %v635
    %v654 = vmul.f32 %v650, %v636
    %v655 = vld [vmem:[%s148] sm:$0xff]
    %v656 = vld [vmem:[%s148 + $0x8] sm:$0xff]
    %v657 = vld [vmem:[%s148 + $0x10] sm:$0x3]
    %v658 = vld [vmem:[#allocation3 + $0x8] sm:$0xff]
    %v659 = vld [vmem:[#allocation3 + $0x10] sm:$0xff]
    %v660 = vld [vmem:[#allocation3 + $0x18] sm:$0x3]
    %662 = vset.pattern.permute.xlu0 0
    %663 = vperm.xlu0 %662, %v655
    %v664 = vpop.permute.xlu0 %663
    %667 = vset.pattern.permute.xlu0 0
    %668 = vperm.xlu0 %667, %v656
    %v669 = vpop.permute.xlu0 %668
    %672 = vset.pattern.permute.xlu0 0
    %673 = vperm.xlu0 %672, %v657
    %v674 = vpop.permute.xlu0 %673
    %v676 = vmul.f32 %v664, %v658
    %v677 = vmul.f32 %v669, %v659
    %v678 = vmul.f32 %v674, %v660
    %v679 = vld [vmem:[%s173] sm:$0xff]
    %v680 = vld [vmem:[%s173 + $0x8] sm:$0xff]
    %v681 = vld [vmem:[%s173 + $0x10] sm:$0x3]
    %v682 = vld [vmem:[#allocation3 + $0x9] sm:$0xff]
    %v683 = vld [vmem:[#allocation3 + $0x11] sm:$0xff]
    %v684 = vld [vmem:[#allocation3 + $0x19] sm:$0x3]
    %686 = vset.pattern.permute.xlu0 0
    %687 = vperm.xlu0 %686, %v679
    %v688 = vpop.permute.xlu0 %687
    %691 = vset.pattern.permute.xlu0 0
    %692 = vperm.xlu0 %691, %v680
    %v693 = vpop.permute.xlu0 %692
    %696 = vset.pattern.permute.xlu0 0
    %697 = vperm.xlu0 %696, %v681
    %v698 = vpop.permute.xlu0 %697
    %v700 = vmul.f32 %v688, %v682
    %v701 = vmul.f32 %v693, %v683
    %v702 = vmul.f32 %v698, %v684
    %v703 = vld [vmem:[%s198] sm:$0xff]
    %v704 = vld [vmem:[%s198 + $0x8] sm:$0xff]
    %v705 = vld [vmem:[%s198 + $0x10] sm:$0x3]
    %v706 = vld [vmem:[#allocation3 + $0xa] sm:$0xff]
    %v707 = vld [vmem:[#allocation3 + $0x12] sm:$0xff]
    %v708 = vld [vmem:[#allocation3 + $0x1a] sm:$0x3]
    %710 = vset.pattern.permute.xlu0 0
    %711 = vperm.xlu0 %710, %v703
    %v712 = vpop.permute.xlu0 %711
    %715 = vset.pattern.permute.xlu0 0
    %716 = vperm.xlu0 %715, %v704
    %v717 = vpop.permute.xlu0 %716
    %720 = vset.pattern.permute.xlu0 0
    %721 = vperm.xlu0 %720, %v705
    %v722 = vpop.permute.xlu0 %721
    %v724 = vmul.f32 %v712, %v706
    %v725 = vmul.f32 %v717, %v707
    %v726 = vmul.f32 %v722, %v708
    %v727 = vld [vmem:[%s223] sm:$0xff]
    %v728 = vld [vmem:[%s223 + $0x8] sm:$0xff]
    %v729 = vld [vmem:[%s223 + $0x10] sm:$0x3]
    %v730 = vld [vmem:[#allocation3 + $0xb] sm:$0xff]
    %v731 = vld [vmem:[#allocation3 + $0x13] sm:$0xff]
    %v732 = vld [vmem:[#allocation3 + $0x1b] sm:$0x3]
    %734 = vset.pattern.permute.xlu0 0
    %735 = vperm.xlu0 %734, %v727
    %v736 = vpop.permute.xlu0 %735
    %739 = vset.pattern.permute.xlu0 0
    %740 = vperm.xlu0 %739, %v728
    %v741 = vpop.permute.xlu0 %740
    %744 = vset.pattern.permute.xlu0 0
    %745 = vperm.xlu0 %744, %v729
    %v746 = vpop.permute.xlu0 %745
    %v748 = vmul.f32 %v736, %v730
    %v749 = vmul.f32 %v741, %v731
    %v750 = vmul.f32 %v746, %v732
    %v751 = vld [vmem:[%s248] sm:$0xff]
    %v752 = vld [vmem:[%s248 + $0x8] sm:$0xff]
    %v753 = vld [vmem:[%s248 + $0x10] sm:$0x3]
    %v754 = vld [vmem:[#allocation3 + $0xc] sm:$0xff]
    %v755 = vld [vmem:[#allocation3 + $0x14] sm:$0xff]
    %v756 = vld [vmem:[#allocation3 + $0x1c] sm:$0x3]
    %758 = vset.pattern.permute.xlu0 0
    %759 = vperm.xlu0 %758, %v751
    %v760 = vpop.permute.xlu0 %759
    %763 = vset.pattern.permute.xlu0 0
    %764 = vperm.xlu0 %763, %v752
    %v765 = vpop.permute.xlu0 %764
    %768 = vset.pattern.permute.xlu0 0
    %769 = vperm.xlu0 %768, %v753
    %v770 = vpop.permute.xlu0 %769
    %v772 = vmul.f32 %v760, %v754
    %v773 = vmul.f32 %v765, %v755
    %v774 = vmul.f32 %v770, %v756
    %778 = vrot.lane.b32.xlu0 %v604, 8
    %v779 = vpop.permute.xlu0 %778
    %780 = vrot.lane.b32.xlu0 %v605, 8
    %v781 = vpop.permute.xlu0 %780
    %782 = vrot.lane.b32.xlu0 %v606, 8
    %v783 = vpop.permute.xlu0 %782
    %790 = vrot.lane.b32.xlu0 %v628, 16
    %v791 = vpop.permute.xlu0 %790
    %792 = vrot.lane.b32.xlu0 %v629, 16
    %v793 = vpop.permute.xlu0 %792
    %794 = vrot.lane.b32.xlu0 %v630, 16
    %v795 = vpop.permute.xlu0 %794
    %802 = vrot.lane.b32.xlu0 %v652, 24
    %v803 = vpop.permute.xlu0 %802
    %804 = vrot.lane.b32.xlu0 %v653, 24
    %v805 = vpop.permute.xlu0 %804
    %806 = vrot.lane.b32.xlu0 %v654, 24
    %v807 = vpop.permute.xlu0 %806
    %814 = vrot.lane.b32.xlu0 %v676, 32
    %v815 = vpop.permute.xlu0 %814
    %816 = vrot.lane.b32.xlu0 %v677, 32
    %v817 = vpop.permute.xlu0 %816
    %818 = vrot.lane.b32.xlu0 %v678, 32
    %v819 = vpop.permute.xlu0 %818
    %826 = vrot.lane.b32.xlu0 %v700, 40
    %v827 = vpop.permute.xlu0 %826
    %828 = vrot.lane.b32.xlu0 %v701, 40
    %v829 = vpop.permute.xlu0 %828
    %830 = vrot.lane.b32.xlu0 %v702, 40
    %v831 = vpop.permute.xlu0 %830
    %838 = vrot.lane.b32.xlu0 %v724, 48
    %v839 = vpop.permute.xlu0 %838
    %840 = vrot.lane.b32.xlu0 %v725, 48
    %v841 = vpop.permute.xlu0 %840
    %842 = vrot.lane.b32.xlu0 %v726, 48
    %v843 = vpop.permute.xlu0 %842
    %850 = vrot.lane.b32.xlu0 %v748, 56
    %v851 = vpop.permute.xlu0 %850
    %852 = vrot.lane.b32.xlu0 %v749, 56
    %v853 = vpop.permute.xlu0 %852
    %854 = vrot.lane.b32.xlu0 %v750, 56
    %v855 = vpop.permute.xlu0 %854
    %862 = vrot.lane.b32.xlu0 %v772, 64
    %v863 = vpop.permute.xlu0 %862
    %864 = vrot.lane.b32.xlu0 %v773, 64
    %v865 = vpop.permute.xlu0 %864
    %866 = vrot.lane.b32.xlu0 %v774, 64
    %v867 = vpop.permute.xlu0 %866
    %v871 = vsel %vm21, %v580, %v779
    %v872 = vsel %vm21, %v581, %v781
    %v873 = vsel %vm21, %v582, %v783
    %vm874 = vcmask 130048
    %v875 = vsel %vm874, %v871, %v791
    %v876 = vsel %vm874, %v872, %v793
    %v877 = vsel %vm874, %v873, %v795
    %v878 = vsel %vm396, %v875, %v803
    %v879 = vsel %vm396, %v876, %v805
    %v880 = vsel %vm396, %v877, %v807
    %vm881 = vcmask 261120
    %v882 = vsel %vm881, %v878, %v815
    %v883 = vsel %vm881, %v879, %v817
    %v884 = vsel %vm881, %v880, %v819
    %vm885 = vcmask 326656
    %v886 = vsel %vm885, %v882, %v827
    %v887 = vsel %vm885, %v883, %v829
    %v888 = vsel %vm885, %v884, %v831
    %vm889 = vcmask 392192
    %v890 = vsel %vm889, %v886, %v839
    %v891 = vsel %vm889, %v887, %v841
    %v892 = vsel %vm889, %v888, %v843
    %vm893 = vcmask 457728
    %v894 = vsel %vm893, %v890, %v851
    %v895 = vsel %vm893, %v891, %v853
    %v896 = vsel %vm893, %v892, %v855
    %vm897 = vcmask 523264
    %v898 = vsel %vm897, %v894, %v863
    %v899 = vsel %vm897, %v895, %v865
    %v900 = vsel %vm897, %v896, %v867
    %v901 = vld [vmem:[%s2 + $0x30] sm:$0xff]
    %v902 = vld [vmem:[%s2 + $0x38] sm:$0xff]
    %v903 = vld [vmem:[%s2 + $0x40] sm:$0xff]
    %v904 = vld [vmem:[%s2 + $0x48] sm:$0xff]
    %v905 = vld [vmem:[%s2 + $0x50] sm:$0xff]
    %v906 = vld [vmem:[%s2 + $0x58] sm:$0xff]
    %v907 = vld [vmem:[%s2 + $0x60] sm:$0xff]
    %v908 = vld [vmem:[%s2 + $0x68] sm:$0xff]
    %v909 = vld [vmem:[%s2 + $0x70] sm:$0xff]
    %vm910 = vcmask 588800
    %v912 = vsel %vm910, %v898, 0
    %v915 = vsel %vm910, %v899, 0
    %v918 = vsel %vm910, %v900, 0
    %920 = vmatprep.subr.mxu0 0.0
    %921 = vmatpush1.msra.mxu0 %v901
    %922 = vmatprep.subr.mxu0 0.0
    %923 = vmatpush1.msra.mxu0 %v902
    %924 = vmatprep.subr.mxu0 0.0
    %925 = vmatpush1.msra.mxu0 %v903
    %926 = vmatprep.subr.mxu0 0.0
    %927 = vmatpush1.msra.mxu0 %v904
    %928 = vmatprep.subr.mxu0 0.0
    %929 = vmatpush1.msra.mxu0 %v905
    %930 = vmatprep.subr.mxu0 0.0
    %931 = vmatpush1.msra.mxu0 %v906
    %932 = vmatprep.subr.mxu0 0.0
    %933 = vmatpush1.msra.mxu0 %v907
    %934 = vmatprep.subr.mxu0 0.0
    %935 = vmatpush1.msra.mxu0 %v908
    %936 = vmatprep.subr.mxu0 0.0
    %937 = vmatpush1.msra.mxu0 %v909
    %938 = vmatprep.subr.mxu0 0.0
    %939 = vmatpush1.msra.mxu0 0.0
    %940 = vmatprep.subr.mxu0 0.0
    %941 = vmatpush1.msra.mxu0 0.0
    %942 = vmatprep.subr.mxu0 0.0
    %943 = vmatpush1.msra.mxu0 0.0
    %944 = vmatprep.subr.mxu0 0.0
    %945 = vmatpush1.msra.mxu0 0.0
    %946 = vmatprep.subr.mxu0 0.0
    %947 = vmatpush1.msra.mxu0 0.0
    %948 = vmatprep.subr.mxu0 0.0
    %949 = vmatpush1.msra.mxu0 0.0
    %950 = vmatprep.subr.mxu0 0.0
    %951 = vmatpush1.msra.mxu0 0.0
    %952 = vmatprep.subr.mxu0 0.0
    %953 = vmatpush1.msra.mxu0 0.0
    %954 = vmatprep.subr.mxu0 0.0
    %955 = vmatpush1.msra.mxu0 0.0
    %956 = vmatprep.subr.mxu0 0.0
    %957 = vmatpush1.msra.mxu0 0.0
    %958 = vmatprep.subr.mxu0 0.0
    %959 = vmatpush1.msra.mxu0 0.0
    %960 = vmatprep.subr.mxu0 0.0
    %961 = vmatpush1.msra.mxu0 0.0
    %962 = vmatprep.subr.mxu0 0.0
    %963 = vmatpush1.msra.mxu0 0.0
    %964 = vmatprep.subr.mxu0 0.0
    %965 = vmatpush1.msra.mxu0 0.0
    %966 = vmatprep.subr.mxu0 0.0
    %967 = vmatpush1.msra.mxu0 0.0
    %968 = vmatprep.subr.mxu0 0.0
    %969 = vmatpush1.msra.mxu0 0.0
    %970 = vmatprep.subr.mxu0 0.0
    %971 = vmatpush1.msra.mxu0 0.0
    %972 = vmatprep.subr.mxu0 0.0
    %973 = vmatpush1.msra.mxu0 0.0
    %974 = vmatprep.subr.mxu0 0.0
    %975 = vmatpush1.msra.mxu0 0.0
    %976 = vmatprep.subr.mxu0 0.0
    %977 = vmatpush1.msra.mxu0 0.0
    %978 = vmatprep.subr.mxu0 0.0
    %979 = vmatpush1.msra.mxu0 0.0
    %980 = vmatprep.subr.mxu0 0.0
    %981 = vmatpush1.msra.mxu0 0.0
    %982 = vmatprep.subr.mxu0 0.0
    %983 = vmatpush1.msra.mxu0 0.0
    %984 = vmatprep.mubr.f32.mxu0 0.0
    %985 = vmatmul.mubr.f32.gmra.mrb[0].mxu0 %v912
    %v986 = vpop.f32.mrb[0].mxu0
    %v987 = vadd.f32 0.0, %v986
    %v988 = vpop.f32.mrb[0].mxu0
    %989 = vmatprep.mubr.f32.mxu0 0.0
    %990 = vmatmul.mubr.f32.gmra.mrb[0].mxu0 %v915
    %v991 = vpop.f32.mrb[0].mxu0
    %v992 = vadd.f32 0.0, %v991
    %v993 = vpop.f32.mrb[0].mxu0
    %994 = vmatprep.mubr.f32.mxu0 0.0
    %995 = vmatmul.mubr.f32.gmra.mrb[0].mxu0 %v918
    %v996 = vpop.f32.mrb[0].mxu0
    %v997 = vadd.f32 0.0, %v996
    %v998 = vpop.f32.mrb[0].mxu0
    %999 = vdwg.mxu0
    %v1000 = vsel %vm21, %v987, 0.0
    %v1001 = vsel %vm21, %v992, 0.0
    %v1002 = vadd.f32 %v1000, %v1001
    %v1003 = vsel %vm501, %v997, 0.0
    %v1004 = vadd.f32 %v1002, %v1003
    %v1005 = vrot.slane %v1004, 4
    %v1006 = vadd.f32 %v1004, %v1005
    %v1007 = vrot.slane %v1006, 2
    %v1008 = vadd.f32 %v1006, %v1007
    %v1009 = vrot.slane %v1008, 1
    %v1010 = vadd.f32 %v1008, %v1009
    %v1011 = vmul.f32 %v987, %v987
    %v1012 = vmul.f32 %v992, %v992
    %v1013 = vmul.f32 %v997, %v997
    %v1014 = vsel %vm21, %v1011, 0.0
    %v1015 = vsel %vm21, %v1012, 0.0
    %v1016 = vadd.f32 %v1014, %v1015
    %v1017 = vsel %vm501, %v1013, 0.0
    %v1018 = vadd.f32 %v1016, %v1017
    %v1019 = vrot.slane %v1018, 4
    %v1020 = vadd.f32 %v1018, %v1019
    %v1021 = vrot.slane %v1020, 2
    %v1022 = vadd.f32 %v1020, %v1021
    %v1023 = vrot.slane %v1022, 1
    %v1024 = vadd.f32 %v1022, %v1023
    %v1025 = vmul.f32 %v1010, 0.055555556
    %v1026 = vmul.f32 %v1024, 0.055555556
    %v1027 = vmul.f32 %v1025, %v1025
    %v1028 = vsub.f32 %v1026, %v1027
    %v1029 = vmax.f32 %v1028, 0.0
    %v1030 = vsub.f32 %v987, %v1025
    %v1031 = vsub.f32 %v992, %v1025
    %v1032 = vsub.f32 %v997, %v1025
    %v1033 = vadd.f32 %v1029, 1e-05
    %v1034 = vrsqrt.pop %v1033
    %v1035 = vmul.f32 %v1030, %v1034
    %v1036 = vmul.f32 %v1031, %v1034
    %v1037 = vmul.f32 %v1032, %v1034
    %v1038 = vld [vmem:[%s2 + $0x78] sm:$0x1]
    %v1039 = vlaneseq
    %v1040 = vshrl.u32 %v1039, 7
    %v1041 = vsub.s32 0, %v1040
    %v1042 = vrot.slane %v1038, %v1041
    %v1043 = vmul.f32 %v1035, %v1042
    %v1044 = vmul.f32 %v1036, %v1042
    %v1045 = vmul.f32 %v1037, %v1042
    %v1046 = vld [vmem:[%s2 + $0x80] sm:$0x1]
    %v1047 = vlaneseq
    %v1048 = vshrl.u32 %v1047, 7
    %v1049 = vsub.s32 0, %v1048
    %v1050 = vrot.slane %v1046, %v1049
    %v1051 = vadd.f32 %v1043, %v1050
    %v1052 = vadd.f32 %v1044, %v1050
    %v1053 = vadd.f32 %v1045, %v1050
    %v1054 = vmax.f32 %v1051, 0.0
    %v1055 = vmax.f32 %v1052, 0.0
    %v1056 = vmax.f32 %v1053, 0.0
    %1057 = vst.msk [vmem:[#allocation4 + $0x8] sm:$0xff] %vm21, %v1054
    %1058 = vst.msk [vmem:[#allocation4 + $0x10] sm:$0xff] %vm21, %v1055
    %1059 = vst.msk [vmem:[#allocation4 + $0x18] sm:$0x3] %vm501, %v1056
    %v1060 = vld [vmem:[%s0] sm:$0xff]
    %v1061 = vld [vmem:[%s0 + $0x8] sm:$0xff]
    %v1062 = vld [vmem:[%s0 + $0x10] sm:$0x3]
    %v1063 = vld [vmem:[#allocation4 + $0x4] sm:$0xff]
    %v1064 = vld [vmem:[#allocation4 + $0xc] sm:$0xff]
    %v1065 = vld [vmem:[#allocation4 + $0x14] sm:$0x3]
    %1067 = vset.pattern.permute.xlu0 0
    %1068 = vperm.xlu0 %1067, %v1060
    %v1069 = vpop.permute.xlu0 %1068
    %1072 = vset.pattern.permute.xlu0 0
    %1073 = vperm.xlu0 %1072, %v1061
    %v1074 = vpop.permute.xlu0 %1073
    %1077 = vset.pattern.permute.xlu0 0
    %1078 = vperm.xlu0 %1077, %v1062
    %v1079 = vpop.permute.xlu0 %1078
    %v1081 = vmul.f32 %v1069, %v1063
    %v1082 = vmul.f32 %v1074, %v1064
    %v1083 = vmul.f32 %v1079, %v1065
    %v1084 = vld [vmem:[%s73] sm:$0xff]
    %v1085 = vld [vmem:[%s73 + $0x8] sm:$0xff]
    %v1086 = vld [vmem:[%s73 + $0x10] sm:$0x3]
    %v1087 = vld [vmem:[#allocation4 + $0x5] sm:$0xff]
    %v1088 = vld [vmem:[#allocation4 + $0xd] sm:$0xff]
    %v1089 = vld [vmem:[#allocation4 + $0x15] sm:$0x3]
    %1091 = vset.pattern.permute.xlu0 0
    %1092 = vperm.xlu0 %1091, %v1084
    %v1093 = vpop.permute.xlu0 %1092
    %1096 = vset.pattern.permute.xlu0 0
    %1097 = vperm.xlu0 %1096, %v1085
    %v1098 = vpop.permute.xlu0 %1097
    %1101 = vset.pattern.permute.xlu0 0
    %1102 = vperm.xlu0 %1101, %v1086
    %v1103 = vpop.permute.xlu0 %1102
    %v1105 = vmul.f32 %v1093, %v1087
    %v1106 = vmul.f32 %v1098, %v1088
    %v1107 = vmul.f32 %v1103, %v1089
    %v1108 = vld [vmem:[%s98] sm:$0xff]
    %v1109 = vld [vmem:[%s98 + $0x8] sm:$0xff]
    %v1110 = vld [vmem:[%s98 + $0x10] sm:$0x3]
    %v1111 = vld [vmem:[#allocation4 + $0x6] sm:$0xff]
    %v1112 = vld [vmem:[#allocation4 + $0xe] sm:$0xff]
    %v1113 = vld [vmem:[#allocation4 + $0x16] sm:$0x3]
    %1115 = vset.pattern.permute.xlu0 0
    %1116 = vperm.xlu0 %1115, %v1108
    %v1117 = vpop.permute.xlu0 %1116
    %1120 = vset.pattern.permute.xlu0 0
    %1121 = vperm.xlu0 %1120, %v1109
    %v1122 = vpop.permute.xlu0 %1121
    %1125 = vset.pattern.permute.xlu0 0
    %1126 = vperm.xlu0 %1125, %v1110
    %v1127 = vpop.permute.xlu0 %1126
    %v1129 = vmul.f32 %v1117, %v1111
    %v1130 = vmul.f32 %v1122, %v1112
    %v1131 = vmul.f32 %v1127, %v1113
    %v1132 = vld [vmem:[%s123] sm:$0xff]
    %v1133 = vld [vmem:[%s123 + $0x8] sm:$0xff]
    %v1134 = vld [vmem:[%s123 + $0x10] sm:$0x3]
    %v1135 = vld [vmem:[#allocation4 + $0x7] sm:$0xff]
    %v1136 = vld [vmem:[#allocation4 + $0xf] sm:$0xff]
    %v1137 = vld [vmem:[#allocation4 + $0x17] sm:$0x3]
    %1139 = vset.pattern.permute.xlu0 0
    %1140 = vperm.xlu0 %1139, %v1132
    %v1141 = vpop.permute.xlu0 %1140
    %1144 = vset.pattern.permute.xlu0 0
    %1145 = vperm.xlu0 %1144, %v1133
    %v1146 = vpop.permute.xlu0 %1145
    %1149 = vset.pattern.permute.xlu0 0
    %1150 = vperm.xlu0 %1149, %v1134
    %v1151 = vpop.permute.xlu0 %1150
    %v1153 = vmul.f32 %v1141, %v1135
    %v1154 = vmul.f32 %v1146, %v1136
    %v1155 = vmul.f32 %v1151, %v1137
    %v1156 = vld [vmem:[%s148] sm:$0xff]
    %v1157 = vld [vmem:[%s148 + $0x8] sm:$0xff]
    %v1158 = vld [vmem:[%s148 + $0x10] sm:$0x3]
    %v1159 = vld [vmem:[#allocation4 + $0x8] sm:$0xff]
    %v1160 = vld [vmem:[#allocation4 + $0x10] sm:$0xff]
    %v1161 = vld [vmem:[#allocation4 + $0x18] sm:$0x3]
    %1163 = vset.pattern.permute.xlu0 0
    %1164 = vperm.xlu0 %1163, %v1156
    %v1165 = vpop.permute.xlu0 %1164
    %1168 = vset.pattern.permute.xlu0 0
    %1169 = vperm.xlu0 %1168, %v1157
    %v1170 = vpop.permute.xlu0 %1169
    %1173 = vset.pattern.permute.xlu0 0
    %1174 = vperm.xlu0 %1173, %v1158
    %v1175 = vpop.permute.xlu0 %1174
    %v1177 = vmul.f32 %v1165, %v1159
    %v1178 = vmul.f32 %v1170, %v1160
    %v1179 = vmul.f32 %v1175, %v1161
    %v1180 = vld [vmem:[%s173] sm:$0xff]
    %v1181 = vld [vmem:[%s173 + $0x8] sm:$0xff]
    %v1182 = vld [vmem:[%s173 + $0x10] sm:$0x3]
    %v1183 = vld [vmem:[#allocation4 + $0x9] sm:$0xff]
    %v1184 = vld [vmem:[#allocation4 + $0x11] sm:$0xff]
    %v1185 = vld [vmem:[#allocation4 + $0x19] sm:$0x3]
    %1187 = vset.pattern.permute.xlu0 0
    %1188 = vperm.xlu0 %1187, %v1180
    %v1189 = vpop.permute.xlu0 %1188
    %1192 = vset.pattern.permute.xlu0 0
    %1193 = vperm.xlu0 %1192, %v1181
    %v1194 = vpop.permute.xlu0 %1193
    %1197 = vset.pattern.permute.xlu0 0
    %1198 = vperm.xlu0 %1197, %v1182
    %v1199 = vpop.permute.xlu0 %1198
    %v1201 = vmul.f32 %v1189, %v1183
    %v1202 = vmul.f32 %v1194, %v1184
    %v1203 = vmul.f32 %v1199, %v1185
    %v1204 = vld [vmem:[%s198] sm:$0xff]
    %v1205 = vld [vmem:[%s198 + $0x8] sm:$0xff]
    %v1206 = vld [vmem:[%s198 + $0x10] sm:$0x3]
    %v1207 = vld [vmem:[#allocation4 + $0xa] sm:$0xff]
    %v1208 = vld [vmem:[#allocation4 + $0x12] sm:$0xff]
    %v1209 = vld [vmem:[#allocation4 + $0x1a] sm:$0x3]
    %1211 = vset.pattern.permute.xlu0 0
    %1212 = vperm.xlu0 %1211, %v1204
    %v1213 = vpop.permute.xlu0 %1212
    %1216 = vset.pattern.permute.xlu0 0
    %1217 = vperm.xlu0 %1216, %v1205
    %v1218 = vpop.permute.xlu0 %1217
    %1221 = vset.pattern.permute.xlu0 0
    %1222 = vperm.xlu0 %1221, %v1206
    %v1223 = vpop.permute.xlu0 %1222
    %v1225 = vmul.f32 %v1213, %v1207
    %v1226 = vmul.f32 %v1218, %v1208
    %v1227 = vmul.f32 %v1223, %v1209
    %v1228 = vld [vmem:[%s223] sm:$0xff]
    %v1229 = vld [vmem:[%s223 + $0x8] sm:$0xff]
    %v1230 = vld [vmem:[%s223 + $0x10] sm:$0x3]
    %v1231 = vld [vmem:[#allocation4 + $0xb] sm:$0xff]
    %v1232 = vld [vmem:[#allocation4 + $0x13] sm:$0xff]
    %v1233 = vld [vmem:[#allocation4 + $0x1b] sm:$0x3]
    %1235 = vset.pattern.permute.xlu0 0
    %1236 = vperm.xlu0 %1235, %v1228
    %v1237 = vpop.permute.xlu0 %1236
    %1240 = vset.pattern.permute.xlu0 0
    %1241 = vperm.xlu0 %1240, %v1229
    %v1242 = vpop.permute.xlu0 %1241
    %1245 = vset.pattern.permute.xlu0 0
    %1246 = vperm.xlu0 %1245, %v1230
    %v1247 = vpop.permute.xlu0 %1246
    %v1249 = vmul.f32 %v1237, %v1231
    %v1250 = vmul.f32 %v1242, %v1232
    %v1251 = vmul.f32 %v1247, %v1233
    %v1252 = vld [vmem:[%s248] sm:$0xff]
    %v1253 = vld [vmem:[%s248 + $0x8] sm:$0xff]
    %v1254 = vld [vmem:[%s248 + $0x10] sm:$0x3]
    %v1255 = vld [vmem:[#allocation4 + $0xc] sm:$0xff]
    %v1256 = vld [vmem:[#allocation4 + $0x14] sm:$0xff]
    %v1257 = vld [vmem:[#allocation4 + $0x1c] sm:$0x3]
    %1259 = vset.pattern.permute.xlu0 0
    %1260 = vperm.xlu0 %1259, %v1252
    %v1261 = vpop.permute.xlu0 %1260
    %1264 = vset.pattern.permute.xlu0 0
    %1265 = vperm.xlu0 %1264, %v1253
    %v1266 = vpop.permute.xlu0 %1265
    %1269 = vset.pattern.permute.xlu0 0
    %1270 = vperm.xlu0 %1269, %v1254
    %v1271 = vpop.permute.xlu0 %1270
    %v1273 = vmul.f32 %v1261, %v1255
    %v1274 = vmul.f32 %v1266, %v1256
    %v1275 = vmul.f32 %v1271, %v1257
    %1279 = vrot.lane.b32.xlu0 %v1105, 8
    %v1280 = vpop.permute.xlu0 %1279
    %1281 = vrot.lane.b32.xlu0 %v1106, 8
    %v1282 = vpop.permute.xlu0 %1281
    %1283 = vrot.lane.b32.xlu0 %v1107, 8
    %v1284 = vpop.permute.xlu0 %1283
    %1291 = vrot.lane.b32.xlu0 %v1129, 16
    %v1292 = vpop.permute.xlu0 %1291
    %1293 = vrot.lane.b32.xlu0 %v1130, 16
    %v1294 = vpop.permute.xlu0 %1293
    %1295 = vrot.lane.b32.xlu0 %v1131, 16
    %v1296 = vpop.permute.xlu0 %1295
    %1303 = vrot.lane.b32.xlu0 %v1153, 24
    %v1304 = vpop.permute.xlu0 %1303
    %1305 = vrot.lane.b32.xlu0 %v1154, 24
    %v1306 = vpop.permute.xlu0 %1305
    %1307 = vrot.lane.b32.xlu0 %v1155, 24
    %v1308 = vpop.permute.xlu0 %1307
    %1315 = vrot.lane.b32.xlu0 %v1177, 32
    %v1316 = vpop.permute.xlu0 %1315
    %1317 = vrot.lane.b32.xlu0 %v1178, 32
    %v1318 = vpop.permute.xlu0 %1317
    %1319 = vrot.lane.b32.xlu0 %v1179, 32
    %v1320 = vpop.permute.xlu0 %1319
    %1327 = vrot.lane.b32.xlu0 %v1201, 40
    %v1328 = vpop.permute.xlu0 %1327
    %1329 = vrot.lane.b32.xlu0 %v1202, 40
    %v1330 = vpop.permute.xlu0 %1329
    %1331 = vrot.lane.b32.xlu0 %v1203, 40
    %v1332 = vpop.permute.xlu0 %1331
    %1339 = vrot.lane.b32.xlu0 %v1225, 48
    %v1340 = vpop.permute.xlu0 %1339
    %1341 = vrot.lane.b32.xlu0 %v1226, 48
    %v1342 = vpop.permute.xlu0 %1341
    %1343 = vrot.lane.b32.xlu0 %v1227, 48
    %v1344 = vpop.permute.xlu0 %1343
    %1351 = vrot.lane.b32.xlu0 %v1249, 56
    %v1352 = vpop.permute.xlu0 %1351
    %1353 = vrot.lane.b32.xlu0 %v1250, 56
    %v1354 = vpop.permute.xlu0 %1353
    %1355 = vrot.lane.b32.xlu0 %v1251, 56
    %v1356 = vpop.permute.xlu0 %1355
    %1363 = vrot.lane.b32.xlu0 %v1273, 64
    %v1364 = vpop.permute.xlu0 %1363
    %1365 = vrot.lane.b32.xlu0 %v1274, 64
    %v1366 = vpop.permute.xlu0 %1365
    %1367 = vrot.lane.b32.xlu0 %v1275, 64
    %v1368 = vpop.permute.xlu0 %1367
    %v1372 = vsel %vm21, %v1081, %v1280
    %v1373 = vsel %vm21, %v1082, %v1282
    %v1374 = vsel %vm21, %v1083, %v1284
    %v1375 = vsel %vm874, %v1372, %v1292
    %v1376 = vsel %vm874, %v1373, %v1294
    %v1377 = vsel %vm874, %v1374, %v1296
    %v1378 = vsel %vm396, %v1375, %v1304
    %v1379 = vsel %vm396, %v1376, %v1306
    %v1380 = vsel %vm396, %v1377, %v1308
    %v1381 = vsel %vm881, %v1378, %v1316
    %v1382 = vsel %vm881, %v1379, %v1318
    %v1383 = vsel %vm881, %v1380, %v1320
    %v1384 = vsel %vm885, %v1381, %v1328
    %v1385 = vsel %vm885, %v1382, %v1330
    %v1386 = vsel %vm885, %v1383, %v1332
    %v1387 = vsel %vm889, %v1384, %v1340
    %v1388 = vsel %vm889, %v1385, %v1342
    %v1389 = vsel %vm889, %v1386, %v1344
    %v1390 = vsel %vm893, %v1387, %v1352
    %v1391 = vsel %vm893, %v1388, %v1354
    %v1392 = vsel %vm893, %v1389, %v1356
    %v1393 = vsel %vm897, %v1390, %v1364
    %v1394 = vsel %vm897, %v1391, %v1366
    %v1395 = vsel %vm897, %v1392, %v1368
    %v1396 = vld [vmem:[%s2 + $0x88] sm:$0xff]
    %v1397 = vld [vmem:[%s2 + $0x90] sm:$0xff]
    %v1398 = vld [vmem:[%s2 + $0x98] sm:$0xff]
    %v1399 = vld [vmem:[%s2 + $0xa0] sm:$0xff]
    %v1400 = vld [vmem:[%s2 + $0xa8] sm:$0xff]
    %v1401 = vld [vmem:[%s2 + $0xb0] sm:$0xff]
    %v1402 = vld [vmem:[%s2 + $0xb8] sm:$0xff]
    %v1403 = vld [vmem:[%s2 + $0xc0] sm:$0xff]
    %v1404 = vld [vmem:[%s2 + $0xc8] sm:$0xff]
    %v1406 = vsel %vm910, %v1393, 0
    %v1409 = vsel %vm910, %v1394, 0
    %v1412 = vsel %vm910, %v1395, 0
    %1414 = vmatprep.subr.mxu0 0.0
    %1415 = vmatpush1.msra.mxu0 %v1396
    %1416 = vmatprep.subr.mxu0 0.0
    %1417 = vmatpush1.msra.mxu0 %v1397
    %1418 = vmatprep.subr.mxu0 0.0
    %1419 = vmatpush1.msra.mxu0 %v1398
    %1420 = vmatprep.subr.mxu0 0.0
    %1421 = vmatpush1.msra.mxu0 %v1399
    %1422 = vmatprep.subr.mxu0 0.0
    %1423 = vmatpush1.msra.mxu0 %v1400
    %1424 = vmatprep.subr.mxu0 0.0
    %1425 = vmatpush1.msra.mxu0 %v1401
    %1426 = vmatprep.subr.mxu0 0.0
    %1427 = vmatpush1.msra.mxu0 %v1402
    %1428 = vmatprep.subr.mxu0 0.0
    %1429 = vmatpush1.msra.mxu0 %v1403
    %1430 = vmatprep.subr.mxu0 0.0
    %1431 = vmatpush1.msra.mxu0 %v1404
    %1432 = vmatprep.subr.mxu0 0.0
    %1433 = vmatpush1.msra.mxu0 0.0
    %1434 = vmatprep.subr.mxu0 0.0
    %1435 = vmatpush1.msra.mxu0 0.0
    %1436 = vmatprep.subr.mxu0 0.0
    %1437 = vmatpush1.msra.mxu0 0.0
    %1438 = vmatprep.subr.mxu0 0.0
    %1439 = vmatpush1.msra.mxu0 0.0
    %1440 = vmatprep.subr.mxu0 0.0
    %1441 = vmatpush1.msra.mxu0 0.0
    %1442 = vmatprep.subr.mxu0 0.0
    %1443 = vmatpush1.msra.mxu0 0.0
    %1444 = vmatprep.subr.mxu0 0.0
    %1445 = vmatpush1.msra.mxu0 0.0
    %1446 = vmatprep.subr.mxu0 0.0
    %1447 = vmatpush1.msra.mxu0 0.0
    %1448 = vmatprep.subr.mxu0 0.0
    %1449 = vmatpush1.msra.mxu0 0.0
    %1450 = vmatprep.subr.mxu0 0.0
    %1451 = vmatpush1.msra.mxu0 0.0
    %1452 = vmatprep.subr.mxu0 0.0
    %1453 = vmatpush1.msra.mxu0 0.0
    %1454 = vmatprep.subr.mxu0 0.0
    %1455 = vmatpush1.msra.mxu0 0.0
    %1456 = vmatprep.subr.mxu0 0.0
    %1457 = vmatpush1.msra.mxu0 0.0
    %1458 = vmatprep.subr.mxu0 0.0
    %1459 = vmatpush1.msra.mxu0 0.0
    %1460 = vmatprep.subr.mxu0 0.0
    %1461 = vmatpush1.msra.mxu0 0.0
    %1462 = vmatprep.subr.mxu0 0.0
    %1463 = vmatpush1.msra.mxu0 0.0
    %1464 = vmatprep.subr.mxu0 0.0
    %1465 = vmatpush1.msra.mxu0 0.0
    %1466 = vmatprep.subr.mxu0 0.0
    %1467 = vmatpush1.msra.mxu0 0.0
    %1468 = vmatprep.subr.mxu0 0.0
    %1469 = vmatpush1.msra.mxu0 0.0
    %1470 = vmatprep.subr.mxu0 0.0
    %1471 = vmatpush1.msra.mxu0 0.0
    %1472 = vmatprep.subr.mxu0 0.0
    %1473 = vmatpush1.msra.mxu0 0.0
    %1474 = vmatprep.subr.mxu0 0.0
    %1475 = vmatpush1.msra.mxu0 0.0
    %1476 = vmatprep.subr.mxu0 0.0
    %1477 = vmatpush1.msra.mxu0 0.0
    %1478 = vmatprep.mubr.f32.mxu0 0.0
    %1479 = vmatmul.mubr.f32.gmra.mrb[0].mxu0 %v1406
    %v1480 = vpop.f32.mrb[0].mxu0
    %v1481 = vadd.f32 0.0, %v1480
    %v1482 = vpop.f32.mrb[0].mxu0
    %1483 = vmatprep.mubr.f32.mxu0 0.0
    %1484 = vmatmul.mubr.f32.gmra.mrb[0].mxu0 %v1409
    %v1485 = vpop.f32.mrb[0].mxu0
    %v1486 = vadd.f32 0.0, %v1485
    %v1487 = vpop.f32.mrb[0].mxu0
    %1488 = vmatprep.mubr.f32.mxu0 0.0
    %1489 = vmatmul.mubr.f32.gmra.mrb[0].mxu0 %v1412
    %v1490 = vpop.f32.mrb[0].mxu0
    %v1491 = vadd.f32 0.0, %v1490
    %v1492 = vpop.f32.mrb[0].mxu0
    %1493 = vdwg.mxu0
    %v1494 = vsel %vm21, %v1481, 0.0
    %v1495 = vsel %vm21, %v1486, 0.0
    %v1496 = vadd.f32 %v1494, %v1495
    %v1497 = vsel %vm501, %v1491, 0.0
    %v1498 = vadd.f32 %v1496, %v1497
    %v1499 = vrot.slane %v1498, 4
    %v1500 = vadd.f32 %v1498, %v1499
    %v1501 = vrot.slane %v1500, 2
    %v1502 = vadd.f32 %v1500, %v1501
    %v1503 = vrot.slane %v1502, 1
    %v1504 = vadd.f32 %v1502, %v1503
    %v1505 = vmul.f32 %v1481, %v1481
    %v1506 = vmul.f32 %v1486, %v1486
    %v1507 = vmul.f32 %v1491, %v1491
    %v1508 = vsel %vm21, %v1505, 0.0
    %v1509 = vsel %vm21, %v1506, 0.0
    %v1510 = vadd.f32 %v1508, %v1509
    %v1511 = vsel %vm501, %v1507, 0.0
    %v1512 = vadd.f32 %v1510, %v1511
    %v1513 = vrot.slane %v1512, 4
    %v1514 = vadd.f32 %v1512, %v1513
    %v1515 = vrot.slane %v1514, 2
    %v1516 = vadd.f32 %v1514, %v1515
    %v1517 = vrot.slane %v1516, 1
    %v1518 = vadd.f32 %v1516, %v1517
    %v1519 = vmul.f32 %v1504, 0.055555556
    %v1520 = vmul.f32 %v1518, 0.055555556
    %v1521 = vmul.f32 %v1519, %v1519
    %v1522 = vsub.f32 %v1520, %v1521
    %v1523 = vmax.f32 %v1522, 0.0
    %v1524 = vsub.f32 %v1481, %v1519
    %v1525 = vsub.f32 %v1486, %v1519
    %v1526 = vsub.f32 %v1491, %v1519
    %v1527 = vadd.f32 %v1523, 1e-05
    %v1528 = vrsqrt.pop %v1527
    %v1529 = vmul.f32 %v1524, %v1528
    %v1530 = vmul.f32 %v1525, %v1528
    %v1531 = vmul.f32 %v1526, %v1528
    %v1532 = vld [vmem:[%s2 + $0xd0] sm:$0x1]
    %v1533 = vlaneseq
    %v1534 = vshrl.u32 %v1533, 7
    %v1535 = vsub.s32 0, %v1534
    %v1536 = vrot.slane %v1532, %v1535
    %v1537 = vmul.f32 %v1529, %v1536
    %v1538 = vmul.f32 %v1530, %v1536
    %v1539 = vmul.f32 %v1531, %v1536
    %v1540 = vld [vmem:[%s2 + $0xd8] sm:$0x1]
    %v1541 = vlaneseq
    %v1542 = vshrl.u32 %v1541, 7
    %v1543 = vsub.s32 0, %v1542
    %v1544 = vrot.slane %v1540, %v1543
    %v1545 = vadd.f32 %v1537, %v1544
    %v1546 = vadd.f32 %v1538, %v1544
    %v1547 = vadd.f32 %v1539, %v1544
    %v1548 = vmax.f32 %v1545, 0.0
    %v1549 = vmax.f32 %v1546, 0.0
    %v1550 = vmax.f32 %v1547, 0.0
    %1551 = vst.msk [vmem:[#allocation3 + $0x30] sm:$0xff] %vm21, %v1548
    %1552 = vst.msk [vmem:[#allocation3 + $0x38] sm:$0xff] %vm21, %v1549
    %1553 = vst.msk [vmem:[#allocation3 + $0x40] sm:$0x3] %vm501, %v1550
    %v1554 = vld [vmem:[%s0] sm:$0xff]
    %v1555 = vld [vmem:[%s0 + $0x8] sm:$0xff]
    %v1556 = vld [vmem:[%s0 + $0x10] sm:$0x3]
    %v1557 = vld [vmem:[#allocation3 + $0x4] sm:$0xff]
    %v1558 = vld [vmem:[#allocation3 + $0xc] sm:$0xff]
    %v1559 = vld [vmem:[#allocation3 + $0x14] sm:$0x3]
    %v1560 = vld [vmem:[#allocation3 + $0x2c] sm:$0xff]
    %v1561 = vld [vmem:[#allocation3 + $0x34] sm:$0xff]
    %v1562 = vld [vmem:[#allocation3 + $0x3c] sm:$0x3]
    %1566 = vrot.lane.b32.xlu0 %v1560, 8
    %v1567 = vpop.permute.xlu0 %1566
    %1568 = vrot.lane.b32.xlu0 %v1561, 8
    %v1569 = vpop.permute.xlu0 %1568
    %1570 = vrot.lane.b32.xlu0 %v1562, 8
    %v1571 = vpop.permute.xlu0 %1570
    %v1575 = vsel %vm21, %v1557, %v1567
    %v1576 = vsel %vm21, %v1558, %v1569
    %v1577 = vsel %vm21, %v1559, %v1571
    %1579 = vset.pattern.permute.xlu0 0
    %1580 = vperm.xlu0 %1579, %v1554
    %v1581 = vpop.permute.xlu0 %1580
    %1584 = vset.pattern.permute.xlu0 0
    %1585 = vperm.xlu0 %1584, %v1555
    %v1586 = vpop.permute.xlu0 %1585
    %1589 = vset.pattern.permute.xlu0 0
    %1590 = vperm.xlu0 %1589, %v1556
    %v1591 = vpop.permute.xlu0 %1590
    %v1593 = vmul.f32 %v1581, %v1575
    %v1594 = vmul.f32 %v1586, %v1576
    %v1595 = vmul.f32 %v1591, %v1577
    %v1596 = vld [vmem:[%s73] sm:$0xff]
    %v1597 = vld [vmem:[%s73 + $0x8] sm:$0xff]
    %v1598 = vld [vmem:[%s73 + $0x10] sm:$0x3]
    %v1599 = vld [vmem:[#allocation3 + $0x5] sm:$0xff]
    %v1600 = vld [vmem:[#allocation3 + $0xd] sm:$0xff]
    %v1601 = vld [vmem:[#allocation3 + $0x15] sm:$0x3]
    %v1602 = vld [vmem:[#allocation3 + $0x2d] sm:$0xff]
    %v1603 = vld [vmem:[#allocation3 + $0x35] sm:$0xff]
    %v1604 = vld [vmem:[#allocation3 + $0x3d] sm:$0x3]
    %1608 = vrot.lane.b32.xlu0 %v1602, 8
    %v1609 = vpop.permute.xlu0 %1608
    %1610 = vrot.lane.b32.xlu0 %v1603, 8
    %v1611 = vpop.permute.xlu0 %1610
    %1612 = vrot.lane.b32.xlu0 %v1604, 8
    %v1613 = vpop.permute.xlu0 %1612
    %v1617 = vsel %vm21, %v1599, %v1609
    %v1618 = vsel %vm21, %v1600, %v1611
    %v1619 = vsel %vm21, %v1601, %v1613
    %1621 = vset.pattern.permute.xlu0 0
    %1622 = vperm.xlu0 %1621, %v1596
    %v1623 = vpop.permute.xlu0 %1622
    %1626 = vset.pattern.permute.xlu0 0
    %1627 = vperm.xlu0 %1626, %v1597
    %v1628 = vpop.permute.xlu0 %1627
    %1631 = vset.pattern.permute.xlu0 0
    %1632 = vperm.xlu0 %1631, %v1598
    %v1633 = vpop.permute.xlu0 %1632
    %v1635 = vmul.f32 %v1623, %v1617
    %v1636 = vmul.f32 %v1628, %v1618
    %v1637 = vmul.f32 %v1633, %v1619
    %v1638 = vld [vmem:[%s98] sm:$0xff]
    %v1639 = vld [vmem:[%s98 + $0x8] sm:$0xff]
    %v1640 = vld [vmem:[%s98 + $0x10] sm:$0x3]
    %v1641 = vld [vmem:[#allocation3 + $0x6] sm:$0xff]
    %v1642 = vld [vmem:[#allocation3 + $0xe] sm:$0xff]
    %v1643 = vld [vmem:[#allocation3 + $0x16] sm:$0x3]
    %v1644 = vld [vmem:[#allocation3 + $0x2e] sm:$0xff]
    %v1645 = vld [vmem:[#allocation3 + $0x36] sm:$0xff]
    %v1646 = vld [vmem:[#allocation3 + $0x3e] sm:$0x3]
    %1650 = vrot.lane.b32.xlu0 %v1644, 8
    %v1651 = vpop.permute.xlu0 %1650
    %1652 = vrot.lane.b32.xlu0 %v1645, 8
    %v1653 = vpop.permute.xlu0 %1652
    %1654 = vrot.lane.b32.xlu0 %v1646, 8
    %v1655 = vpop.permute.xlu0 %1654
    %v1659 = vsel %vm21, %v1641, %v1651
    %v1660 = vsel %vm21, %v1642, %v1653
    %v1661 = vsel %vm21, %v1643, %v1655
    %1663 = vset.pattern.permute.xlu0 0
    %1664 = vperm.xlu0 %1663, %v1638
    %v1665 = vpop.permute.xlu0 %1664
    %1668 = vset.pattern.permute.xlu0 0
    %1669 = vperm.xlu0 %1668, %v1639
    %v1670 = vpop.permute.xlu0 %1669
    %1673 = vset.pattern.permute.xlu0 0
    %1674 = vperm.xlu0 %1673, %v1640
    %v1675 = vpop.permute.xlu0 %1674
    %v1677 = vmul.f32 %v1665, %v1659
    %v1678 = vmul.f32 %v1670, %v1660
    %v1679 = vmul.f32 %v1675, %v1661
    %v1680 = vld [vmem:[%s123] sm:$0xff]
    %v1681 = vld [vmem:[%s123 + $0x8] sm:$0xff]
    %v1682 = vld [vmem:[%s123 + $0x10] sm:$0x3]
    %v1683 = vld [vmem:[#allocation3 + $0x7] sm:$0xff]
    %v1684 = vld [vmem:[#allocation3 + $0xf] sm:$0xff]
    %v1685 = vld [vmem:[#allocation3 + $0x17] sm:$0x3]
    %v1686 = vld [vmem:[#allocation3 + $0x2f] sm:$0xff]
    %v1687 = vld [vmem:[#allocation3 + $0x37] sm:$0xff]
    %v1688 = vld [vmem:[#allocation3 + $0x3f] sm:$0x3]
    %1692 = vrot.lane.b32.xlu0 %v1686, 8
    %v1693 = vpop.permute.xlu0 %1692
    %1694 = vrot.lane.b32.xlu0 %v1687, 8
    %v1695 = vpop.permute.xlu0 %1694
    %1696 = vrot.lane.b32.xlu0 %v1688, 8
    %v1697 = vpop.permute.xlu0 %1696
    %v1701 = vsel %vm21, %v1683, %v1693
    %v1702 = vsel %vm21, %v1684, %v1695
    %v1703 = vsel %vm21, %v1685, %v1697
    %1705 = vset.pattern.permute.xlu0 0
    %1706 = vperm.xlu0 %1705, %v1680
    %v1707 = vpop.permute.xlu0 %1706
    %1710 = vset.pattern.permute.xlu0 0
    %1711 = vperm.xlu0 %1710, %v1681
    %v1712 = vpop.permute.xlu0 %1711
    %1715 = vset.pattern.permute.xlu0 0
    %1716 = vperm.xlu0 %1715, %v1682
    %v1717 = vpop.permute.xlu0 %1716
    %v1719 = vmul.f32 %v1707, %v1701
    %v1720 = vmul.f32 %v1712, %v1702
    %v1721 = vmul.f32 %v1717, %v1703
    %v1722 = vld [vmem:[%s148] sm:$0xff]
    %v1723 = vld [vmem:[%s148 + $0x8] sm:$0xff]
    %v1724 = vld [vmem:[%s148 + $0x10] sm:$0x3]
    %v1725 = vld [vmem:[#allocation3 + $0x8] sm:$0xff]
    %v1726 = vld [vmem:[#allocation3 + $0x10] sm:$0xff]
    %v1727 = vld [vmem:[#allocation3 + $0x18] sm:$0x3]
    %v1728 = vld [vmem:[#allocation3 + $0x30] sm:$0xff]
    %v1729 = vld [vmem:[#allocation3 + $0x38] sm:$0xff]
    %v1730 = vld [vmem:[#allocation3 + $0x40] sm:$0x3]
    %1734 = vrot.lane.b32.xlu0 %v1728, 8
    %v1735 = vpop.permute.xlu0 %1734
    %1736 = vrot.lane.b32.xlu0 %v1729, 8
    %v1737 = vpop.permute.xlu0 %1736
    %1738 = vrot.lane.b32.xlu0 %v1730, 8
    %v1739 = vpop.permute.xlu0 %1738
    %v1743 = vsel %vm21, %v1725, %v1735
    %v1744 = vsel %vm21, %v1726, %v1737
    %v1745 = vsel %vm21, %v1727, %v1739
    %1747 = vset.pattern.permute.xlu0 0
    %1748 = vperm.xlu0 %1747, %v1722
    %v1749 = vpop.permute.xlu0 %1748
    %1752 = vset.pattern.permute.xlu0 0
    %1753 = vperm.xlu0 %1752, %v1723
    %v1754 = vpop.permute.xlu0 %1753
    %1757 = vset.pattern.permute.xlu0 0
    %1758 = vperm.xlu0 %1757, %v1724
    %v1759 = vpop.permute.xlu0 %1758
    %v1761 = vmul.f32 %v1749, %v1743
    %v1762 = vmul.f32 %v1754, %v1744
    %v1763 = vmul.f32 %v1759, %v1745
    %v1764 = vld [vmem:[%s173] sm:$0xff]
    %v1765 = vld [vmem:[%s173 + $0x8] sm:$0xff]
    %v1766 = vld [vmem:[%s173 + $0x10] sm:$0x3]
    %v1767 = vld [vmem:[#allocation3 + $0x9] sm:$0xff]
    %v1768 = vld [vmem:[#allocation3 + $0x11] sm:$0xff]
    %v1769 = vld [vmem:[#allocation3 + $0x19] sm:$0x3]
    %v1770 = vld [vmem:[#allocation3 + $0x31] sm:$0xff]
    %v1771 = vld [vmem:[#allocation3 + $0x39] sm:$0xff]
    %v1772 = vld [vmem:[#allocation3 + $0x41] sm:$0x3]
    %1776 = vrot.lane.b32.xlu0 %v1770, 8
    %v1777 = vpop.permute.xlu0 %1776
    %1778 = vrot.lane.b32.xlu0 %v1771, 8
    %v1779 = vpop.permute.xlu0 %1778
    %1780 = vrot.lane.b32.xlu0 %v1772, 8
    %v1781 = vpop.permute.xlu0 %1780
    %v1785 = vsel %vm21, %v1767, %v1777
    %v1786 = vsel %vm21, %v1768, %v1779
    %v1787 = vsel %vm21, %v1769, %v1781
    %1789 = vset.pattern.permute.xlu0 0
    %1790 = vperm.xlu0 %1789, %v1764
    %v1791 = vpop.permute.xlu0 %1790
    %1794 = vset.pattern.permute.xlu0 0
    %1795 = vperm.xlu0 %1794, %v1765
    %v1796 = vpop.permute.xlu0 %1795
    %1799 = vset.pattern.permute.xlu0 0
    %1800 = vperm.xlu0 %1799, %v1766
    %v1801 = vpop.permute.xlu0 %1800
    %v1803 = vmul.f32 %v1791, %v1785
    %v1804 = vmul.f32 %v1796, %v1786
    %v1805 = vmul.f32 %v1801, %v1787
    %v1806 = vld [vmem:[%s198] sm:$0xff]
    %v1807 = vld [vmem:[%s198 + $0x8] sm:$0xff]
    %v1808 = vld [vmem:[%s198 + $0x10] sm:$0x3]
    %v1809 = vld [vmem:[#allocation3 + $0xa] sm:$0xff]
    %v1810 = vld [vmem:[#allocation3 + $0x12] sm:$0xff]
    %v1811 = vld [vmem:[#allocation3 + $0x1a] sm:$0x3]
    %v1812 = vld [vmem:[#allocation3 + $0x32] sm:$0xff]
    %v1813 = vld [vmem:[#allocation3 + $0x3a] sm:$0xff]
    %v1814 = vld [vmem:[#allocation3 + $0x42] sm:$0x3]
    %1818 = vrot.lane.b32.xlu0 %v1812, 8
    %v1819 = vpop.permute.xlu0 %1818
    %1820 = vrot.lane.b32.xlu0 %v1813, 8
    %v1821 = vpop.permute.xlu0 %1820
    %1822 = vrot.lane.b32.xlu0 %v1814, 8
    %v1823 = vpop.permute.xlu0 %1822
    %v1827 = vsel %vm21, %v1809, %v1819
    %v1828 = vsel %vm21, %v1810, %v1821
    %v1829 = vsel %vm21, %v1811, %v1823
    %1831 = vset.pattern.permute.xlu0 0
    %1832 = vperm.xlu0 %1831, %v1806
    %v1833 = vpop.permute.xlu0 %1832
    %1836 = vset.pattern.permute.xlu0 0
    %1837 = vperm.xlu0 %1836, %v1807
    %v1838 = vpop.permute.xlu0 %1837
    %1841 = vset.pattern.permute.xlu0 0
    %1842 = vperm.xlu0 %1841, %v1808
    %v1843 = vpop.permute.xlu0 %1842
    %v1845 = vmul.f32 %v1833, %v1827
    %v1846 = vmul.f32 %v1838, %v1828
    %v1847 = vmul.f32 %v1843, %v1829
    %v1848 = vld [vmem:[%s223] sm:$0xff]
    %v1849 = vld [vmem:[%s223 + $0x8] sm:$0xff]
    %v1850 = vld [vmem:[%s223 + $0x10] sm:$0x3]
    %v1851 = vld [vmem:[#allocation3 + $0xb] sm:$0xff]
    %v1852 = vld [vmem:[#allocation3 + $0x13] sm:$0xff]
    %v1853 = vld [vmem:[#allocation3 + $0x1b] sm:$0x3]
    %v1854 = vld [vmem:[#allocation3 + $0x33] sm:$0xff]
    %v1855 = vld [vmem:[#allocation3 + $0x3b] sm:$0xff]
    %v1856 = vld [vmem:[#allocation3 + $0x43] sm:$0x3]
    %1860 = vrot.lane.b32.xlu0 %v1854, 8
    %v1861 = vpop.permute.xlu0 %1860
    %1862 = vrot.lane.b32.xlu0 %v1855, 8
    %v1863 = vpop.permute.xlu0 %1862
    %1864 = vrot.lane.b32.xlu0 %v1856, 8
    %v1865 = vpop.permute.xlu0 %1864
    %v1869 = vsel %vm21, %v1851, %v1861
    %v1870 = vsel %vm21, %v1852, %v1863
    %v1871 = vsel %vm21, %v1853, %v1865
    %1873 = vset.pattern.permute.xlu0 0
    %1874 = vperm.xlu0 %1873, %v1848
    %v1875 = vpop.permute.xlu0 %1874
    %1878 = vset.pattern.permute.xlu0 0
    %1879 = vperm.xlu0 %1878, %v1849
    %v1880 = vpop.permute.xlu0 %1879
    %1883 = vset.pattern.permute.xlu0 0
    %1884 = vperm.xlu0 %1883, %v1850
    %v1885 = vpop.permute.xlu0 %1884
    %v1887 = vmul.f32 %v1875, %v1869
    %v1888 = vmul.f32 %v1880, %v1870
    %v1889 = vmul.f32 %v1885, %v1871
    %v1890 = vld [vmem:[%s248] sm:$0xff]
    %v1891 = vld [vmem:[%s248 + $0x8] sm:$0xff]
    %v1892 = vld [vmem:[%s248 + $0x10] sm:$0x3]
    %v1893 = vld [vmem:[#allocation3 + $0xc] sm:$0xff]
    %v1894 = vld [vmem:[#allocation3 + $0x14] sm:$0xff]
    %v1895 = vld [vmem:[#allocation3 + $0x1c] sm:$0x3]
    %v1896 = vld [vmem:[#allocation3 + $0x34] sm:$0xff]
    %v1897 = vld [vmem:[#allocation3 + $0x3c] sm:$0xff]
    %v1898 = vld [vmem:[#allocation3 + $0x44] sm:$0x3]
    %1902 = vrot.lane.b32.xlu0 %v1896, 8
    %v1903 = vpop.permute.xlu0 %1902
    %1904 = vrot.lane.b32.xlu0 %v1897, 8
    %v1905 = vpop.permute.xlu0 %1904
    %1906 = vrot.lane.b32.xlu0 %v1898, 8
    %v1907 = vpop.permute.xlu0 %1906
    %v1911 = vsel %vm21, %v1893, %v1903
    %v1912 = vsel %vm21, %v1894, %v1905
    %v1913 = vsel %vm21, %v1895, %v1907
    %1915 = vset.pattern.permute.xlu0 0
    %1916 = vperm.xlu0 %1915, %v1890
    %v1917 = vpop.permute.xlu0 %1916
    %1920 = vset.pattern.permute.xlu0 0
    %1921 = vperm.xlu0 %1920, %v1891
    %v1922 = vpop.permute.xlu0 %1921
    %1925 = vset.pattern.permute.xlu0 0
    %1926 = vperm.xlu0 %1925, %v1892
    %v1927 = vpop.permute.xlu0 %1926
    %v1929 = vmul.f32 %v1917, %v1911
    %v1930 = vmul.f32 %v1922, %v1912
    %v1931 = vmul.f32 %v1927, %v1913
    %1935 = vrot.lane.b32.xlu0 %v1635, 16
    %v1936 = vpop.permute.xlu0 %1935
    %1937 = vrot.lane.b32.xlu0 %v1636, 16
    %v1938 = vpop.permute.xlu0 %1937
    %1939 = vrot.lane.b32.xlu0 %v1637, 16
    %v1940 = vpop.permute.xlu0 %1939
    %1947 = vrot.lane.b32.xlu0 %v1677, 32
    %v1948 = vpop.permute.xlu0 %1947
    %1949 = vrot.lane.b32.xlu0 %v1678, 32
    %v1950 = vpop.permute.xlu0 %1949
    %1951 = vrot.lane.b32.xlu0 %v1679, 32
    %v1952 = vpop.permute.xlu0 %1951
    %1959 = vrot.lane.b32.xlu0 %v1719, 48
    %v1960 = vpop.permute.xlu0 %1959
    %1961 = vrot.lane.b32.xlu0 %v1720, 48
    %v1962 = vpop.permute.xlu0 %1961
    %1963 = vrot.lane.b32.xlu0 %v1721, 48
    %v1964 = vpop.permute.xlu0 %1963
    %1971 = vrot.lane.b32.xlu0 %v1761, 64
    %v1972 = vpop.permute.xlu0 %1971
    %1973 = vrot.lane.b32.xlu0 %v1762, 64
    %v1974 = vpop.permute.xlu0 %1973
    %1975 = vrot.lane.b32.xlu0 %v1763, 64
    %v1976 = vpop.permute.xlu0 %1975
    %1983 = vrot.lane.b32.xlu0 %v1803, 80
    %v1984 = vpop.permute.xlu0 %1983
    %1985 = vrot.lane.b32.xlu0 %v1804, 80
    %v1986 = vpop.permute.xlu0 %1985
    %1987 = vrot.lane.b32.xlu0 %v1805, 80
    %v1988 = vpop.permute.xlu0 %1987
    %1995 = vrot.lane.b32.xlu0 %v1845, 96
    %v1996 = vpop.permute.xlu0 %1995
    %1997 = vrot.lane.b32.xlu0 %v1846, 96
    %v1998 = vpop.permute.xlu0 %1997
    %1999 = vrot.lane.b32.xlu0 %v1847, 96
    %v2000 = vpop.permute.xlu0 %1999
    %2007 = vrot.lane.b32.xlu0 %v1887, 112
    %v2008 = vpop.permute.xlu0 %2007
    %2009 = vrot.lane.b32.xlu0 %v1888, 112
    %v2010 = vpop.permute.xlu0 %2009
    %2011 = vrot.lane.b32.xlu0 %v1889, 112
    %v2012 = vpop.permute.xlu0 %2011
    %v2016 = vsel %vm874, %v1593, %v1936
    %v2017 = vsel %vm874, %v1594, %v1938
    %v2018 = vsel %vm874, %v1595, %v1940
    %v2019 = vsel %vm881, %v2016, %v1948
    %v2020 = vsel %vm881, %v2017, %v1950
    %v2021 = vsel %vm881, %v2018, %v1952
    %v2022 = vsel %vm889, %v2019, %v1960
    %v2023 = vsel %vm889, %v2020, %v1962
    %v2024 = vsel %vm889, %v2021, %v1964
    %v2025 = vsel %vm897, %v2022, %v1972
    %v2026 = vsel %vm897, %v2023, %v1974
    %v2027 = vsel %vm897, %v2024, %v1976
    %vm2028 = vcmask 654336
    %v2029 = vsel %vm2028, %v2025, %v1984
    %v2030 = vsel %vm2028, %v2026, %v1986
    %v2031 = vsel %vm2028, %v2027, %v1988
    %vm2032 = vcmask 785408
    %v2033 = vsel %vm2032, %v2029, %v1996
    %v2034 = vsel %vm2032, %v2030, %v1998
    %v2035 = vsel %vm2032, %v2031, %v2000
    %vm2036 = vcmask 916480
    %v2037 = vsel %vm2036, %v2033, %v2008
    %v2038 = vsel %vm2036, %v2034, %v2010
    %v2039 = vsel %vm2036, %v2035, %v2012
    %v2040 = vld [vmem:[%s2 + $0xe0] sm:$0xff]
    %v2041 = vld [vmem:[%s2 + $0xe8] sm:$0xff]
    %v2042 = vld [vmem:[%s2 + $0xf0] sm:$0xff]
    %v2043 = vld [vmem:[%s2 + $0xf8] sm:$0xff]
    %v2044 = vld [vmem:[%s2 + $0x100] sm:$0xff]
    %v2045 = vld [vmem:[%s2 + $0x108] sm:$0xff]
    %v2046 = vld [vmem:[%s2 + $0x110] sm:$0xff]
    %v2047 = vld [vmem:[%s2 + $0x118] sm:$0xff]
    %v2048 = vld [vmem:[%s2 + $0x120] sm:$0xff]
    %v2049 = vld [vmem:[%s2 + $0x128] sm:$0xff]
    %v2050 = vld [vmem:[%s2 + $0x130] sm:$0xff]
    %v2051 = vld [vmem:[%s2 + $0x138] sm:$0xff]
    %v2052 = vld [vmem:[%s2 + $0x140] sm:$0xff]
    %v2053 = vld [vmem:[%s2 + $0x148] sm:$0xff]
    %v2054 = vld [vmem:[%s2 + $0x150] sm:$0xff]
    %v2055 = vld [vmem:[%s2 + $0x158] sm:$0xff]
    %v2056 = vld [vmem:[%s2 + $0x160] sm:$0xff]
    %v2057 = vld [vmem:[%s2 + $0x168] sm:$0xff]
    %v2059 = vsel %vm874, %v1929, 0
    %v2062 = vsel %vm874, %v1930, 0
    %v2065 = vsel %vm874, %v1931, 0
    %2067 = vmatprep.subr.mxu0 0.0
    %2068 = vmatpush1.msra.mxu0 %v2040
    %2069 = vmatprep.subr.mxu0 0.0
    %2070 = vmatpush1.msra.mxu0 %v2041
    %2071 = vmatprep.subr.mxu0 0.0
    %2072 = vmatpush1.msra.mxu0 %v2042
    %2073 = vmatprep.subr.mxu0 0.0
    %2074 = vmatpush1.msra.mxu0 %v2043
    %2075 = vmatprep.subr.mxu0 0.0
    %2076 = vmatpush1.msra.mxu0 %v2044
    %2077 = vmatprep.subr.mxu0 0.0
    %2078 = vmatpush1.msra.mxu0 %v2045
    %2079 = vmatprep.subr.mxu0 0.0
    %2080 = vmatpush1.msra.mxu0 %v2046
    %2081 = vmatprep.subr.mxu0 0.0
    %2082 = vmatpush1.msra.mxu0 %v2047
    %2083 = vmatprep.subr.mxu0 0.0
    %2084 = vmatpush1.msra.mxu0 %v2048
    %2085 = vmatprep.subr.mxu0 0.0
    %2086 = vmatpush1.msra.mxu0 %v2049
    %2087 = vmatprep.subr.mxu0 0.0
    %2088 = vmatpush1.msra.mxu0 %v2050
    %2089 = vmatprep.subr.mxu0 0.0
    %2090 = vmatpush1.msra.mxu0 %v2051
    %2091 = vmatprep.subr.mxu0 0.0
    %2092 = vmatpush1.msra.mxu0 %v2052
    %2093 = vmatprep.subr.mxu0 0.0
    %2094 = vmatpush1.msra.mxu0 %v2053
    %2095 = vmatprep.subr.mxu0 0.0
    %2096 = vmatpush1.msra.mxu0 %v2054
    %2097 = vmatprep.subr.mxu0 0.0
    %2098 = vmatpush1.msra.mxu0 %v2055
    %2099 = vmatprep.subr.mxu0 0.0
    %2100 = vmatpush1.msra.mxu0 %v2056
    %2101 = vmatprep.subr.mxu0 0.0
    %2102 = vmatpush1.msra.mxu0 %v2057
    %2103 = vmatprep.subr.mxu0 0.0
    %2104 = vmatpush1.msra.mxu0 0.0
    %2105 = vmatprep.subr.mxu0 0.0
    %2106 = vmatpush1.msra.mxu0 0.0
    %2107 = vmatprep.subr.mxu0 0.0
    %2108 = vmatpush1.msra.mxu0 0.0
    %2109 = vmatprep.subr.mxu0 0.0
    %2110 = vmatpush1.msra.mxu0 0.0
    %2111 = vmatprep.subr.mxu0 0.0
    %2112 = vmatpush1.msra.mxu0 0.0
    %2113 = vmatprep.subr.mxu0 0.0
    %2114 = vmatpush1.msra.mxu0 0.0
    %2115 = vmatprep.subr.mxu0 0.0
    %2116 = vmatpush1.msra.mxu0 0.0
    %2117 = vmatprep.subr.mxu0 0.0
    %2118 = vmatpush1.msra.mxu0 0.0
    %2119 = vmatprep.subr.mxu0 0.0
    %2120 = vmatpush1.msra.mxu0 0.0
    %2121 = vmatprep.subr.mxu0 0.0
    %2122 = vmatpush1.msra.mxu0 0.0
    %2123 = vmatprep.subr.mxu0 0.0
    %2124 = vmatpush1.msra.mxu0 0.0
    %2125 = vmatprep.subr.mxu0 0.0
    %2126 = vmatpush1.msra.mxu0 0.0
    %2127 = vmatprep.subr.mxu0 0.0
    %2128 = vmatpush1.msra.mxu0 0.0
    %2129 = vmatprep.subr.mxu0 0.0
    %2130 = vmatpush1.msra.mxu0 0.0
    %2131 = vmatprep.mubr.f32.mxu0 %v2059
    %2132 = vmatmul.mubr.f32.gmra.mrb[0].mxu0 %v2037
    %v2133 = vpop.f32.mrb[0].mxu0
    %v2134 = vadd.f32 0.0, %v2133
    %v2135 = vpop.f32.mrb[0].mxu0
    %2136 = vmatprep.mubr.f32.mxu0 %v2062
    %2137 = vmatmul.mubr.f32.gmra.mrb[0].mxu0 %v2038
    %v2138 = vpop.f32.mrb[0].mxu0
    %v2139 = vadd.f32 0.0, %v2138
    %v2140 = vpop.f32.mrb[0].mxu0
    %2141 = vmatprep.mubr.f32.mxu0 %v2065
    %2142 = vmatmul.mubr.f32.gmra.mrb[0].mxu0 %v2039
    %v2143 = vpop.f32.mrb[0].mxu0
    %v2144 = vadd.f32 0.0, %v2143
    %v2145 = vpop.f32.mrb[0].mxu0
    %2146 = vdwg.mxu0
    %v2147 = vsel %vm21, %v2134, 0.0
    %v2148 = vsel %vm21, %v2139, 0.0
    %v2149 = vadd.f32 %v2147, %v2148
    %v2150 = vsel %vm501, %v2144, 0.0
    %v2151 = vadd.f32 %v2149, %v2150
    %v2152 = vrot.slane %v2151, 4
    %v2153 = vadd.f32 %v2151, %v2152
    %v2154 = vrot.slane %v2153, 2
    %v2155 = vadd.f32 %v2153, %v2154
    %v2156 = vrot.slane %v2155, 1
    %v2157 = vadd.f32 %v2155, %v2156
    %v2158 = vmul.f32 %v2134, %v2134
    %v2159 = vmul.f32 %v2139, %v2139
    %v2160 = vmul.f32 %v2144, %v2144
    %v2161 = vsel %vm21, %v2158, 0.0
    %v2162 = vsel %vm21, %v2159, 0.0
    %v2163 = vadd.f32 %v2161, %v2162
    %v2164 = vsel %vm501, %v2160, 0.0
    %v2165 = vadd.f32 %v2163, %v2164
    %v2166 = vrot.slane %v2165, 4
    %v2167 = vadd.f32 %v2165, %v2166
    %v2168 = vrot.slane %v2167, 2
    %v2169 = vadd.f32 %v2167, %v2168
    %v2170 = vrot.slane %v2169, 1
    %v2171 = vadd.f32 %v2169, %v2170
    %v2172 = vmul.f32 %v2157, 0.055555556
    %v2173 = vmul.f32 %v2171, 0.055555556
    %v2174 = vmul.f32 %v2172, %v2172
    %v2175 = vsub.f32 %v2173, %v2174
    %v2176 = vmax.f32 %v2175, 0.0
    %v2177 = vsub.f32 %v2134, %v2172
    %v2178 = vsub.f32 %v2139, %v2172
    %v2179 = vsub.f32 %v2144, %v2172
    %v2180 = vadd.f32 %v2176, 1e-05
    %v2181 = vrsqrt.pop %v2180
    %v2182 = vmul.f32 %v2177, %v2181
    %v2183 = vmul.f32 %v2178, %v2181
    %v2184 = vmul.f32 %v2179, %v2181
    %v2185 = vld [vmem:[%s2 + $0x170] sm:$0x1]
    %v2186 = vlaneseq
    %v2187 = vshrl.u32 %v2186, 7
    %v2188 = vsub.s32 0, %v2187
    %v2189 = vrot.slane %v2185, %v2188
    %v2190 = vmul.f32 %v2182, %v2189
    %v2191 = vmul.f32 %v2183, %v2189
    %v2192 = vmul.f32 %v2184, %v2189
    %v2193 = vld [vmem:[%s2 + $0x178] sm:$0x1]
    %v2194 = vlaneseq
    %v2195 = vshrl.u32 %v2194, 7
    %v2196 = vsub.s32 0, %v2195
    %v2197 = vrot.slane %v2193, %v2196
    %v2198 = vadd.f32 %v2190, %v2197
    %v2199 = vadd.f32 %v2191, %v2197
    %v2200 = vadd.f32 %v2192, %v2197
    %v2201 = vmax.f32 %v2198, 0.0
    %v2202 = vmax.f32 %v2199, 0.0
    %v2203 = vmax.f32 %v2200, 0.0
    %2204 = vst.msk [vmem:[#allocation4 + $0x8] sm:$0xff] %vm21, %v2201
    %2205 = vst.msk [vmem:[#allocation4 + $0x10] sm:$0xff] %vm21, %v2202
    %2206 = vst.msk [vmem:[#allocation4 + $0x18] sm:$0x3] %vm501, %v2203
    %v2207 = vld [vmem:[%s0] sm:$0xff]
    %v2208 = vld [vmem:[%s0 + $0x8] sm:$0xff]
    %v2209 = vld [vmem:[%s0 + $0x10] sm:$0x3]
    %v2210 = vld [vmem:[#allocation4 + $0x4] sm:$0xff]
    %v2211 = vld [vmem:[#allocation4 + $0xc] sm:$0xff]
    %v2212 = vld [vmem:[#allocation4 + $0x14] sm:$0x3]
    %2214 = vset.pattern.permute.xlu0 0
    %2215 = vperm.xlu0 %2214, %v2207
    %v2216 = vpop.permute.xlu0 %2215
    %2219 = vset.pattern.permute.xlu0 0
    %2220 = vperm.xlu0 %2219, %v2208
    %v2221 = vpop.permute.xlu0 %2220
    %2224 = vset.pattern.permute.xlu0 0
    %2225 = vperm.xlu0 %2224, %v2209
    %v2226 = vpop.permute.xlu0 %2225
    %v2228 = vmul.f32 %v2216, %v2210
    %v2229 = vmul.f32 %v2221, %v2211
    %v2230 = vmul.f32 %v2226, %v2212
    %v2231 = vld [vmem:[%s73] sm:$0xff]
    %v2232 = vld [vmem:[%s73 + $0x8] sm:$0xff]
    %v2233 = vld [vmem:[%s73 + $0x10] sm:$0x3]
    %v2234 = vld [vmem:[#allocation4 + $0x5] sm:$0xff]
    %v2235 = vld [vmem:[#allocation4 + $0xd] sm:$0xff]
    %v2236 = vld [vmem:[#allocation4 + $0x15] sm:$0x3]
    %2238 = vset.pattern.permute.xlu0 0
    %2239 = vperm.xlu0 %2238, %v2231
    %v2240 = vpop.permute.xlu0 %2239
    %2243 = vset.pattern.permute.xlu0 0
    %2244 = vperm.xlu0 %2243, %v2232
    %v2245 = vpop.permute.xlu0 %2244
    %2248 = vset.pattern.permute.xlu0 0
    %2249 = vperm.xlu0 %2248, %v2233
    %v2250 = vpop.permute.xlu0 %2249
    %v2252 = vmul.f32 %v2240, %v2234
    %v2253 = vmul.f32 %v2245, %v2235
    %v2254 = vmul.f32 %v2250, %v2236
    %v2255 = vld [vmem:[%s98] sm:$0xff]
    %v2256 = vld [vmem:[%s98 + $0x8] sm:$0xff]
    %v2257 = vld [vmem:[%s98 + $0x10] sm:$0x3]
    %v2258 = vld [vmem:[#allocation4 + $0x6] sm:$0xff]
    %v2259 = vld [vmem:[#allocation4 + $0xe] sm:$0xff]
    %v2260 = vld [vmem:[#allocation4 + $0x16] sm:$0x3]
    %2262 = vset.pattern.permute.xlu0 0
    %2263 = vperm.xlu0 %2262, %v2255
    %v2264 = vpop.permute.xlu0 %2263
    %2267 = vset.pattern.permute.xlu0 0
    %2268 = vperm.xlu0 %2267, %v2256
    %v2269 = vpop.permute.xlu0 %2268
    %2272 = vset.pattern.permute.xlu0 0
    %2273 = vperm.xlu0 %2272, %v2257
    %v2274 = vpop.permute.xlu0 %2273
    %v2276 = vmul.f32 %v2264, %v2258
    %v2277 = vmul.f32 %v2269, %v2259
    %v2278 = vmul.f32 %v2274, %v2260
    %v2279 = vld [vmem:[%s123] sm:$0xff]
    %v2280 = vld [vmem:[%s123 + $0x8] sm:$0xff]
    %v2281 = vld [vmem:[%s123 + $0x10] sm:$0x3]
    %v2282 = vld [vmem:[#allocation4 + $0x7] sm:$0xff]
    %v2283 = vld [vmem:[#allocation4 + $0xf] sm:$0xff]
    %v2284 = vld [vmem:[#allocation4 + $0x17] sm:$0x3]
    %2286 = vset.pattern.permute.xlu0 0
    %2287 = vperm.xlu0 %2286, %v2279
    %v2288 = vpop.permute.xlu0 %2287
    %2291 = vset.pattern.permute.xlu0 0
    %2292 = vperm.xlu0 %2291, %v2280
    %v2293 = vpop.permute.xlu0 %2292
    %2296 = vset.pattern.permute.xlu0 0
    %2297 = vperm.xlu0 %2296, %v2281
    %v2298 = vpop.permute.xlu0 %2297
    %v2300 = vmul.f32 %v2288, %v2282
    %v2301 = vmul.f32 %v2293, %v2283
    %v2302 = vmul.f32 %v2298, %v2284
    %v2303 = vld [vmem:[%s148] sm:$0xff]
    %v2304 = vld [vmem:[%s148 + $0x8] sm:$0xff]
    %v2305 = vld [vmem:[%s148 + $0x10] sm:$0x3]
    %v2306 = vld [vmem:[#allocation4 + $0x8] sm:$0xff]
    %v2307 = vld [vmem:[#allocation4 + $0x10] sm:$0xff]
    %v2308 = vld [vmem:[#allocation4 + $0x18] sm:$0x3]
    %2310 = vset.pattern.permute.xlu0 0
    %2311 = vperm.xlu0 %2310, %v2303
    %v2312 = vpop.permute.xlu0 %2311
    %2315 = vset.pattern.permute.xlu0 0
    %2316 = vperm.xlu0 %2315, %v2304
    %v2317 = vpop.permute.xlu0 %2316
    %2320 = vset.pattern.permute.xlu0 0
    %2321 = vperm.xlu0 %2320, %v2305
    %v2322 = vpop.permute.xlu0 %2321
    %v2324 = vmul.f32 %v2312, %v2306
    %v2325 = vmul.f32 %v2317, %v2307
    %v2326 = vmul.f32 %v2322, %v2308
    %v2327 = vld [vmem:[%s173] sm:$0xff]
    %v2328 = vld [vmem:[%s173 + $0x8] sm:$0xff]
    %v2329 = vld [vmem:[%s173 + $0x10] sm:$0x3]
    %v2330 = vld [vmem:[#allocation4 + $0x9] sm:$0xff]
    %v2331 = vld [vmem:[#allocation4 + $0x11] sm:$0xff]
    %v2332 = vld [vmem:[#allocation4 + $0x19] sm:$0x3]
    %2334 = vset.pattern.permute.xlu0 0
    %2335 = vperm.xlu0 %2334, %v2327
    %v2336 = vpop.permute.xlu0 %2335
    %2339 = vset.pattern.permute.xlu0 0
    %2340 = vperm.xlu0 %2339, %v2328
    %v2341 = vpop.permute.xlu0 %2340
    %2344 = vset.pattern.permute.xlu0 0
    %2345 = vperm.xlu0 %2344, %v2329
    %v2346 = vpop.permute.xlu0 %2345
    %v2348 = vmul.f32 %v2336, %v2330
    %v2349 = vmul.f32 %v2341, %v2331
    %v2350 = vmul.f32 %v2346, %v2332
    %v2351 = vld [vmem:[%s198] sm:$0xff]
    %v2352 = vld [vmem:[%s198 + $0x8] sm:$0xff]
    %v2353 = vld [vmem:[%s198 + $0x10] sm:$0x3]
    %v2354 = vld [vmem:[#allocation4 + $0xa] sm:$0xff]
    %v2355 = vld [vmem:[#allocation4 + $0x12] sm:$0xff]
    %v2356 = vld [vmem:[#allocation4 + $0x1a] sm:$0x3]
    %2358 = vset.pattern.permute.xlu0 0
    %2359 = vperm.xlu0 %2358, %v2351
    %v2360 = vpop.permute.xlu0 %2359
    %2363 = vset.pattern.permute.xlu0 0
    %2364 = vperm.xlu0 %2363, %v2352
    %v2365 = vpop.permute.xlu0 %2364
    %2368 = vset.pattern.permute.xlu0 0
    %2369 = vperm.xlu0 %2368, %v2353
    %v2370 = vpop.permute.xlu0 %2369
    %v2372 = vmul.f32 %v2360, %v2354
    %v2373 = vmul.f32 %v2365, %v2355
    %v2374 = vmul.f32 %v2370, %v2356
    %v2375 = vld [vmem:[%s223] sm:$0xff]
    %v2376 = vld [vmem:[%s223 + $0x8] sm:$0xff]
    %v2377 = vld [vmem:[%s223 + $0x10] sm:$0x3]
    %v2378 = vld [vmem:[#allocation4 + $0xb] sm:$0xff]
    %v2379 = vld [vmem:[#allocation4 + $0x13] sm:$0xff]
    %v2380 = vld [vmem:[#allocation4 + $0x1b] sm:$0x3]
    %2382 = vset.pattern.permute.xlu0 0
    %2383 = vperm.xlu0 %2382, %v2375
    %v2384 = vpop.permute.xlu0 %2383
    %2387 = vset.pattern.permute.xlu0 0
    %2388 = vperm.xlu0 %2387, %v2376
    %v2389 = vpop.permute.xlu0 %2388
    %2392 = vset.pattern.permute.xlu0 0
    %2393 = vperm.xlu0 %2392, %v2377
    %v2394 = vpop.permute.xlu0 %2393
    %v2396 = vmul.f32 %v2384, %v2378
    %v2397 = vmul.f32 %v2389, %v2379
    %v2398 = vmul.f32 %v2394, %v2380
    %v2399 = vld [vmem:[%s248] sm:$0xff]
    %v2400 = vld [vmem:[%s248 + $0x8] sm:$0xff]
    %v2401 = vld [vmem:[%s248 + $0x10] sm:$0x3]
    %v2402 = vld [vmem:[#allocation4 + $0xc] sm:$0xff]
    %v2403 = vld [vmem:[#allocation4 + $0x14] sm:$0xff]
    %v2404 = vld [vmem:[#allocation4 + $0x1c] sm:$0x3]
    %2406 = vset.pattern.permute.xlu0 0
    %2407 = vperm.xlu0 %2406, %v2399
    %v2408 = vpop.permute.xlu0 %2407
    %2411 = vset.pattern.permute.xlu0 0
    %2412 = vperm.xlu0 %2411, %v2400
    %v2413 = vpop.permute.xlu0 %2412
    %2416 = vset.pattern.permute.xlu0 0
    %2417 = vperm.xlu0 %2416, %v2401
    %v2418 = vpop.permute.xlu0 %2417
    %v2420 = vmul.f32 %v2408, %v2402
    %v2421 = vmul.f32 %v2413, %v2403
    %v2422 = vmul.f32 %v2418, %v2404
    %2426 = vrot.lane.b32.xlu0 %v2252, 8
    %v2427 = vpop.permute.xlu0 %2426
    %2428 = vrot.lane.b32.xlu0 %v2253, 8
    %v2429 = vpop.permute.xlu0 %2428
    %2430 = vrot.lane.b32.xlu0 %v2254, 8
    %v2431 = vpop.permute.xlu0 %2430
    %2438 = vrot.lane.b32.xlu0 %v2276, 16
    %v2439 = vpop.permute.xlu0 %2438
    %2440 = vrot.lane.b32.xlu0 %v2277, 16
    %v2441 = vpop.permute.xlu0 %2440
    %2442 = vrot.lane.b32.xlu0 %v2278, 16
    %v2443 = vpop.permute.xlu0 %2442
    %2450 = vrot.lane.b32.xlu0 %v2300, 24
    %v2451 = vpop.permute.xlu0 %2450
    %2452 = vrot.lane.b32.xlu0 %v2301, 24
    %v2453 = vpop.permute.xlu0 %2452
    %2454 = vrot.lane.b32.xlu0 %v2302, 24
    %v2455 = vpop.permute.xlu0 %2454
    %2462 = vrot.lane.b32.xlu0 %v2324, 32
    %v2463 = vpop.permute.xlu0 %2462
    %2464 = vrot.lane.b32.xlu0 %v2325, 32
    %v2465 = vpop.permute.xlu0 %2464
    %2466 = vrot.lane.b32.xlu0 %v2326, 32
    %v2467 = vpop.permute.xlu0 %2466
    %2474 = vrot.lane.b32.xlu0 %v2348, 40
    %v2475 = vpop.permute.xlu0 %2474
    %2476 = vrot.lane.b32.xlu0 %v2349, 40
    %v2477 = vpop.permute.xlu0 %2476
    %2478 = vrot.lane.b32.xlu0 %v2350, 40
    %v2479 = vpop.permute.xlu0 %2478
    %2486 = vrot.lane.b32.xlu0 %v2372, 48
    %v2487 = vpop.permute.xlu0 %2486
    %2488 = vrot.lane.b32.xlu0 %v2373, 48
    %v2489 = vpop.permute.xlu0 %2488
    %2490 = vrot.lane.b32.xlu0 %v2374, 48
    %v2491 = vpop.permute.xlu0 %2490
    %2498 = vrot.lane.b32.xlu0 %v2396, 56
    %v2499 = vpop.permute.xlu0 %2498
    %2500 = vrot.lane.b32.xlu0 %v2397, 56
    %v2501 = vpop.permute.xlu0 %2500
    %2502 = vrot.lane.b32.xlu0 %v2398, 56
    %v2503 = vpop.permute.xlu0 %2502
    %2510 = vrot.lane.b32.xlu0 %v2420, 64
    %v2511 = vpop.permute.xlu0 %2510
    %2512 = vrot.lane.b32.xlu0 %v2421, 64
    %v2513 = vpop.permute.xlu0 %2512
    %2514 = vrot.lane.b32.xlu0 %v2422, 64
    %v2515 = vpop.permute.xlu0 %2514
    %v2519 = vsel %vm21, %v2228, %v2427
    %v2520 = vsel %vm21, %v2229, %v2429
    %v2521 = vsel %vm21, %v2230, %v2431
    %v2522 = vsel %vm874, %v2519, %v2439
    %v2523 = vsel %vm874, %v2520, %v2441
    %v2524 = vsel %vm874, %v2521, %v2443
    %v2525 = vsel %vm396, %v2522, %v2451
    %v2526 = vsel %vm396, %v2523, %v2453
    %v2527 = vsel %vm396, %v2524, %v2455
    %v2528 = vsel %vm881, %v2525, %v2463
    %v2529 = vsel %vm881, %v2526, %v2465
    %v2530 = vsel %vm881, %v2527, %v2467
    %v2531 = vsel %vm885, %v2528, %v2475
    %v2532 = vsel %vm885, %v2529, %v2477
    %v2533 = vsel %vm885, %v2530, %v2479
    %v2534 = vsel %vm889, %v2531, %v2487
    %v2535 = vsel %vm889, %v2532, %v2489
    %v2536 = vsel %vm889, %v2533, %v2491
    %v2537 = vsel %vm893, %v2534, %v2499
    %v2538 = vsel %vm893, %v2535, %v2501
    %v2539 = vsel %vm893, %v2536, %v2503
    %v2540 = vsel %vm897, %v2537, %v2511
    %v2541 = vsel %vm897, %v2538, %v2513
    %v2542 = vsel %vm897, %v2539, %v2515
    %v2543 = vld [vmem:[%s2 + $0x180] sm:$0xff]
    %v2544 = vld [vmem:[%s2 + $0x188] sm:$0xff]
    %v2545 = vld [vmem:[%s2 + $0x190] sm:$0xff]
    %v2546 = vld [vmem:[%s2 + $0x198] sm:$0xff]
    %v2547 = vld [vmem:[%s2 + $0x1a0] sm:$0xff]
    %v2548 = vld [vmem:[%s2 + $0x1a8] sm:$0xff]
    %v2549 = vld [vmem:[%s2 + $0x1b0] sm:$0xff]
    %v2550 = vld [vmem:[%s2 + $0x1b8] sm:$0xff]
    %v2551 = vld [vmem:[%s2 + $0x1c0] sm:$0xff]
    %v2553 = vsel %vm910, %v2540, 0
    %v2556 = vsel %vm910, %v2541, 0
    %v2559 = vsel %vm910, %v2542, 0
    %2561 = vmatprep.subr.mxu0 0.0
    %2562 = vmatpush1.msra.mxu0 %v2543
    %2563 = vmatprep.subr.mxu0 0.0
    %2564 = vmatpush1.msra.mxu0 %v2544
    %2565 = vmatprep.subr.mxu0 0.0
    %2566 = vmatpush1.msra.mxu0 %v2545
    %2567 = vmatprep.subr.mxu0 0.0
    %2568 = vmatpush1.msra.mxu0 %v2546
    %2569 = vmatprep.subr.mxu0 0.0
    %2570 = vmatpush1.msra.mxu0 %v2547
    %2571 = vmatprep.subr.mxu0 0.0
    %2572 = vmatpush1.msra.mxu0 %v2548
    %2573 = vmatprep.subr.mxu0 0.0
    %2574 = vmatpush1.msra.mxu0 %v2549
    %2575 = vmatprep.subr.mxu0 0.0
    %2576 = vmatpush1.msra.mxu0 %v2550
    %2577 = vmatprep.subr.mxu0 0.0
    %2578 = vmatpush1.msra.mxu0 %v2551
    %2579 = vmatprep.subr.mxu0 0.0
    %2580 = vmatpush1.msra.mxu0 0.0
    %2581 = vmatprep.subr.mxu0 0.0
    %2582 = vmatpush1.msra.mxu0 0.0
    %2583 = vmatprep.subr.mxu0 0.0
    %2584 = vmatpush1.msra.mxu0 0.0
    %2585 = vmatprep.subr.mxu0 0.0
    %2586 = vmatpush1.msra.mxu0 0.0
    %2587 = vmatprep.subr.mxu0 0.0
    %2588 = vmatpush1.msra.mxu0 0.0
    %2589 = vmatprep.subr.mxu0 0.0
    %2590 = vmatpush1.msra.mxu0 0.0
    %2591 = vmatprep.subr.mxu0 0.0
    %2592 = vmatpush1.msra.mxu0 0.0
    %2593 = vmatprep.subr.mxu0 0.0
    %2594 = vmatpush1.msra.mxu0 0.0
    %2595 = vmatprep.subr.mxu0 0.0
    %2596 = vmatpush1.msra.mxu0 0.0
    %2597 = vmatprep.subr.mxu0 0.0
    %2598 = vmatpush1.msra.mxu0 0.0
    %2599 = vmatprep.subr.mxu0 0.0
    %2600 = vmatpush1.msra.mxu0 0.0
    %2601 = vmatprep.subr.mxu0 0.0
    %2602 = vmatpush1.msra.mxu0 0.0
    %2603 = vmatprep.subr.mxu0 0.0
    %2604 = vmatpush1.msra.mxu0 0.0
    %2605 = vmatprep.subr.mxu0 0.0
    %2606 = vmatpush1.msra.mxu0 0.0
    %2607 = vmatprep.subr.mxu0 0.0
    %2608 = vmatpush1.msra.mxu0 0.0
    %2609 = vmatprep.subr.mxu0 0.0
    %2610 = vmatpush1.msra.mxu0 0.0
    %2611 = vmatprep.subr.mxu0 0.0
    %2612 = vmatpush1.msra.mxu0 0.0
    %2613 = vmatprep.subr.mxu0 0.0
    %2614 = vmatpush1.msra.mxu0 0.0
    %2615 = vmatprep.subr.mxu0 0.0
    %2616 = vmatpush1.msra.mxu0 0.0
    %2617 = vmatprep.subr.mxu0 0.0
    %2618 = vmatpush1.msra.mxu0 0.0
    %2619 = vmatprep.subr.mxu0 0.0
    %2620 = vmatpush1.msra.mxu0 0.0
    %2621 = vmatprep.subr.mxu0 0.0
    %2622 = vmatpush1.msra.mxu0 0.0
    %2623 = vmatprep.subr.mxu0 0.0
    %2624 = vmatpush1.msra.mxu0 0.0
    %2625 = vmatprep.mubr.f32.mxu0 0.0
    %2626 = vmatmul.mubr.f32.gmra.mrb[0].mxu0 %v2553
    %v2627 = vpop.f32.mrb[0].mxu0
    %v2628 = vadd.f32 0.0, %v2627
    %v2629 = vpop.f32.mrb[0].mxu0
    %2630 = vmatprep.mubr.f32.mxu0 0.0
    %2631 = vmatmul.mubr.f32.gmra.mrb[0].mxu0 %v2556
    %v2632 = vpop.f32.mrb[0].mxu0
    %v2633 = vadd.f32 0.0, %v2632
    %v2634 = vpop.f32.mrb[0].mxu0
    %2635 = vmatprep.mubr.f32.mxu0 0.0
    %2636 = vmatmul.mubr.f32.gmra.mrb[0].mxu0 %v2559
    %v2637 = vpop.f32.mrb[0].mxu0
    %v2638 = vadd.f32 0.0, %v2637
    %v2639 = vpop.f32.mrb[0].mxu0
    %2640 = vdwg.mxu0
    %v2641 = vsel %vm21, %v2628, 0.0
    %v2642 = vsel %vm21, %v2633, 0.0
    %v2643 = vadd.f32 %v2641, %v2642
    %v2644 = vsel %vm501, %v2638, 0.0
    %v2645 = vadd.f32 %v2643, %v2644
    %v2646 = vrot.slane %v2645, 4
    %v2647 = vadd.f32 %v2645, %v2646
    %v2648 = vrot.slane %v2647, 2
    %v2649 = vadd.f32 %v2647, %v2648
    %v2650 = vrot.slane %v2649, 1
    %v2651 = vadd.f32 %v2649, %v2650
    %v2652 = vmul.f32 %v2628, %v2628
    %v2653 = vmul.f32 %v2633, %v2633
    %v2654 = vmul.f32 %v2638, %v2638
    %v2655 = vsel %vm21, %v2652, 0.0
    %v2656 = vsel %vm21, %v2653, 0.0
    %v2657 = vadd.f32 %v2655, %v2656
    %v2658 = vsel %vm501, %v2654, 0.0
    %v2659 = vadd.f32 %v2657, %v2658
    %v2660 = vrot.slane %v2659, 4
    %v2661 = vadd.f32 %v2659, %v2660
    %v2662 = vrot.slane %v2661, 2
    %v2663 = vadd.f32 %v2661, %v2662
    %v2664 = vrot.slane %v2663, 1
    %v2665 = vadd.f32 %v2663, %v2664
    %v2666 = vmul.f32 %v2651, 0.055555556
    %v2667 = vmul.f32 %v2665, 0.055555556
    %v2668 = vmul.f32 %v2666, %v2666
    %v2669 = vsub.f32 %v2667, %v2668
    %v2670 = vmax.f32 %v2669, 0.0
    %v2671 = vsub.f32 %v2628, %v2666
    %v2672 = vsub.f32 %v2633, %v2666
    %v2673 = vsub.f32 %v2638, %v2666
    %v2674 = vadd.f32 %v2670, 1e-05
    %v2675 = vrsqrt.pop %v2674
    %v2676 = vmul.f32 %v2671, %v2675
    %v2677 = vmul.f32 %v2672, %v2675
    %v2678 = vmul.f32 %v2673, %v2675
    %v2679 = vld [vmem:[%s2 + $0x1c8] sm:$0x1]
    %v2680 = vlaneseq
    %v2681 = vshrl.u32 %v2680, 7
    %v2682 = vsub.s32 0, %v2681
    %v2683 = vrot.slane %v2679, %v2682
    %v2684 = vmul.f32 %v2676, %v2683
    %v2685 = vmul.f32 %v2677, %v2683
    %v2686 = vmul.f32 %v2678, %v2683
    %v2687 = vld [vmem:[%s2 + $0x1d0] sm:$0x1]
    %v2688 = vlaneseq
    %v2689 = vshrl.u32 %v2688, 7
    %v2690 = vsub.s32 0, %v2689
    %v2691 = vrot.slane %v2687, %v2690
    %v2692 = vadd.f32 %v2684, %v2691
    %v2693 = vadd.f32 %v2685, %v2691
    %v2694 = vadd.f32 %v2686, %v2691
    %v2695 = vmax.f32 %v2692, 0.0
    %v2696 = vmax.f32 %v2693, 0.0
    %v2697 = vmax.f32 %v2694, 0.0
    %2698 = vst.msk [vmem:[#allocation3 + $0x58] sm:$0xff] %vm21, %v2695
    %2699 = vst.msk [vmem:[#allocation3 + $0x60] sm:$0xff] %vm21, %v2696
    %2700 = vst.msk [vmem:[#allocation3 + $0x68] sm:$0x3] %vm501, %v2697
    %v2701 = vld [vmem:[#allocation3 + $0x8] sm:$0xff]
    %v2702 = vld [vmem:[#allocation3 + $0x10] sm:$0xff]
    %v2703 = vld [vmem:[#allocation3 + $0x18] sm:$0x3]
    %v2704 = vld [vmem:[#allocation3 + $0x30] sm:$0xff]
    %v2705 = vld [vmem:[#allocation3 + $0x38] sm:$0xff]
    %v2706 = vld [vmem:[#allocation3 + $0x40] sm:$0x3]
    %v2707 = vld [vmem:[#allocation3 + $0x58] sm:$0xff]
    %v2708 = vld [vmem:[#allocation3 + $0x60] sm:$0xff]
    %v2709 = vld [vmem:[#allocation3 + $0x68] sm:$0x3]
    %2713 = vrot.lane.b32.xlu0 %v2704, 8
    %v2714 = vpop.permute.xlu0 %2713
    %2715 = vrot.lane.b32.xlu0 %v2705, 8
    %v2716 = vpop.permute.xlu0 %2715
    %2717 = vrot.lane.b32.xlu0 %v2706, 8
    %v2718 = vpop.permute.xlu0 %2717
    %2725 = vrot.lane.b32.xlu0 %v2707, 16
    %v2726 = vpop.permute.xlu0 %2725
    %2727 = vrot.lane.b32.xlu0 %v2708, 16
    %v2728 = vpop.permute.xlu0 %2727
    %2729 = vrot.lane.b32.xlu0 %v2709, 16
    %v2730 = vpop.permute.xlu0 %2729
    %v2734 = vsel %vm21, %v2701, %v2714
    %v2735 = vsel %vm21, %v2702, %v2716
    %v2736 = vsel %vm21, %v2703, %v2718
    %v2737 = vsel %vm874, %v2734, %v2726
    %v2738 = vsel %vm874, %v2735, %v2728
    %v2739 = vsel %vm874, %v2736, %v2730
    %v2740 = vld [vmem:[%s2 + $0x1d8] sm:$0xff]
    %v2741 = vld [vmem:[%s2 + $0x1e0] sm:$0xff]
    %v2742 = vld [vmem:[%s2 + $0x1e8] sm:$0xff]
    %v2743 = vld [vmem:[%s2 + $0x1f0] sm:$0x1]
    %v2744 = vlaneseq
    %v2745 = vshrl.u32 %v2744, 7
    %v2746 = vsub.s32 0, %v2745
    %v2747 = vrot.slane %v2743, %v2746
    %v2749 = vsel %vm396, %v2737, 0
    %v2752 = vsel %vm396, %v2738, 0
    %v2755 = vsel %vm396, %v2739, 0
    %2757 = vmatprep.subr.mxu0 0.0
    %2758 = vmatpush1.msra.mxu0 %v2740
    %2759 = vmatprep.subr.mxu0 0.0
    %2760 = vmatpush1.msra.mxu0 %v2741
    %2761 = vmatprep.subr.mxu0 0.0
    %2762 = vmatpush1.msra.mxu0 %v2742
    %2763 = vmatprep.subr.mxu0 0.0
    %2764 = vmatpush1.msra.mxu0 0.0
    %2765 = vmatprep.subr.mxu0 0.0
    %2766 = vmatpush1.msra.mxu0 0.0
    %2767 = vmatprep.subr.mxu0 0.0
    %2768 = vmatpush1.msra.mxu0 0.0
    %2769 = vmatprep.subr.mxu0 0.0
    %2770 = vmatpush1.msra.mxu0 0.0
    %2771 = vmatprep.subr.mxu0 0.0
    %2772 = vmatpush1.msra.mxu0 0.0
    %2773 = vmatprep.subr.mxu0 0.0
    %2774 = vmatpush1.msra.mxu0 0.0
    %2775 = vmatprep.subr.mxu0 0.0
    %2776 = vmatpush1.msra.mxu0 0.0
    %2777 = vmatprep.subr.mxu0 0.0
    %2778 = vmatpush1.msra.mxu0 0.0
    %2779 = vmatprep.subr.mxu0 0.0
    %2780 = vmatpush1.msra.mxu0 0.0
    %2781 = vmatprep.subr.mxu0 0.0
    %2782 = vmatpush1.msra.mxu0 0.0
    %2783 = vmatprep.subr.mxu0 0.0
    %2784 = vmatpush1.msra.mxu0 0.0
    %2785 = vmatprep.subr.mxu0 0.0
    %2786 = vmatpush1.msra.mxu0 0.0
    %2787 = vmatprep.subr.mxu0 0.0
    %2788 = vmatpush1.msra.mxu0 0.0
    %2789 = vmatprep.subr.mxu0 0.0
    %2790 = vmatpush1.msra.mxu0 0.0
    %2791 = vmatprep.subr.mxu0 0.0
    %2792 = vmatpush1.msra.mxu0 0.0
    %2793 = vmatprep.subr.mxu0 0.0
    %2794 = vmatpush1.msra.mxu0 0.0
    %2795 = vmatprep.subr.mxu0 0.0
    %2796 = vmatpush1.msra.mxu0 0.0
    %2797 = vmatprep.subr.mxu0 0.0
    %2798 = vmatpush1.msra.mxu0 0.0
    %2799 = vmatprep.subr.mxu0 0.0
    %2800 = vmatpush1.msra.mxu0 0.0
    %2801 = vmatprep.subr.mxu0 0.0
    %2802 = vmatpush1.msra.mxu0 0.0
    %2803 = vmatprep.subr.mxu0 0.0
    %2804 = vmatpush1.msra.mxu0 0.0
    %2805 = vmatprep.subr.mxu0 0.0
    %2806 = vmatpush1.msra.mxu0 0.0
    %2807 = vmatprep.subr.mxu0 0.0
    %2808 = vmatpush1.msra.mxu0 0.0
    %2809 = vmatprep.subr.mxu0 0.0
    %2810 = vmatpush1.msra.mxu0 0.0
    %2811 = vmatprep.subr.mxu0 0.0
    %2812 = vmatpush1.msra.mxu0 0.0
    %2813 = vmatprep.subr.mxu0 0.0
    %2814 = vmatpush1.msra.mxu0 0.0
    %2815 = vmatprep.subr.mxu0 0.0
    %2816 = vmatpush1.msra.mxu0 0.0
    %2817 = vmatprep.subr.mxu0 0.0
    %2818 = vmatpush1.msra.mxu0 0.0
    %2819 = vmatprep.subr.mxu0 0.0
    %2820 = vmatpush1.msra.mxu0 0.0
    %2821 = vmatprep.mubr.f32.mxu0 0.0
    %2822 = vmatmul.mubr.f32.gmra.mrb[0].mxu0 %v2749
    %v2823 = vpop.f32.mrb[0].mxu0
    %v2824 = vadd.f32 %v2747, %v2823
    %v2825 = vpop.f32.mrb[0].mxu0
    %2826 = vmatprep.mubr.f32.mxu0 0.0
    %2827 = vmatmul.mubr.f32.gmra.mrb[0].mxu0 %v2752
    %v2828 = vpop.f32.mrb[0].mxu0
    %v2829 = vadd.f32 %v2747, %v2828
    %v2830 = vpop.f32.mrb[0].mxu0
    %2831 = vmatprep.mubr.f32.mxu0 0.0
    %2832 = vmatmul.mubr.f32.gmra.mrb[0].mxu0 %v2755
    %v2833 = vpop.f32.mrb[0].mxu0
    %v2834 = vadd.f32 %v2747, %v2833
    %v2835 = vpop.f32.mrb[0].mxu0
    %2836 = vdwg.mxu0
    %vm2837 = vcmask 15360
    %v2838 = vsel %vm2837, %v2824, 0.0
    %v2839 = vsel %vm2837, %v2829, 0.0
    %v2840 = vadd.f32 %v2838, %v2839
    %vm2841 = vcmask 9216
    %v2842 = vsel %vm2841, %v2834, 0.0
    %v2843 = vadd.f32 %v2840, %v2842
    %v2844 = vrot.slane %v2843, 4
    %v2845 = vadd.f32 %v2843, %v2844
    %v2846 = vrot.slane %v2845, 2
    %v2847 = vadd.f32 %v2845, %v2846
    %v2848 = vrot.slane %v2847, 1
    %v2849 = vadd.f32 %v2847, %v2848
    %v2850 = vmul.f32 %v2824, %v2824
    %v2851 = vmul.f32 %v2829, %v2829
    %v2852 = vmul.f32 %v2834, %v2834
    %v2853 = vsel %vm2837, %v2850, 0.0
    %v2854 = vsel %vm2837, %v2851, 0.0
    %v2855 = vadd.f32 %v2853, %v2854
    %v2856 = vsel %vm2841, %v2852, 0.0
    %v2857 = vadd.f32 %v2855, %v2856
    %v2858 = vrot.slane %v2857, 4
    %v2859 = vadd.f32 %v2857, %v2858
    %v2860 = vrot.slane %v2859, 2
    %v2861 = vadd.f32 %v2859, %v2860
    %v2862 = vrot.slane %v2861, 1
    %v2863 = vadd.f32 %v2861, %v2862
    %v2864 = vmul.f32 %v2849, 0.055555556
    %v2865 = vmul.f32 %v2863, 0.055555556
    %v2866 = vmul.f32 %v2864, %v2864
    %v2867 = vsub.f32 %v2865, %v2866
    %v2868 = vmax.f32 %v2867, 0.0
    %v2869 = vsub.f32 %v2824, %v2864
    %v2870 = vsub.f32 %v2829, %v2864
    %v2871 = vsub.f32 %v2834, %v2864
    %v2872 = vadd.f32 %v2868, 1e-05
    %v2873 = vrsqrt.pop %v2872
    %v2874 = vmul.f32 %v2869, %v2873
    %v2875 = vmul.f32 %v2870, %v2873
    %v2876 = vmul.f32 %v2871, %v2873
    %v2877 = vld [vmem:[%s2 + $0x1f8] sm:$0x1]
    %v2878 = vlaneseq
    %v2879 = vshrl.u32 %v2878, 7
    %v2880 = vsub.s32 0, %v2879
    %v2881 = vrot.slane %v2877, %v2880
    %v2882 = vmul.f32 %v2874, %v2881
    %v2883 = vmul.f32 %v2875, %v2881
    %v2884 = vmul.f32 %v2876, %v2881
    %v2885 = vld [vmem:[%s2 + $0x200] sm:$0x1]
    %v2886 = vlaneseq
    %v2887 = vshrl.u32 %v2886, 7
    %v2888 = vsub.s32 0, %v2887
    %v2889 = vrot.slane %v2885, %v2888
    %v2890 = vadd.f32 %v2882, %v2889
    %v2891 = vadd.f32 %v2883, %v2889
    %v2892 = vadd.f32 %v2884, %v2889
    %v2893 = vmax.f32 %v2890, 0.0
    %v2894 = vmax.f32 %v2891, 0.0
    %v2895 = vmax.f32 %v2892, 0.0
    %2896 = vst.msk [vmem:[#allocation5] sm:$0xff] %vm2837, %v2893
    %2897 = vst.msk [vmem:[#allocation5 + $0x8] sm:$0xff] %vm2837, %v2894
    %2898 = vst.msk [vmem:[#allocation5 + $0x10] sm:$0x3] %vm2841, %v2895
    %v2899 = vld [vmem:[%s2 + $0x228] sm:$0xff]
    %v2900 = vld [vmem:[%s2 + $0x230] sm:$0xff]
    %v2901 = vld [vmem:[%s2 + $0x238] sm:$0xff]
    %v2902 = vld [vmem:[%s2 + $0x240] sm:$0x1]
    %v2903 = vlaneseq
    %v2904 = vshrl.u32 %v2903, 7
    %v2905 = vsub.s32 0, %v2904
    %v2906 = vrot.slane %v2902, %v2905
    %2907 = vmatprep.subr.mxu0 0.0
    %2908 = vmatpush1.msra.mxu0 %v2899
    %2909 = vmatprep.subr.mxu0 0.0
    %2910 = vmatpush1.msra.mxu0 %v2900
    %2911 = vmatprep.subr.mxu0 0.0
    %2912 = vmatpush1.msra.mxu0 %v2901
    %2913 = vmatprep.subr.mxu0 0.0
    %2914 = vmatpush1.msra.mxu0 0.0
    %2915 = vmatprep.subr.mxu0 0.0
    %2916 = vmatpush1.msra.mxu0 0.0
    %2917 = vmatprep.subr.mxu0 0.0
    %2918 = vmatpush1.msra.mxu0 0.0
    %2919 = vmatprep.subr.mxu0 0.0
    %2920 = vmatpush1.msra.mxu0 0.0
    %2921 = vmatprep.subr.mxu0 0.0
    %2922 = vmatpush1.msra.mxu0 0.0
    %2923 = vmatprep.subr.mxu0 0.0
    %2924 = vmatpush1.msra.mxu0 0.0
    %2925 = vmatprep.subr.mxu0 0.0
    %2926 = vmatpush1.msra.mxu0 0.0
    %2927 = vmatprep.subr.mxu0 0.0
    %2928 = vmatpush1.msra.mxu0 0.0
    %2929 = vmatprep.subr.mxu0 0.0
    %2930 = vmatpush1.msra.mxu0 0.0
    %2931 = vmatprep.subr.mxu0 0.0
    %2932 = vmatpush1.msra.mxu0 0.0
    %2933 = vmatprep.subr.mxu0 0.0
    %2934 = vmatpush1.msra.mxu0 0.0
    %2935 = vmatprep.subr.mxu0 0.0
    %2936 = vmatpush1.msra.mxu0 0.0
    %2937 = vmatprep.subr.mxu0 0.0
    %2938 = vmatpush1.msra.mxu0 0.0
    %2939 = vmatprep.subr.mxu0 0.0
    %2940 = vmatpush1.msra.mxu0 0.0
    %2941 = vmatprep.subr.mxu0 0.0
    %2942 = vmatpush1.msra.mxu0 0.0
    %2943 = vmatprep.subr.mxu0 0.0
    %2944 = vmatpush1.msra.mxu0 0.0
    %2945 = vmatprep.subr.mxu0 0.0
    %2946 = vmatpush1.msra.mxu0 0.0
    %2947 = vmatprep.subr.mxu0 0.0
    %2948 = vmatpush1.msra.mxu0 0.0
    %2949 = vmatprep.subr.mxu0 0.0
    %2950 = vmatpush1.msra.mxu0 0.0
    %2951 = vmatprep.subr.mxu0 0.0
    %2952 = vmatpush1.msra.mxu0 0.0
    %2953 = vmatprep.subr.mxu0 0.0
    %2954 = vmatpush1.msra.mxu0 0.0
    %2955 = vmatprep.subr.mxu0 0.0
    %2956 = vmatpush1.msra.mxu0 0.0
    %2957 = vmatprep.subr.mxu0 0.0
    %2958 = vmatpush1.msra.mxu0 0.0
    %2959 = vmatprep.subr.mxu0 0.0
    %2960 = vmatpush1.msra.mxu0 0.0
    %2961 = vmatprep.subr.mxu0 0.0
    %2962 = vmatpush1.msra.mxu0 0.0
    %2963 = vmatprep.subr.mxu0 0.0
    %2964 = vmatpush1.msra.mxu0 0.0
    %2965 = vmatprep.subr.mxu0 0.0
    %2966 = vmatpush1.msra.mxu0 0.0
    %2967 = vmatprep.subr.mxu0 0.0
    %2968 = vmatpush1.msra.mxu0 0.0
    %2969 = vmatprep.subr.mxu0 0.0
    %2970 = vmatpush1.msra.mxu0 0.0
    %2971 = vmatprep.mubr.f32.mxu0 0.0
    %2972 = vmatmul.mubr.f32.gmra.mrb[0].mxu0 %v2749
    %v2973 = vpop.f32.mrb[0].mxu0
    %v2974 = vadd.f32 %v2906, %v2973
    %v2975 = vpop.f32.mrb[0].mxu0
    %2976 = vmatprep.mubr.f32.mxu0 0.0
    %2977 = vmatmul.mubr.f32.gmra.mrb[0].mxu0 %v2752
    %v2978 = vpop.f32.mrb[0].mxu0
    %v2979 = vadd.f32 %v2906, %v2978
    %v2980 = vpop.f32.mrb[0].mxu0
    %2981 = vmatprep.mubr.f32.mxu0 0.0
    %2982 = vmatmul.mubr.f32.gmra.mrb[0].mxu0 %v2755
    %v2983 = vpop.f32.mrb[0].mxu0
    %v2984 = vadd.f32 %v2906, %v2983
    %v2985 = vpop.f32.mrb[0].mxu0
    %2986 = vdwg.mxu0
    %vm2987 = vcmask 7168
    %v2988 = vsel %vm2987, %v2974, 0.0
    %v2989 = vsel %vm2987, %v2979, 0.0
    %v2990 = vadd.f32 %v2988, %v2989
    %vm2991 = vcmask 1024
    %v2992 = vsel %vm2991, %v2984, 0.0
    %v2993 = vadd.f32 %v2990, %v2992
    %v2994 = vrot.slane %v2993, 4
    %v2995 = vadd.f32 %v2993, %v2994
    %v2996 = vrot.slane %v2995, 2
    %v2997 = vadd.f32 %v2995, %v2996
    %v2998 = vrot.slane %v2997, 1
    %v2999 = vadd.f32 %v2997, %v2998
    %v3000 = vmul.f32 %v2974, %v2974
    %v3001 = vmul.f32 %v2979, %v2979
    %v3002 = vmul.f32 %v2984, %v2984
    %v3003 = vsel %vm2987, %v3000, 0.0
    %v3004 = vsel %vm2987, %v3001, 0.0
    %v3005 = vadd.f32 %v3003, %v3004
    %v3006 = vsel %vm2991, %v3002, 0.0
    %v3007 = vadd.f32 %v3005, %v3006
    %v3008 = vrot.slane %v3007, 4
    %v3009 = vadd.f32 %v3007, %v3008
    %v3010 = vrot.slane %v3009, 2
    %v3011 = vadd.f32 %v3009, %v3010
    %v3012 = vrot.slane %v3011, 1
    %v3013 = vadd.f32 %v3011, %v3012
    %v3014 = vmul.f32 %v2999, 0.055555556
    %v3015 = vmul.f32 %v3013, 0.055555556
    %v3016 = vmul.f32 %v3014, %v3014
    %v3017 = vsub.f32 %v3015, %v3016
    %v3018 = vmax.f32 %v3017, 0.0
    %v3019 = vsub.f32 %v2974, %v3014
    %v3020 = vsub.f32 %v2979, %v3014
    %v3021 = vsub.f32 %v2984, %v3014
    %v3022 = vadd.f32 %v3018, 1e-05
    %v3023 = vrsqrt.pop %v3022
    %v3024 = vmul.f32 %v3019, %v3023
    %v3025 = vmul.f32 %v3020, %v3023
    %v3026 = vmul.f32 %v3021, %v3023
    %v3027 = vld [vmem:[%s2 + $0x248] sm:$0x1]
    %v3028 = vlaneseq
    %v3029 = vshrl.u32 %v3028, 7
    %v3030 = vsub.s32 0, %v3029
    %v3031 = vrot.slane %v3027, %v3030
    %v3032 = vmul.f32 %v3024, %v3031
    %v3033 = vmul.f32 %v3025, %v3031
    %v3034 = vmul.f32 %v3026, %v3031
    %v3035 = vld [vmem:[%s2 + $0x250] sm:$0x1]
    %v3036 = vlaneseq
    %v3037 = vshrl.u32 %v3036, 7
    %v3038 = vsub.s32 0, %v3037
    %v3039 = vrot.slane %v3035, %v3038
    %v3040 = vadd.f32 %v3032, %v3039
    %v3041 = vadd.f32 %v3033, %v3039
    %v3042 = vadd.f32 %v3034, %v3039
    %v3043 = vmax.f32 %v3040, 0.0
    %v3044 = vmax.f32 %v3041, 0.0
    %v3045 = vmax.f32 %v3042, 0.0
    %3046 = vst.msk [vmem:[#allocation6] sm:$0xff] %vm2987, %v3043
    %3047 = vst.msk [vmem:[#allocation6 + $0x8] sm:$0xff] %vm2987, %v3044
    %3048 = vst.msk [vmem:[#allocation6 + $0x10] sm:$0x3] %vm2991, %v3045
    %v3049 = vld [vmem:[%s2 + $0x208] sm:$0xff]
    %v3050 = vld [vmem:[%s2 + $0x210] sm:$0x1]
    %v3051 = vld [vmem:[%s2 + $0x211] sm:$0xff]
    %v3052 = vld [vmem:[%s2 + $0x219] sm:$0x1]
    %v3053 = vld [vmem:[%s2 + $0x258] sm:$0xff]
    %v3054 = vld [vmem:[%s2 + $0x260] sm:$0x1]
    %v3055 = vld [vmem:[%s2 + $0x220] sm:$0x1]
    %v3056 = vld [vmem:[%s2 + $0x268] sm:$0x1]
    %v3057 = vld [vmem:[#allocation5] sm:$0xff]
    %v3058 = vld [vmem:[#allocation5 + $0x8] sm:$0x1]
    %v3059 = vld [vmem:[#allocation6] sm:$0xff]
    %v3060 = vld [vmem:[#allocation6 + $0x8] sm:$0x1]
    %3062 = vset.pattern.permute.xlu0 0
    %3063 = vperm.xlu0 %3062, %v3057
    %v3064 = vpop.permute.xlu0 %3063
    %3067 = vset.pattern.permute.xlu0 0
    %3068 = vperm.xlu0 %3067, %v3058
    %v3069 = vpop.permute.xlu0 %3068
    %v3071 = vmul.f32 %v3064, %v3049
    %v3072 = vmul.f32 %v3069, %v3050
    %3073 = vset.pattern.permute.xlu0 1
    %3074 = vperm.xlu0 %3073, %v3057
    %v3075 = vpop.permute.xlu0 %3074
    %3077 = vset.pattern.permute.xlu0 1
    %3078 = vperm.xlu0 %3077, %v3058
    %v3079 = vpop.permute.xlu0 %3078
    %v3081 = vmul.f32 %v3075, %v3051
    %v3082 = vmul.f32 %v3079, %v3052
    %v3083 = vadd.f32 %v3071, %v3081
    %v3084 = vadd.f32 %v3072, %v3082
    %v3085 = vsel %vm376, %v3083, 0.0
    %vm3086 = vcmask 65536
    %v3087 = vsel %vm3086, %v3084, 0.0
    %v3088 = vadd.f32 %v3085, %v3087
    %v3089 = vrot.slane %v3088, 4
    %v3090 = vadd.f32 %v3088, %v3089
    %v3091 = vrot.slane %v3090, 2
    %v3092 = vadd.f32 %v3090, %v3091
    %v3093 = vrot.slane %v3092, 1
    %v3094 = vadd.f32 %v3092, %v3093
    %v3095 = vadd.f32 %v3094, %v3055
    %3097 = vset.pattern.permute.xlu0 0
    %3098 = vperm.xlu0 %3097, %v3059
    %v3099 = vpop.permute.xlu0 %3098
    %3102 = vset.pattern.permute.xlu0 0
    %3103 = vperm.xlu0 %3102, %v3060
    %v3104 = vpop.permute.xlu0 %3103
    %v3106 = vmul.f32 %v3099, %v3053
    %v3107 = vmul.f32 %v3104, %v3054
    %v3108 = vsel %vm21, %v3106, 0.0
    %vm3109 = vcmask 57344
    %v3110 = vsel %vm3109, %v3107, 0.0
    %v3111 = vadd.f32 %v3108, %v3110
    %v3112 = vrot.slane %v3111, 4
    %v3113 = vadd.f32 %v3111, %v3112
    %v3114 = vrot.slane %v3113, 2
    %v3115 = vadd.f32 %v3113, %v3114
    %v3116 = vrot.slane %v3115, 1
    %v3117 = vadd.f32 %v3115, %v3116
    %v3118 = vadd.f32 %v3117, %v3056
    %v3119 = vld [vmem:[#allocation5 + $0x9] sm:$0xff]
    %v3120 = vld [vmem:[#allocation5 + $0x11] sm:$0x1]
    %v3121 = vld [vmem:[#allocation6 + $0x9] sm:$0xff]
    %v3122 = vld [vmem:[#allocation6 + $0x11] sm:$0x1]
    %3124 = vset.pattern.permute.xlu0 0
    %3125 = vperm.xlu0 %3124, %v3119
    %v3126 = vpop.permute.xlu0 %3125
    %3129 = vset.pattern.permute.xlu0 0
    %3130 = vperm.xlu0 %3129, %v3120
    %v3131 = vpop.permute.xlu0 %3130
    %v3133 = vmul.f32 %v3126, %v3049
    %v3134 = vmul.f32 %v3131, %v3050
    %3135 = vset.pattern.permute.xlu0 1
    %3136 = vperm.xlu0 %3135, %v3119
    %v3137 = vpop.permute.xlu0 %3136
    %3139 = vset.pattern.permute.xlu0 1
    %3140 = vperm.xlu0 %3139, %v3120
    %v3141 = vpop.permute.xlu0 %3140
    %v3143 = vmul.f32 %v3137, %v3051
    %v3144 = vmul.f32 %v3141, %v3052
    %v3145 = vadd.f32 %v3133, %v3143
    %v3146 = vadd.f32 %v3134, %v3144
    %v3147 = vsel %vm376, %v3145, 0.0
    %v3148 = vsel %vm3086, %v3146, 0.0
    %v3149 = vadd.f32 %v3147, %v3148
    %v3150 = vrot.slane %v3149, 4
    %v3151 = vadd.f32 %v3149, %v3150
    %v3152 = vrot.slane %v3151, 2
    %v3153 = vadd.f32 %v3151, %v3152
    %v3154 = vrot.slane %v3153, 1
    %v3155 = vadd.f32 %v3153, %v3154
    %v3156 = vadd.f32 %v3155, %v3055
    %3158 = vset.pattern.permute.xlu0 0
    %3159 = vperm.xlu0 %3158, %v3121
    %v3160 = vpop.permute.xlu0 %3159
    %3163 = vset.pattern.permute.xlu0 0
    %3164 = vperm.xlu0 %3163, %v3122
    %v3165 = vpop.permute.xlu0 %3164
    %v3167 = vmul.f32 %v3160, %v3053
    %v3168 = vmul.f32 %v3165, %v3054
    %v3169 = vsel %vm21, %v3167, 0.0
    %v3170 = vsel %vm3109, %v3168, 0.0
    %v3171 = vadd.f32 %v3169, %v3170
    %v3172 = vrot.slane %v3171, 4
    %v3173 = vadd.f32 %v3171, %v3172
    %v3174 = vrot.slane %v3173, 2
    %v3175 = vadd.f32 %v3173, %v3174
    %v3176 = vrot.slane %v3175, 1
    %v3177 = vadd.f32 %v3175, %v3176
    %v3178 = vadd.f32 %v3177, %v3056
    %v3180 = vrot.slane %v3156, 7
    %vm3182 = vcmask 1040384
    %v3183 = vsel %vm3182, %v3095, %v3180
    %v3185 = vrot.slane %v3178, 7
    %v3187 = vsel %vm3182, %v3118, %v3185
    %v3188 = vmax.f32 %v3187, 0.0
    %v3189 = vld [vmem:[%s2 + $0x270] sm:$0xff]
    %v3190 = vld [vmem:[%s2 + $0x278] sm:$0x1]
    %v3191 = vlaneseq
    %v3192 = vshrl.u32 %v3191, 7
    %v3193 = vsub.s32 0, %v3192
    %v3194 = vrot.slane %v3190, %v3193
    %v3196 = vsel %vm21, %v3188, 0
    %3198 = vmatprep.subr.mxu0 0.0
    %3199 = vmatpush1.msra.mxu0 %v3189
    %3200 = vmatprep.subr.mxu0 0.0
    %3201 = vmatpush1.msra.mxu0 0.0
    %3202 = vmatprep.subr.mxu0 0.0
    %3203 = vmatpush1.msra.mxu0 0.0
    %3204 = vmatprep.subr.mxu0 0.0
    %3205 = vmatpush1.msra.mxu0 0.0
    %3206 = vmatprep.subr.mxu0 0.0
    %3207 = vmatpush1.msra.mxu0 0.0
    %3208 = vmatprep.subr.mxu0 0.0
    %3209 = vmatpush1.msra.mxu0 0.0
    %3210 = vmatprep.subr.mxu0 0.0
    %3211 = vmatpush1.msra.mxu0 0.0
    %3212 = vmatprep.subr.mxu0 0.0
    %3213 = vmatpush1.msra.mxu0 0.0
    %3214 = vmatprep.subr.mxu0 0.0
    %3215 = vmatpush1.msra.mxu0 0.0
    %3216 = vmatprep.subr.mxu0 0.0
    %3217 = vmatpush1.msra.mxu0 0.0
    %3218 = vmatprep.subr.mxu0 0.0
    %3219 = vmatpush1.msra.mxu0 0.0
    %3220 = vmatprep.subr.mxu0 0.0
    %3221 = vmatpush1.msra.mxu0 0.0
    %3222 = vmatprep.subr.mxu0 0.0
    %3223 = vmatpush1.msra.mxu0 0.0
    %3224 = vmatprep.subr.mxu0 0.0
    %3225 = vmatpush1.msra.mxu0 0.0
    %3226 = vmatprep.subr.mxu0 0.0
    %3227 = vmatpush1.msra.mxu0 0.0
    %3228 = vmatprep.subr.mxu0 0.0
    %3229 = vmatpush1.msra.mxu0 0.0
    %3230 = vmatprep.subr.mxu0 0.0
    %3231 = vmatpush1.msra.mxu0 0.0
    %3232 = vmatprep.subr.mxu0 0.0
    %3233 = vmatpush1.msra.mxu0 0.0
    %3234 = vmatprep.subr.mxu0 0.0
    %3235 = vmatpush1.msra.mxu0 0.0
    %3236 = vmatprep.subr.mxu0 0.0
    %3237 = vmatpush1.msra.mxu0 0.0
    %3238 = vmatprep.subr.mxu0 0.0
    %3239 = vmatpush1.msra.mxu0 0.0
    %3240 = vmatprep.subr.mxu0 0.0
    %3241 = vmatpush1.msra.mxu0 0.0
    %3242 = vmatprep.subr.mxu0 0.0
    %3243 = vmatpush1.msra.mxu0 0.0
    %3244 = vmatprep.subr.mxu0 0.0
    %3245 = vmatpush1.msra.mxu0 0.0
    %3246 = vmatprep.subr.mxu0 0.0
    %3247 = vmatpush1.msra.mxu0 0.0
    %3248 = vmatprep.subr.mxu0 0.0
    %3249 = vmatpush1.msra.mxu0 0.0
    %3250 = vmatprep.subr.mxu0 0.0
    %3251 = vmatpush1.msra.mxu0 0.0
    %3252 = vmatprep.subr.mxu0 0.0
    %3253 = vmatpush1.msra.mxu0 0.0
    %3254 = vmatprep.subr.mxu0 0.0
    %3255 = vmatpush1.msra.mxu0 0.0
    %3256 = vmatprep.subr.mxu0 0.0
    %3257 = vmatpush1.msra.mxu0 0.0
    %3258 = vmatprep.subr.mxu0 0.0
    %3259 = vmatpush1.msra.mxu0 0.0
    %3260 = vmatprep.subr.mxu0 0.0
    %3261 = vmatpush1.msra.mxu0 0.0
    %3262 = vmatprep.mubr.f32.mxu0 0.0
    %3263 = vmatmul.mubr.f32.gmra.mrb[0].mxu0 %v3196
    %v3264 = vpop.f32.mrb[0].mxu0
    %v3265 = vadd.f32 %v3194, %v3264
    %v3266 = vpop.f32.mrb[0].mxu0
    %3267 = vdwg.mxu0
    %v3268 = vtanh.pop %v3265
    %3270 = vrot.lane.b32.xlu0 %v3268, 9
    %v3271 = vpop.permute.xlu0 %3270
    %v3273 = vsel %vm376, %v3183, %v3271
    %vm3274 = vcmask 80896
    %v3275 = vsel %vm3274, %v3273, 0.0
    %3276 = vst [vmem:[#allocation7] sm:$0x3] %v3275
    // Predicated region
    $region14: #{net_forward.1} parent=1 // pred_check
      _
    $region15: #{net_forward.1} parent=1 // pred_check_branch
      %3278 = sbr.rel (0) target = $region17
    $region16: #{net_forward.1} parent=1 // pred_region
      %s3280 = ssub.s32 32, 32
      %3281 = vsyncadd [#allocation8], %s3280
      %s3283 = sshll.u32 [#allocation7], 4
      %s3284 = int_to_ptr.vmem [resolvable:$true] %s3283
      %3286 = dma.vmem_to_hbm [thread:$0]  %s3284, 32, %s3, [#allocation8]
    $region17: #{net_forward.1} parent=1 // pred_fallthru
      _
    // Predicated region
    $region18: #{net_forward.1} parent=1 // pred_check
      _
    $region19: #{net_forward.1} parent=1 // pred_check_branch
      %3288 = sbr.rel (0) target = $region21
    $region20: #{net_forward.1} parent=1 // pred_region
      %3289 = dma.done [#allocation8], 32
    $region21: #{net_forward.1} parent=1 // pred_fallthru
      _
    %3290 = vsyncpa [#allocation8], 1

</llo_original>
